<compile_context>
chip_gen: v7x
topology: tpu7x:2x2x1
jax: 0.10.0
libtpu: 0.0.40
codegen_flags: <defaults>
</compile_context>

<pallas_src>
import math

import jax
import jax.numpy as jnp
from jax.experimental import pallas as pl


def _onehot_f32(ids_col, vocab):
    """ids_col: (N, 1) int32 -> (N, vocab) f32 one-hot (exact 0.0/1.0 rows)."""
    iota = jax.lax.broadcasted_iota(jnp.int32, (ids_col.shape[0], vocab), 1)
    return (ids_col == iota).astype(jnp.float32)


def _lstm_gates(gates, c_prev, H):
    """PyTorch nn.LSTM gate order: i, f, g, o."""
    i = jax.nn.sigmoid(gates[:, 0 * H:1 * H])
    f = jax.nn.sigmoid(gates[:, 1 * H:2 * H])
    g = jnp.tanh(gates[:, 2 * H:3 * H])
    o = jax.nn.sigmoid(gates[:, 3 * H:4 * H])
    c = f * c_prev + i * g
    h = o * jnp.tanh(c)
    return h, c


def seq2seq_kernel(src_ids_ref, trg_ids_ref,
                   enc_emb_ref, enc_wih_ref, enc_whh_ref, enc_b_ref,
                   dec_emb_ref, dec_wih_ref, dec_whh_ref, dec_b_ref,
                   fc_w_ref, fc_b_ref,
                   out_ref):
    T, B, V = out_ref.shape
    Tm1 = T - 1
    S = src_ids_ref.shape[0] // B
    H = enc_whh_ref.shape[0]
    f32 = jnp.float32

    # ---- all-timestep input projections (embedding gather fused in as a ----
    # ---- one-hot matmul; one MXU pass per stack instead of one per step) ----
    xe = jnp.dot(_onehot_f32(src_ids_ref[...], enc_emb_ref.shape[0]),
                 enc_emb_ref[...], preferred_element_type=f32)          # (S*B, E)
    xwe = jnp.dot(xe, enc_wih_ref[...],
                  preferred_element_type=f32) + enc_b_ref[...]          # (S*B, 4H)

    xd = jnp.dot(_onehot_f32(trg_ids_ref[...], dec_emb_ref.shape[0]),
                 dec_emb_ref[...], preferred_element_type=f32)          # (Tm1*B, E)
    xwd = jnp.dot(xd, dec_wih_ref[...],
                  preferred_element_type=f32) + dec_b_ref[...]          # (Tm1*B, 4H)

    # ---- encoder recurrence: only the final (h, c) is kept, as values ----
    enc_whh = enc_whh_ref[...]
    h = jnp.zeros((B, H), f32)
    c = jnp.zeros((B, H), f32)
    for t in range(S):                       # fully unrolled, static slices
        gates = xwe[t * B:(t + 1) * B, :] + jnp.dot(
            h, enc_whh, preferred_element_type=f32)
        h, c = _lstm_gates(gates, c, H)

    # ---- outputs[0] stays all-zero, exactly like torch.zeros(T, B, V) ----
    out_ref[0] = jnp.zeros((B, V), f32)

    # ---- decoder recurrence + fused fc_out, logits written in place ----
    dec_whh = dec_whh_ref[...]
    fc_w = fc_w_ref[...]
    fc_b = fc_b_ref[...]
    for t in range(Tm1):                     # teacher-forced tokens trg[:, t]
        gates = xwd[t * B:(t + 1) * B, :] + jnp.dot(
            h, dec_whh, preferred_element_type=f32)
        h, c = _lstm_gates(gates, c, H)
        out_ref[t + 1] = jnp.dot(h, fc_w, preferred_element_type=f32) + fc_b


@jax.jit
def seq2seq_forward(params, src, trg):
    """src: (B, S) int32, trg: (B, T) int32 -> (T, B, V) f32 logits.

    Equivalent to Seq2Seq.forward with teacher_forcing_ratio=1.0 (eval dropout).
    """
    B, trg_len = trg.shape
    S = src.shape[1]
    V = params['dec_fc_w'].shape[-1]

    # Token ids, time-major, as (N, 1) columns.  These are tiny int arrays; the
    # actual embedding lookup happens inside the kernel (one-hot matmul).
    src_ids = src.T.reshape(S * B, 1).astype(jnp.int32)
    trg_ids = trg[:, :-1].T.reshape((trg_len - 1) * B, 1).astype(jnp.int32)

    return pl.pallas_call(
        seq2seq_kernel,
        out_shape=jax.ShapeDtypeStruct((trg_len, B, V), jnp.float32),
    )(src_ids, trg_ids,
      params['enc_emb'], params['enc_wih'], params['enc_whh'], params['enc_b'],
      params['dec_emb'], params['dec_wih'], params['dec_whh'], params['dec_b'],
      params['dec_fc_w'], params['dec_fc_b'])


# ---------------------------------------------------------------------------
# Pure-JAX reference (same math, used only for a loose numerical self-check).
# ---------------------------------------------------------------------------
def _reference_forward(params, src, trg):
    B, trg_len = trg.shape
    H = params['enc_whh'].shape[0]

    def lstm_scan(x_seq, wih, whh, b, h, c):
        def step(carry, x):
            h, c = carry
            gates = x @ wih + h @ whh + b
            i, f, g, o = jnp.split(gates, 4, axis=-1)
            c = jax.nn.sigmoid(f) * c + jax.nn.sigmoid(i) * jnp.tanh(g)
            h = jax.nn.sigmoid(o) * jnp.tanh(c)
            return (h, c), h
        (h, c), hs = jax.lax.scan(step, (h, c), x_seq)
        return hs, h, c

    src_emb = params['enc_emb'][src.T]                       # (S, B, E)
    h0 = jnp.zeros((B, H), jnp.float32)
    c0 = jnp.zeros((B, H), jnp.float32)
    _, h, c = lstm_scan(src_emb, params['enc_wih'], params['enc_whh'],
                        params['enc_b'], h0, c0)
    dec_emb = params['dec_emb'][trg[:, :-1].T]               # (T-1, B, E)
    hs, _, _ = lstm_scan(dec_emb, params['dec_wih'], params['dec_whh'],
                         params['dec_b'], h, c)
    logits = hs @ params['dec_fc_w'] + params['dec_fc_b']    # (T-1, B, V)
    out = jnp.zeros((trg_len, B, logits.shape[-1]), jnp.float32)
    return out.at[1:].set(logits)


if __name__ == "__main__":
    SRC_VOCAB, TRG_VOCAB = 50, 64
    EMB, HID = 16, 32
    B, SRC_LEN, TRG_LEN = 8, 8, 8

    key = jax.random.PRNGKey(0)
    ks = jax.random.split(key, 12)
    k_h = 1.0 / math.sqrt(HID)

    def u(k, shape, scale):
        return jax.random.uniform(k, shape, jnp.float32, -scale, scale)

    params = dict(
        enc_emb=jax.random.normal(ks[0], (SRC_VOCAB, EMB), jnp.float32),
        enc_wih=u(ks[1], (EMB, 4 * HID), k_h),          # weight_ih_l0.T
        enc_whh=u(ks[2], (HID, 4 * HID), k_h),          # weight_hh_l0.T
        enc_b=u(ks[3], (1, 4 * HID), k_h),              # b_ih + b_hh combined
        dec_emb=jax.random.normal(ks[4], (TRG_VOCAB, EMB), jnp.float32),
        dec_wih=u(ks[5], (EMB, 4 * HID), k_h),
        dec_whh=u(ks[6], (HID, 4 * HID), k_h),
        dec_b=u(ks[7], (1, 4 * HID), k_h),
        dec_fc_w=u(ks[8], (HID, TRG_VOCAB), k_h),       # fc_out.weight.T
        dec_fc_b=u(ks[9], (1, TRG_VOCAB), k_h),
    )

    src = jax.random.randint(ks[10], (B, SRC_LEN), 0, SRC_VOCAB, dtype=jnp.int32)
    trg = jax.random.randint(ks[11], (B, TRG_LEN), 0, TRG_VOCAB, dtype=jnp.int32)

    out = seq2seq_forward(params, src, trg)
    jax.block_until_ready(out)

    assert out.shape == (TRG_LEN, B, TRG_VOCAB)
    assert bool(jnp.all(out[0] == 0.0))

    ref = _reference_forward(params, src, trg)
    max_err = float(jnp.max(jnp.abs(out - ref)))
    assert max_err < 3e-2, f"max abs error vs reference: {max_err}"

    print("KERNEL_OK")
</pallas_src>

<mosaic_0001>
module attributes {stable_mosaic.version = 11 : i64} {
  func.func @seq2seq_kernel(%arg0: memref<64x1xi32, #tpu.memory_space<vmem>>, %arg1: memref<56x1xi32, #tpu.memory_space<vmem>>, %arg2: memref<50x16xf32, #tpu.memory_space<vmem>>, %arg3: memref<16x128xf32, #tpu.memory_space<vmem>>, %arg4: memref<32x128xf32, #tpu.memory_space<vmem>>, %arg5: memref<1x128xf32, #tpu.memory_space<vmem>>, %arg6: memref<64x16xf32, #tpu.memory_space<vmem>>, %arg7: memref<16x128xf32, #tpu.memory_space<vmem>>, %arg8: memref<32x128xf32, #tpu.memory_space<vmem>>, %arg9: memref<1x128xf32, #tpu.memory_space<vmem>>, %arg10: memref<32x64xf32, #tpu.memory_space<vmem>>, %arg11: memref<1x64xf32, #tpu.memory_space<vmem>>, %arg12: memref<8x8x64xf32, #tpu.memory_space<vmem>>) attributes {dimension_semantics = [], scalar_prefetch = 0 : i64, scratch_operands = 0 : i64, tpu.core_type = #tpu.core_type<tc>} {
    %c0 = arith.constant 0 : index
    %c0_0 = arith.constant 0 : index
    %0 = vector.load %arg0[%c0, %c0_0] : memref<64x1xi32, #tpu.memory_space<vmem>>, vector<64x1xi32>
    %1 = tpu.iota {dimensions = array<i32: 1>} : vector<64x50xi32>
    %2 = vector.broadcast %0 : vector<64x1xi32> to vector<64x50xi32>
    %3 = arith.cmpi eq, %2, %1 : vector<64x50xi32>
    %4 = arith.extui %3 : vector<64x50xi1> to vector<64x50xi32>
    %5 = arith.sitofp %4 : vector<64x50xi32> to vector<64x50xf32>
    %c0_1 = arith.constant 0 : index
    %c0_2 = arith.constant 0 : index
    %6 = vector.load %arg2[%c0_1, %c0_2] : memref<50x16xf32, #tpu.memory_space<vmem>>, vector<50x16xf32>
    %cst = arith.constant dense<0.000000e+00> : vector<64x16xf32>
    %7 = tpu.matmul %5, %6, %cst {dimension_numbers = #tpu.dot_dimension_numbers<[1], [0], [0], [1], [0, 0, 1, 1], [], []>} : vector<64x50xf32>, vector<50x16xf32>, vector<64x16xf32> -> vector<64x16xf32>
    %c0_3 = arith.constant 0 : index
    %c0_4 = arith.constant 0 : index
    %8 = vector.load %arg3[%c0_3, %c0_4] : memref<16x128xf32, #tpu.memory_space<vmem>>, vector<16x128xf32>
    %cst_5 = arith.constant dense<0.000000e+00> : vector<64x128xf32>
    %9 = tpu.matmul %7, %8, %cst_5 {dimension_numbers = #tpu.dot_dimension_numbers<[1], [0], [0], [1], [0, 0, 1, 1], [], []>} : vector<64x16xf32>, vector<16x128xf32>, vector<64x128xf32> -> vector<64x128xf32>
    %c0_6 = arith.constant 0 : index
    %c0_7 = arith.constant 0 : index
    %10 = vector.load %arg5[%c0_6, %c0_7] : memref<1x128xf32, #tpu.memory_space<vmem>>, vector<1x128xf32>
    %11 = vector.broadcast %10 : vector<1x128xf32> to vector<64x128xf32>
    %12 = arith.addf %9, %11 : vector<64x128xf32>
    %c0_8 = arith.constant 0 : index
    %c0_9 = arith.constant 0 : index
    %13 = vector.load %arg1[%c0_8, %c0_9] : memref<56x1xi32, #tpu.memory_space<vmem>>, vector<56x1xi32>
    %14 = tpu.iota {dimensions = array<i32: 1>} : vector<56x64xi32>
    %15 = vector.broadcast %13 : vector<56x1xi32> to vector<56x64xi32>
    %16 = arith.cmpi eq, %15, %14 : vector<56x64xi32>
    %17 = arith.extui %16 : vector<56x64xi1> to vector<56x64xi32>
    %18 = arith.sitofp %17 : vector<56x64xi32> to vector<56x64xf32>
    %c0_10 = arith.constant 0 : index
    %c0_11 = arith.constant 0 : index
    %19 = vector.load %arg6[%c0_10, %c0_11] : memref<64x16xf32, #tpu.memory_space<vmem>>, vector<64x16xf32>
    %cst_12 = arith.constant dense<0.000000e+00> : vector<56x16xf32>
    %20 = tpu.matmul %18, %19, %cst_12 {dimension_numbers = #tpu.dot_dimension_numbers<[1], [0], [0], [1], [0, 0, 1, 1], [], []>} : vector<56x64xf32>, vector<64x16xf32>, vector<56x16xf32> -> vector<56x16xf32>
    %c0_13 = arith.constant 0 : index
    %c0_14 = arith.constant 0 : index
    %21 = vector.load %arg7[%c0_13, %c0_14] : memref<16x128xf32, #tpu.memory_space<vmem>>, vector<16x128xf32>
    %cst_15 = arith.constant dense<0.000000e+00> : vector<56x128xf32>
    %22 = tpu.matmul %20, %21, %cst_15 {dimension_numbers = #tpu.dot_dimension_numbers<[1], [0], [0], [1], [0, 0, 1, 1], [], []>} : vector<56x16xf32>, vector<16x128xf32>, vector<56x128xf32> -> vector<56x128xf32>
    %c0_16 = arith.constant 0 : index
    %c0_17 = arith.constant 0 : index
    %23 = vector.load %arg9[%c0_16, %c0_17] : memref<1x128xf32, #tpu.memory_space<vmem>>, vector<1x128xf32>
    %24 = vector.broadcast %23 : vector<1x128xf32> to vector<56x128xf32>
    %25 = arith.addf %22, %24 : vector<56x128xf32>
    %c0_18 = arith.constant 0 : index
    %c0_19 = arith.constant 0 : index
    %26 = vector.load %arg4[%c0_18, %c0_19] : memref<32x128xf32, #tpu.memory_space<vmem>>, vector<32x128xf32>
    %cst_20 = arith.constant 0.000000e+00 : f32
    %27 = vector.broadcast %cst_20 : f32 to vector<8x32xf32>
    %cst_21 = arith.constant 0.000000e+00 : f32
    %28 = vector.broadcast %cst_21 : f32 to vector<8x32xf32>
    %29 = vector.extract_strided_slice %12 {offsets = [0, 0], sizes = [8, 128], strides = [1, 1]} : vector<64x128xf32> to vector<8x128xf32>
    %cst_22 = arith.constant dense<0.000000e+00> : vector<8x128xf32>
    %30 = tpu.matmul %27, %26, %cst_22 {dimension_numbers = #tpu.dot_dimension_numbers<[1], [0], [0], [1], [0, 0, 1, 1], [], []>} : vector<8x32xf32>, vector<32x128xf32>, vector<8x128xf32> -> vector<8x128xf32>
    %31 = arith.addf %29, %30 : vector<8x128xf32>
    %32 = vector.extract_strided_slice %31 {offsets = [0, 0], sizes = [8, 32], strides = [1, 1]} : vector<8x128xf32> to vector<8x32xf32>
    %33 = arith.negf %32 : vector<8x32xf32>
    %34 = math.exp %33 : vector<8x32xf32>
    %cst_23 = arith.constant 1.000000e+00 : f32
    %35 = vector.broadcast %cst_23 : f32 to vector<8x32xf32>
    %36 = arith.addf %35, %34 : vector<8x32xf32>
    %37 = arith.divf %35, %36 : vector<8x32xf32>
    %38 = vector.extract_strided_slice %31 {offsets = [0, 32], sizes = [8, 32], strides = [1, 1]} : vector<8x128xf32> to vector<8x32xf32>
    %39 = arith.negf %38 : vector<8x32xf32>
    %40 = math.exp %39 : vector<8x32xf32>
    %cst_24 = arith.constant 1.000000e+00 : f32
    %41 = vector.broadcast %cst_24 : f32 to vector<8x32xf32>
    %42 = arith.addf %41, %40 : vector<8x32xf32>
    %43 = arith.divf %41, %42 : vector<8x32xf32>
    %44 = vector.extract_strided_slice %31 {offsets = [0, 64], sizes = [8, 32], strides = [1, 1]} : vector<8x128xf32> to vector<8x32xf32>
    %45 = math.tanh %44 : vector<8x32xf32>
    %46 = vector.extract_strided_slice %31 {offsets = [0, 96], sizes = [8, 32], strides = [1, 1]} : vector<8x128xf32> to vector<8x32xf32>
    %47 = arith.negf %46 : vector<8x32xf32>
    %48 = math.exp %47 : vector<8x32xf32>
    %cst_25 = arith.constant 1.000000e+00 : f32
    %49 = vector.broadcast %cst_25 : f32 to vector<8x32xf32>
    %50 = arith.addf %49, %48 : vector<8x32xf32>
    %51 = arith.divf %49, %50 : vector<8x32xf32>
    %52 = arith.mulf %43, %28 : vector<8x32xf32>
    %53 = arith.mulf %37, %45 : vector<8x32xf32>
    %54 = arith.addf %52, %53 : vector<8x32xf32>
    %55 = math.tanh %54 : vector<8x32xf32>
    %56 = arith.mulf %51, %55 : vector<8x32xf32>
    %57 = vector.extract_strided_slice %12 {offsets = [8, 0], sizes = [8, 128], strides = [1, 1]} : vector<64x128xf32> to vector<8x128xf32>
    %cst_26 = arith.constant dense<0.000000e+00> : vector<8x128xf32>
    %58 = tpu.matmul %56, %26, %cst_26 {dimension_numbers = #tpu.dot_dimension_numbers<[1], [0], [0], [1], [0, 0, 1, 1], [], []>} : vector<8x32xf32>, vector<32x128xf32>, vector<8x128xf32> -> vector<8x128xf32>
    %59 = arith.addf %57, %58 : vector<8x128xf32>
    %60 = vector.extract_strided_slice %59 {offsets = [0, 0], sizes = [8, 32], strides = [1, 1]} : vector<8x128xf32> to vector<8x32xf32>
    %61 = arith.negf %60 : vector<8x32xf32>
    %62 = math.exp %61 : vector<8x32xf32>
    %cst_27 = arith.constant 1.000000e+00 : f32
    %63 = vector.broadcast %cst_27 : f32 to vector<8x32xf32>
    %64 = arith.addf %63, %62 : vector<8x32xf32>
    %65 = arith.divf %63, %64 : vector<8x32xf32>
    %66 = vector.extract_strided_slice %59 {offsets = [0, 32], sizes = [8, 32], strides = [1, 1]} : vector<8x128xf32> to vector<8x32xf32>
    %67 = arith.negf %66 : vector<8x32xf32>
    %68 = math.exp %67 : vector<8x32xf32>
    %cst_28 = arith.constant 1.000000e+00 : f32
    %69 = vector.broadcast %cst_28 : f32 to vector<8x32xf32>
    %70 = arith.addf %69, %68 : vector<8x32xf32>
    %71 = arith.divf %69, %70 : vector<8x32xf32>
    %72 = vector.extract_strided_slice %59 {offsets = [0, 64], sizes = [8, 32], strides = [1, 1]} : vector<8x128xf32> to vector<8x32xf32>
    %73 = math.tanh %72 : vector<8x32xf32>
    %74 = vector.extract_strided_slice %59 {offsets = [0, 96], sizes = [8, 32], strides = [1, 1]} : vector<8x128xf32> to vector<8x32xf32>
    %75 = arith.negf %74 : vector<8x32xf32>
    %76 = math.exp %75 : vector<8x32xf32>
    %cst_29 = arith.constant 1.000000e+00 : f32
    %77 = vector.broadcast %cst_29 : f32 to vector<8x32xf32>
    %78 = arith.addf %77, %76 : vector<8x32xf32>
    %79 = arith.divf %77, %78 : vector<8x32xf32>
    %80 = arith.mulf %71, %54 : vector<8x32xf32>
    %81 = arith.mulf %65, %73 : vector<8x32xf32>
    %82 = arith.addf %80, %81 : vector<8x32xf32>
    %83 = math.tanh %82 : vector<8x32xf32>
    %84 = arith.mulf %79, %83 : vector<8x32xf32>
    %85 = vector.extract_strided_slice %12 {offsets = [16, 0], sizes = [8, 128], strides = [1, 1]} : vector<64x128xf32> to vector<8x128xf32>
    %cst_30 = arith.constant dense<0.000000e+00> : vector<8x128xf32>
    %86 = tpu.matmul %84, %26, %cst_30 {dimension_numbers = #tpu.dot_dimension_numbers<[1], [0], [0], [1], [0, 0, 1, 1], [], []>} : vector<8x32xf32>, vector<32x128xf32>, vector<8x128xf32> -> vector<8x128xf32>
    %87 = arith.addf %85, %86 : vector<8x128xf32>
    %88 = vector.extract_strided_slice %87 {offsets = [0, 0], sizes = [8, 32], strides = [1, 1]} : vector<8x128xf32> to vector<8x32xf32>
    %89 = arith.negf %88 : vector<8x32xf32>
    %90 = math.exp %89 : vector<8x32xf32>
    %cst_31 = arith.constant 1.000000e+00 : f32
    %91 = vector.broadcast %cst_31 : f32 to vector<8x32xf32>
    %92 = arith.addf %91, %90 : vector<8x32xf32>
    %93 = arith.divf %91, %92 : vector<8x32xf32>
    %94 = vector.extract_strided_slice %87 {offsets = [0, 32], sizes = [8, 32], strides = [1, 1]} : vector<8x128xf32> to vector<8x32xf32>
    %95 = arith.negf %94 : vector<8x32xf32>
    %96 = math.exp %95 : vector<8x32xf32>
    %cst_32 = arith.constant 1.000000e+00 : f32
    %97 = vector.broadcast %cst_32 : f32 to vector<8x32xf32>
    %98 = arith.addf %97, %96 : vector<8x32xf32>
    %99 = arith.divf %97, %98 : vector<8x32xf32>
    %100 = vector.extract_strided_slice %87 {offsets = [0, 64], sizes = [8, 32], strides = [1, 1]} : vector<8x128xf32> to vector<8x32xf32>
    %101 = math.tanh %100 : vector<8x32xf32>
    %102 = vector.extract_strided_slice %87 {offsets = [0, 96], sizes = [8, 32], strides = [1, 1]} : vector<8x128xf32> to vector<8x32xf32>
    %103 = arith.negf %102 : vector<8x32xf32>
    %104 = math.exp %103 : vector<8x32xf32>
    %cst_33 = arith.constant 1.000000e+00 : f32
    %105 = vector.broadcast %cst_33 : f32 to vector<8x32xf32>
    %106 = arith.addf %105, %104 : vector<8x32xf32>
    %107 = arith.divf %105, %106 : vector<8x32xf32>
    %108 = arith.mulf %99, %82 : vector<8x32xf32>
    %109 = arith.mulf %93, %101 : vector<8x32xf32>
    %110 = arith.addf %108, %109 : vector<8x32xf32>
    %111 = math.tanh %110 : vector<8x32xf32>
    %112 = arith.mulf %107, %111 : vector<8x32xf32>
    %113 = vector.extract_strided_slice %12 {offsets = [24, 0], sizes = [8, 128], strides = [1, 1]} : vector<64x128xf32> to vector<8x128xf32>
    %cst_34 = arith.constant dense<0.000000e+00> : vector<8x128xf32>
    %114 = tpu.matmul %112, %26, %cst_34 {dimension_numbers = #tpu.dot_dimension_numbers<[1], [0], [0], [1], [0, 0, 1, 1], [], []>} : vector<8x32xf32>, vector<32x128xf32>, vector<8x128xf32> -> vector<8x128xf32>
    %115 = arith.addf %113, %114 : vector<8x128xf32>
    %116 = vector.extract_strided_slice %115 {offsets = [0, 0], sizes = [8, 32], strides = [1, 1]} : vector<8x128xf32> to vector<8x32xf32>
    %117 = arith.negf %116 : vector<8x32xf32>
    %118 = math.exp %117 : vector<8x32xf32>
    %cst_35 = arith.constant 1.000000e+00 : f32
    %119 = vector.broadcast %cst_35 : f32 to vector<8x32xf32>
    %120 = arith.addf %119, %118 : vector<8x32xf32>
    %121 = arith.divf %119, %120 : vector<8x32xf32>
    %122 = vector.extract_strided_slice %115 {offsets = [0, 32], sizes = [8, 32], strides = [1, 1]} : vector<8x128xf32> to vector<8x32xf32>
    %123 = arith.negf %122 : vector<8x32xf32>
    %124 = math.exp %123 : vector<8x32xf32>
    %cst_36 = arith.constant 1.000000e+00 : f32
    %125 = vector.broadcast %cst_36 : f32 to vector<8x32xf32>
    %126 = arith.addf %125, %124 : vector<8x32xf32>
    %127 = arith.divf %125, %126 : vector<8x32xf32>
    %128 = vector.extract_strided_slice %115 {offsets = [0, 64], sizes = [8, 32], strides = [1, 1]} : vector<8x128xf32> to vector<8x32xf32>
    %129 = math.tanh %128 : vector<8x32xf32>
    %130 = vector.extract_strided_slice %115 {offsets = [0, 96], sizes = [8, 32], strides = [1, 1]} : vector<8x128xf32> to vector<8x32xf32>
    %131 = arith.negf %130 : vector<8x32xf32>
    %132 = math.exp %131 : vector<8x32xf32>
    %cst_37 = arith.constant 1.000000e+00 : f32
    %133 = vector.broadcast %cst_37 : f32 to vector<8x32xf32>
    %134 = arith.addf %133, %132 : vector<8x32xf32>
    %135 = arith.divf %133, %134 : vector<8x32xf32>
    %136 = arith.mulf %127, %110 : vector<8x32xf32>
    %137 = arith.mulf %121, %129 : vector<8x32xf32>
    %138 = arith.addf %136, %137 : vector<8x32xf32>
    %139 = math.tanh %138 : vector<8x32xf32>
    %140 = arith.mulf %135, %139 : vector<8x32xf32>
    %141 = vector.extract_strided_slice %12 {offsets = [32, 0], sizes = [8, 128], strides = [1, 1]} : vector<64x128xf32> to vector<8x128xf32>
    %cst_38 = arith.constant dense<0.000000e+00> : vector<8x128xf32>
    %142 = tpu.matmul %140, %26, %cst_38 {dimension_numbers = #tpu.dot_dimension_numbers<[1], [0], [0], [1], [0, 0, 1, 1], [], []>} : vector<8x32xf32>, vector<32x128xf32>, vector<8x128xf32> -> vector<8x128xf32>
    %143 = arith.addf %141, %142 : vector<8x128xf32>
    %144 = vector.extract_strided_slice %143 {offsets = [0, 0], sizes = [8, 32], strides = [1, 1]} : vector<8x128xf32> to vector<8x32xf32>
    %145 = arith.negf %144 : vector<8x32xf32>
    %146 = math.exp %145 : vector<8x32xf32>
    %cst_39 = arith.constant 1.000000e+00 : f32
    %147 = vector.broadcast %cst_39 : f32 to vector<8x32xf32>
    %148 = arith.addf %147, %146 : vector<8x32xf32>
    %149 = arith.divf %147, %148 : vector<8x32xf32>
    %150 = vector.extract_strided_slice %143 {offsets = [0, 32], sizes = [8, 32], strides = [1, 1]} : vector<8x128xf32> to vector<8x32xf32>
    %151 = arith.negf %150 : vector<8x32xf32>
    %152 = math.exp %151 : vector<8x32xf32>
    %cst_40 = arith.constant 1.000000e+00 : f32
    %153 = vector.broadcast %cst_40 : f32 to vector<8x32xf32>
    %154 = arith.addf %153, %152 : vector<8x32xf32>
    %155 = arith.divf %153, %154 : vector<8x32xf32>
    %156 = vector.extract_strided_slice %143 {offsets = [0, 64], sizes = [8, 32], strides = [1, 1]} : vector<8x128xf32> to vector<8x32xf32>
    %157 = math.tanh %156 : vector<8x32xf32>
    %158 = vector.extract_strided_slice %143 {offsets = [0, 96], sizes = [8, 32], strides = [1, 1]} : vector<8x128xf32> to vector<8x32xf32>
    %159 = arith.negf %158 : vector<8x32xf32>
    %160 = math.exp %159 : vector<8x32xf32>
    %cst_41 = arith.constant 1.000000e+00 : f32
    %161 = vector.broadcast %cst_41 : f32 to vector<8x32xf32>
    %162 = arith.addf %161, %160 : vector<8x32xf32>
    %163 = arith.divf %161, %162 : vector<8x32xf32>
    %164 = arith.mulf %155, %138 : vector<8x32xf32>
    %165 = arith.mulf %149, %157 : vector<8x32xf32>
    %166 = arith.addf %164, %165 : vector<8x32xf32>
    %167 = math.tanh %166 : vector<8x32xf32>
    %168 = arith.mulf %163, %167 : vector<8x32xf32>
    %169 = vector.extract_strided_slice %12 {offsets = [40, 0], sizes = [8, 128], strides = [1, 1]} : vector<64x128xf32> to vector<8x128xf32>
    %cst_42 = arith.constant dense<0.000000e+00> : vector<8x128xf32>
    %170 = tpu.matmul %168, %26, %cst_42 {dimension_numbers = #tpu.dot_dimension_numbers<[1], [0], [0], [1], [0, 0, 1, 1], [], []>} : vector<8x32xf32>, vector<32x128xf32>, vector<8x128xf32> -> vector<8x128xf32>
    %171 = arith.addf %169, %170 : vector<8x128xf32>
    %172 = vector.extract_strided_slice %171 {offsets = [0, 0], sizes = [8, 32], strides = [1, 1]} : vector<8x128xf32> to vector<8x32xf32>
    %173 = arith.negf %172 : vector<8x32xf32>
    %174 = math.exp %173 : vector<8x32xf32>
    %cst_43 = arith.constant 1.000000e+00 : f32
    %175 = vector.broadcast %cst_43 : f32 to vector<8x32xf32>
    %176 = arith.addf %175, %174 : vector<8x32xf32>
    %177 = arith.divf %175, %176 : vector<8x32xf32>
    %178 = vector.extract_strided_slice %171 {offsets = [0, 32], sizes = [8, 32], strides = [1, 1]} : vector<8x128xf32> to vector<8x32xf32>
    %179 = arith.negf %178 : vector<8x32xf32>
    %180 = math.exp %179 : vector<8x32xf32>
    %cst_44 = arith.constant 1.000000e+00 : f32
    %181 = vector.broadcast %cst_44 : f32 to vector<8x32xf32>
    %182 = arith.addf %181, %180 : vector<8x32xf32>
    %183 = arith.divf %181, %182 : vector<8x32xf32>
    %184 = vector.extract_strided_slice %171 {offsets = [0, 64], sizes = [8, 32], strides = [1, 1]} : vector<8x128xf32> to vector<8x32xf32>
    %185 = math.tanh %184 : vector<8x32xf32>
    %186 = vector.extract_strided_slice %171 {offsets = [0, 96], sizes = [8, 32], strides = [1, 1]} : vector<8x128xf32> to vector<8x32xf32>
    %187 = arith.negf %186 : vector<8x32xf32>
    %188 = math.exp %187 : vector<8x32xf32>
    %cst_45 = arith.constant 1.000000e+00 : f32
    %189 = vector.broadcast %cst_45 : f32 to vector<8x32xf32>
    %190 = arith.addf %189, %188 : vector<8x32xf32>
    %191 = arith.divf %189, %190 : vector<8x32xf32>
    %192 = arith.mulf %183, %166 : vector<8x32xf32>
    %193 = arith.mulf %177, %185 : vector<8x32xf32>
    %194 = arith.addf %192, %193 : vector<8x32xf32>
    %195 = math.tanh %194 : vector<8x32xf32>
    %196 = arith.mulf %191, %195 : vector<8x32xf32>
    %197 = vector.extract_strided_slice %12 {offsets = [48, 0], sizes = [8, 128], strides = [1, 1]} : vector<64x128xf32> to vector<8x128xf32>
    %cst_46 = arith.constant dense<0.000000e+00> : vector<8x128xf32>
    %198 = tpu.matmul %196, %26, %cst_46 {dimension_numbers = #tpu.dot_dimension_numbers<[1], [0], [0], [1], [0, 0, 1, 1], [], []>} : vector<8x32xf32>, vector<32x128xf32>, vector<8x128xf32> -> vector<8x128xf32>
    %199 = arith.addf %197, %198 : vector<8x128xf32>
    %200 = vector.extract_strided_slice %199 {offsets = [0, 0], sizes = [8, 32], strides = [1, 1]} : vector<8x128xf32> to vector<8x32xf32>
    %201 = arith.negf %200 : vector<8x32xf32>
    %202 = math.exp %201 : vector<8x32xf32>
    %cst_47 = arith.constant 1.000000e+00 : f32
    %203 = vector.broadcast %cst_47 : f32 to vector<8x32xf32>
    %204 = arith.addf %203, %202 : vector<8x32xf32>
    %205 = arith.divf %203, %204 : vector<8x32xf32>
    %206 = vector.extract_strided_slice %199 {offsets = [0, 32], sizes = [8, 32], strides = [1, 1]} : vector<8x128xf32> to vector<8x32xf32>
    %207 = arith.negf %206 : vector<8x32xf32>
    %208 = math.exp %207 : vector<8x32xf32>
    %cst_48 = arith.constant 1.000000e+00 : f32
    %209 = vector.broadcast %cst_48 : f32 to vector<8x32xf32>
    %210 = arith.addf %209, %208 : vector<8x32xf32>
    %211 = arith.divf %209, %210 : vector<8x32xf32>
    %212 = vector.extract_strided_slice %199 {offsets = [0, 64], sizes = [8, 32], strides = [1, 1]} : vector<8x128xf32> to vector<8x32xf32>
    %213 = math.tanh %212 : vector<8x32xf32>
    %214 = vector.extract_strided_slice %199 {offsets = [0, 96], sizes = [8, 32], strides = [1, 1]} : vector<8x128xf32> to vector<8x32xf32>
    %215 = arith.negf %214 : vector<8x32xf32>
    %216 = math.exp %215 : vector<8x32xf32>
    %cst_49 = arith.constant 1.000000e+00 : f32
    %217 = vector.broadcast %cst_49 : f32 to vector<8x32xf32>
    %218 = arith.addf %217, %216 : vector<8x32xf32>
    %219 = arith.divf %217, %218 : vector<8x32xf32>
    %220 = arith.mulf %211, %194 : vector<8x32xf32>
    %221 = arith.mulf %205, %213 : vector<8x32xf32>
    %222 = arith.addf %220, %221 : vector<8x32xf32>
    %223 = math.tanh %222 : vector<8x32xf32>
    %224 = arith.mulf %219, %223 : vector<8x32xf32>
    %225 = vector.extract_strided_slice %12 {offsets = [56, 0], sizes = [8, 128], strides = [1, 1]} : vector<64x128xf32> to vector<8x128xf32>
    %cst_50 = arith.constant dense<0.000000e+00> : vector<8x128xf32>
    %226 = tpu.matmul %224, %26, %cst_50 {dimension_numbers = #tpu.dot_dimension_numbers<[1], [0], [0], [1], [0, 0, 1, 1], [], []>} : vector<8x32xf32>, vector<32x128xf32>, vector<8x128xf32> -> vector<8x128xf32>
    %227 = arith.addf %225, %226 : vector<8x128xf32>
    %228 = vector.extract_strided_slice %227 {offsets = [0, 0], sizes = [8, 32], strides = [1, 1]} : vector<8x128xf32> to vector<8x32xf32>
    %229 = arith.negf %228 : vector<8x32xf32>
    %230 = math.exp %229 : vector<8x32xf32>
    %cst_51 = arith.constant 1.000000e+00 : f32
    %231 = vector.broadcast %cst_51 : f32 to vector<8x32xf32>
    %232 = arith.addf %231, %230 : vector<8x32xf32>
    %233 = arith.divf %231, %232 : vector<8x32xf32>
    %234 = vector.extract_strided_slice %227 {offsets = [0, 32], sizes = [8, 32], strides = [1, 1]} : vector<8x128xf32> to vector<8x32xf32>
    %235 = arith.negf %234 : vector<8x32xf32>
    %236 = math.exp %235 : vector<8x32xf32>
    %cst_52 = arith.constant 1.000000e+00 : f32
    %237 = vector.broadcast %cst_52 : f32 to vector<8x32xf32>
    %238 = arith.addf %237, %236 : vector<8x32xf32>
    %239 = arith.divf %237, %238 : vector<8x32xf32>
    %240 = vector.extract_strided_slice %227 {offsets = [0, 64], sizes = [8, 32], strides = [1, 1]} : vector<8x128xf32> to vector<8x32xf32>
    %241 = math.tanh %240 : vector<8x32xf32>
    %242 = vector.extract_strided_slice %227 {offsets = [0, 96], sizes = [8, 32], strides = [1, 1]} : vector<8x128xf32> to vector<8x32xf32>
    %243 = arith.negf %242 : vector<8x32xf32>
    %244 = math.exp %243 : vector<8x32xf32>
    %cst_53 = arith.constant 1.000000e+00 : f32
    %245 = vector.broadcast %cst_53 : f32 to vector<8x32xf32>
    %246 = arith.addf %245, %244 : vector<8x32xf32>
    %247 = arith.divf %245, %246 : vector<8x32xf32>
    %248 = arith.mulf %239, %222 : vector<8x32xf32>
    %249 = arith.mulf %233, %241 : vector<8x32xf32>
    %250 = arith.addf %248, %249 : vector<8x32xf32>
    %251 = math.tanh %250 : vector<8x32xf32>
    %252 = arith.mulf %247, %251 : vector<8x32xf32>
    %cst_54 = arith.constant 0.000000e+00 : f32
    %253 = vector.broadcast %cst_54 : f32 to vector<8x64xf32>
    %c0_55 = arith.constant 0 : index
    %c0_56 = arith.constant 0 : index
    %c0_57 = arith.constant 0 : index
    %254 = vector.load %arg12[%c0_55, %c0_56, %c0_57] : memref<8x8x64xf32, #tpu.memory_space<vmem>>, vector<1x8x64xf32>
    %255 = vector.shape_cast %254 : vector<1x8x64xf32> to vector<8x64xf32>
    %256 = vector.shape_cast %253 : vector<8x64xf32> to vector<1x8x64xf32>
    tpu.vector_store %arg12[%c0_55, %c0_56, %c0_57], %256 {strides = array<i32>} : memref<8x8x64xf32, #tpu.memory_space<vmem>>, vector<1x8x64xf32>,
    %c0_58 = arith.constant 0 : index
    %c0_59 = arith.constant 0 : index
    %257 = vector.load %arg8[%c0_58, %c0_59] : memref<32x128xf32, #tpu.memory_space<vmem>>, vector<32x128xf32>
    %c0_60 = arith.constant 0 : index
    %c0_61 = arith.constant 0 : index
    %258 = vector.load %arg10[%c0_60, %c0_61] : memref<32x64xf32, #tpu.memory_space<vmem>>, vector<32x64xf32>
    %c0_62 = arith.constant 0 : index
    %c0_63 = arith.constant 0 : index
    %259 = vector.load %arg11[%c0_62, %c0_63] : memref<1x64xf32, #tpu.memory_space<vmem>>, vector<1x64xf32>
    %260 = vector.extract_strided_slice %25 {offsets = [0, 0], sizes = [8, 128], strides = [1, 1]} : vector<56x128xf32> to vector<8x128xf32>
    %cst_64 = arith.constant dense<0.000000e+00> : vector<8x128xf32>
    %261 = tpu.matmul %252, %257, %cst_64 {dimension_numbers = #tpu.dot_dimension_numbers<[1], [0], [0], [1], [0, 0, 1, 1], [], []>} : vector<8x32xf32>, vector<32x128xf32>, vector<8x128xf32> -> vector<8x128xf32>
    %262 = arith.addf %260, %261 : vector<8x128xf32>
    %263 = vector.extract_strided_slice %262 {offsets = [0, 0], sizes = [8, 32], strides = [1, 1]} : vector<8x128xf32> to vector<8x32xf32>
    %264 = arith.negf %263 : vector<8x32xf32>
    %265 = math.exp %264 : vector<8x32xf32>
    %cst_65 = arith.constant 1.000000e+00 : f32
    %266 = vector.broadcast %cst_65 : f32 to vector<8x32xf32>
    %267 = arith.addf %266, %265 : vector<8x32xf32>
    %268 = arith.divf %266, %267 : vector<8x32xf32>
    %269 = vector.extract_strided_slice %262 {offsets = [0, 32], sizes = [8, 32], strides = [1, 1]} : vector<8x128xf32> to vector<8x32xf32>
    %270 = arith.negf %269 : vector<8x32xf32>
    %271 = math.exp %270 : vector<8x32xf32>
    %cst_66 = arith.constant 1.000000e+00 : f32
    %272 = vector.broadcast %cst_66 : f32 to vector<8x32xf32>
    %273 = arith.addf %272, %271 : vector<8x32xf32>
    %274 = arith.divf %272, %273 : vector<8x32xf32>
    %275 = vector.extract_strided_slice %262 {offsets = [0, 64], sizes = [8, 32], strides = [1, 1]} : vector<8x128xf32> to vector<8x32xf32>
    %276 = math.tanh %275 : vector<8x32xf32>
    %277 = vector.extract_strided_slice %262 {offsets = [0, 96], sizes = [8, 32], strides = [1, 1]} : vector<8x128xf32> to vector<8x32xf32>
    %278 = arith.negf %277 : vector<8x32xf32>
    %279 = math.exp %278 : vector<8x32xf32>
    %cst_67 = arith.constant 1.000000e+00 : f32
    %280 = vector.broadcast %cst_67 : f32 to vector<8x32xf32>
    %281 = arith.addf %280, %279 : vector<8x32xf32>
    %282 = arith.divf %280, %281 : vector<8x32xf32>
    %283 = arith.mulf %274, %250 : vector<8x32xf32>
    %284 = arith.mulf %268, %276 : vector<8x32xf32>
    %285 = arith.addf %283, %284 : vector<8x32xf32>
    %286 = math.tanh %285 : vector<8x32xf32>
    %287 = arith.mulf %282, %286 : vector<8x32xf32>
    %cst_68 = arith.constant dense<0.000000e+00> : vector<8x64xf32>
    %288 = tpu.matmul %287, %258, %cst_68 {dimension_numbers = #tpu.dot_dimension_numbers<[1], [0], [0], [1], [0, 0, 1, 1], [], []>} : vector<8x32xf32>, vector<32x64xf32>, vector<8x64xf32> -> vector<8x64xf32>
    %289 = vector.broadcast %259 : vector<1x64xf32> to vector<8x64xf32>
    %290 = arith.addf %288, %289 : vector<8x64xf32>
    %c1 = arith.constant 1 : index
    %c0_69 = arith.constant 0 : index
    %c0_70 = arith.constant 0 : index
    %291 = vector.load %arg12[%c1, %c0_69, %c0_70] : memref<8x8x64xf32, #tpu.memory_space<vmem>>, vector<1x8x64xf32>
    %292 = vector.shape_cast %291 : vector<1x8x64xf32> to vector<8x64xf32>
    %293 = vector.shape_cast %290 : vector<8x64xf32> to vector<1x8x64xf32>
    tpu.vector_store %arg12[%c1, %c0_69, %c0_70], %293 {strides = array<i32>} : memref<8x8x64xf32, #tpu.memory_space<vmem>>, vector<1x8x64xf32>,
    %294 = vector.extract_strided_slice %25 {offsets = [8, 0], sizes = [8, 128], strides = [1, 1]} : vector<56x128xf32> to vector<8x128xf32>
    %cst_71 = arith.constant dense<0.000000e+00> : vector<8x128xf32>
    %295 = tpu.matmul %287, %257, %cst_71 {dimension_numbers = #tpu.dot_dimension_numbers<[1], [0], [0], [1], [0, 0, 1, 1], [], []>} : vector<8x32xf32>, vector<32x128xf32>, vector<8x128xf32> -> vector<8x128xf32>
    %296 = arith.addf %294, %295 : vector<8x128xf32>
    %297 = vector.extract_strided_slice %296 {offsets = [0, 0], sizes = [8, 32], strides = [1, 1]} : vector<8x128xf32> to vector<8x32xf32>
    %298 = arith.negf %297 : vector<8x32xf32>
    %299 = math.exp %298 : vector<8x32xf32>
    %cst_72 = arith.constant 1.000000e+00 : f32
    %300 = vector.broadcast %cst_72 : f32 to vector<8x32xf32>
    %301 = arith.addf %300, %299 : vector<8x32xf32>
    %302 = arith.divf %300, %301 : vector<8x32xf32>
    %303 = vector.extract_strided_slice %296 {offsets = [0, 32], sizes = [8, 32], strides = [1, 1]} : vector<8x128xf32> to vector<8x32xf32>
    %304 = arith.negf %303 : vector<8x32xf32>
    %305 = math.exp %304 : vector<8x32xf32>
    %cst_73 = arith.constant 1.000000e+00 : f32
    %306 = vector.broadcast %cst_73 : f32 to vector<8x32xf32>
    %307 = arith.addf %306, %305 : vector<8x32xf32>
    %308 = arith.divf %306, %307 : vector<8x32xf32>
    %309 = vector.extract_strided_slice %296 {offsets = [0, 64], sizes = [8, 32], strides = [1, 1]} : vector<8x128xf32> to vector<8x32xf32>
    %310 = math.tanh %309 : vector<8x32xf32>
    %311 = vector.extract_strided_slice %296 {offsets = [0, 96], sizes = [8, 32], strides = [1, 1]} : vector<8x128xf32> to vector<8x32xf32>
    %312 = arith.negf %311 : vector<8x32xf32>
    %313 = math.exp %312 : vector<8x32xf32>
    %cst_74 = arith.constant 1.000000e+00 : f32
    %314 = vector.broadcast %cst_74 : f32 to vector<8x32xf32>
    %315 = arith.addf %314, %313 : vector<8x32xf32>
    %316 = arith.divf %314, %315 : vector<8x32xf32>
    %317 = arith.mulf %308, %285 : vector<8x32xf32>
    %318 = arith.mulf %302, %310 : vector<8x32xf32>
    %319 = arith.addf %317, %318 : vector<8x32xf32>
    %320 = math.tanh %319 : vector<8x32xf32>
    %321 = arith.mulf %316, %320 : vector<8x32xf32>
    %cst_75 = arith.constant dense<0.000000e+00> : vector<8x64xf32>
    %322 = tpu.matmul %321, %258, %cst_75 {dimension_numbers = #tpu.dot_dimension_numbers<[1], [0], [0], [1], [0, 0, 1, 1], [], []>} : vector<8x32xf32>, vector<32x64xf32>, vector<8x64xf32> -> vector<8x64xf32>
    %323 = vector.broadcast %259 : vector<1x64xf32> to vector<8x64xf32>
    %324 = arith.addf %322, %323 : vector<8x64xf32>
    %c2 = arith.constant 2 : index
    %c0_76 = arith.constant 0 : index
    %c0_77 = arith.constant 0 : index
    %325 = vector.load %arg12[%c2, %c0_76, %c0_77] : memref<8x8x64xf32, #tpu.memory_space<vmem>>, vector<1x8x64xf32>
    %326 = vector.shape_cast %325 : vector<1x8x64xf32> to vector<8x64xf32>
    %327 = vector.shape_cast %324 : vector<8x64xf32> to vector<1x8x64xf32>
    tpu.vector_store %arg12[%c2, %c0_76, %c0_77], %327 {strides = array<i32>} : memref<8x8x64xf32, #tpu.memory_space<vmem>>, vector<1x8x64xf32>,
    %328 = vector.extract_strided_slice %25 {offsets = [16, 0], sizes = [8, 128], strides = [1, 1]} : vector<56x128xf32> to vector<8x128xf32>
    %cst_78 = arith.constant dense<0.000000e+00> : vector<8x128xf32>
    %329 = tpu.matmul %321, %257, %cst_78 {dimension_numbers = #tpu.dot_dimension_numbers<[1], [0], [0], [1], [0, 0, 1, 1], [], []>} : vector<8x32xf32>, vector<32x128xf32>, vector<8x128xf32> -> vector<8x128xf32>
    %330 = arith.addf %328, %329 : vector<8x128xf32>
    %331 = vector.extract_strided_slice %330 {offsets = [0, 0], sizes = [8, 32], strides = [1, 1]} : vector<8x128xf32> to vector<8x32xf32>
    %332 = arith.negf %331 : vector<8x32xf32>
    %333 = math.exp %332 : vector<8x32xf32>
    %cst_79 = arith.constant 1.000000e+00 : f32
    %334 = vector.broadcast %cst_79 : f32 to vector<8x32xf32>
    %335 = arith.addf %334, %333 : vector<8x32xf32>
    %336 = arith.divf %334, %335 : vector<8x32xf32>
    %337 = vector.extract_strided_slice %330 {offsets = [0, 32], sizes = [8, 32], strides = [1, 1]} : vector<8x128xf32> to vector<8x32xf32>
    %338 = arith.negf %337 : vector<8x32xf32>
    %339 = math.exp %338 : vector<8x32xf32>
    %cst_80 = arith.constant 1.000000e+00 : f32
    %340 = vector.broadcast %cst_80 : f32 to vector<8x32xf32>
    %341 = arith.addf %340, %339 : vector<8x32xf32>
    %342 = arith.divf %340, %341 : vector<8x32xf32>
    %343 = vector.extract_strided_slice %330 {offsets = [0, 64], sizes = [8, 32], strides = [1, 1]} : vector<8x128xf32> to vector<8x32xf32>
    %344 = math.tanh %343 : vector<8x32xf32>
    %345 = vector.extract_strided_slice %330 {offsets = [0, 96], sizes = [8, 32], strides = [1, 1]} : vector<8x128xf32> to vector<8x32xf32>
    %346 = arith.negf %345 : vector<8x32xf32>
    %347 = math.exp %346 : vector<8x32xf32>
    %cst_81 = arith.constant 1.000000e+00 : f32
    %348 = vector.broadcast %cst_81 : f32 to vector<8x32xf32>
    %349 = arith.addf %348, %347 : vector<8x32xf32>
    %350 = arith.divf %348, %349 : vector<8x32xf32>
    %351 = arith.mulf %342, %319 : vector<8x32xf32>
    %352 = arith.mulf %336, %344 : vector<8x32xf32>
    %353 = arith.addf %351, %352 : vector<8x32xf32>
    %354 = math.tanh %353 : vector<8x32xf32>
    %355 = arith.mulf %350, %354 : vector<8x32xf32>
    %cst_82 = arith.constant dense<0.000000e+00> : vector<8x64xf32>
    %356 = tpu.matmul %355, %258, %cst_82 {dimension_numbers = #tpu.dot_dimension_numbers<[1], [0], [0], [1], [0, 0, 1, 1], [], []>} : vector<8x32xf32>, vector<32x64xf32>, vector<8x64xf32> -> vector<8x64xf32>
    %357 = vector.broadcast %259 : vector<1x64xf32> to vector<8x64xf32>
    %358 = arith.addf %356, %357 : vector<8x64xf32>
    %c3 = arith.constant 3 : index
    %c0_83 = arith.constant 0 : index
    %c0_84 = arith.constant 0 : index
    %359 = vector.load %arg12[%c3, %c0_83, %c0_84] : memref<8x8x64xf32, #tpu.memory_space<vmem>>, vector<1x8x64xf32>
    %360 = vector.shape_cast %359 : vector<1x8x64xf32> to vector<8x64xf32>
    %361 = vector.shape_cast %358 : vector<8x64xf32> to vector<1x8x64xf32>
    tpu.vector_store %arg12[%c3, %c0_83, %c0_84], %361 {strides = array<i32>} : memref<8x8x64xf32, #tpu.memory_space<vmem>>, vector<1x8x64xf32>,
    %362 = vector.extract_strided_slice %25 {offsets = [24, 0], sizes = [8, 128], strides = [1, 1]} : vector<56x128xf32> to vector<8x128xf32>
    %cst_85 = arith.constant dense<0.000000e+00> : vector<8x128xf32>
    %363 = tpu.matmul %355, %257, %cst_85 {dimension_numbers = #tpu.dot_dimension_numbers<[1], [0], [0], [1], [0, 0, 1, 1], [], []>} : vector<8x32xf32>, vector<32x128xf32>, vector<8x128xf32> -> vector<8x128xf32>
    %364 = arith.addf %362, %363 : vector<8x128xf32>
    %365 = vector.extract_strided_slice %364 {offsets = [0, 0], sizes = [8, 32], strides = [1, 1]} : vector<8x128xf32> to vector<8x32xf32>
    %366 = arith.negf %365 : vector<8x32xf32>
    %367 = math.exp %366 : vector<8x32xf32>
    %cst_86 = arith.constant 1.000000e+00 : f32
    %368 = vector.broadcast %cst_86 : f32 to vector<8x32xf32>
    %369 = arith.addf %368, %367 : vector<8x32xf32>
    %370 = arith.divf %368, %369 : vector<8x32xf32>
    %371 = vector.extract_strided_slice %364 {offsets = [0, 32], sizes = [8, 32], strides = [1, 1]} : vector<8x128xf32> to vector<8x32xf32>
    %372 = arith.negf %371 : vector<8x32xf32>
    %373 = math.exp %372 : vector<8x32xf32>
    %cst_87 = arith.constant 1.000000e+00 : f32
    %374 = vector.broadcast %cst_87 : f32 to vector<8x32xf32>
    %375 = arith.addf %374, %373 : vector<8x32xf32>
    %376 = arith.divf %374, %375 : vector<8x32xf32>
    %377 = vector.extract_strided_slice %364 {offsets = [0, 64], sizes = [8, 32], strides = [1, 1]} : vector<8x128xf32> to vector<8x32xf32>
    %378 = math.tanh %377 : vector<8x32xf32>
    %379 = vector.extract_strided_slice %364 {offsets = [0, 96], sizes = [8, 32], strides = [1, 1]} : vector<8x128xf32> to vector<8x32xf32>
    %380 = arith.negf %379 : vector<8x32xf32>
    %381 = math.exp %380 : vector<8x32xf32>
    %cst_88 = arith.constant 1.000000e+00 : f32
    %382 = vector.broadcast %cst_88 : f32 to vector<8x32xf32>
    %383 = arith.addf %382, %381 : vector<8x32xf32>
    %384 = arith.divf %382, %383 : vector<8x32xf32>
    %385 = arith.mulf %376, %353 : vector<8x32xf32>
    %386 = arith.mulf %370, %378 : vector<8x32xf32>
    %387 = arith.addf %385, %386 : vector<8x32xf32>
    %388 = math.tanh %387 : vector<8x32xf32>
    %389 = arith.mulf %384, %388 : vector<8x32xf32>
    %cst_89 = arith.constant dense<0.000000e+00> : vector<8x64xf32>
    %390 = tpu.matmul %389, %258, %cst_89 {dimension_numbers = #tpu.dot_dimension_numbers<[1], [0], [0], [1], [0, 0, 1, 1], [], []>} : vector<8x32xf32>, vector<32x64xf32>, vector<8x64xf32> -> vector<8x64xf32>
    %391 = vector.broadcast %259 : vector<1x64xf32> to vector<8x64xf32>
    %392 = arith.addf %390, %391 : vector<8x64xf32>
    %c4 = arith.constant 4 : index
    %c0_90 = arith.constant 0 : index
    %c0_91 = arith.constant 0 : index
    %393 = vector.load %arg12[%c4, %c0_90, %c0_91] : memref<8x8x64xf32, #tpu.memory_space<vmem>>, vector<1x8x64xf32>
    %394 = vector.shape_cast %393 : vector<1x8x64xf32> to vector<8x64xf32>
    %395 = vector.shape_cast %392 : vector<8x64xf32> to vector<1x8x64xf32>
    tpu.vector_store %arg12[%c4, %c0_90, %c0_91], %395 {strides = array<i32>} : memref<8x8x64xf32, #tpu.memory_space<vmem>>, vector<1x8x64xf32>,
    %396 = vector.extract_strided_slice %25 {offsets = [32, 0], sizes = [8, 128], strides = [1, 1]} : vector<56x128xf32> to vector<8x128xf32>
    %cst_92 = arith.constant dense<0.000000e+00> : vector<8x128xf32>
    %397 = tpu.matmul %389, %257, %cst_92 {dimension_numbers = #tpu.dot_dimension_numbers<[1], [0], [0], [1], [0, 0, 1, 1], [], []>} : vector<8x32xf32>, vector<32x128xf32>, vector<8x128xf32> -> vector<8x128xf32>
    %398 = arith.addf %396, %397 : vector<8x128xf32>
    %399 = vector.extract_strided_slice %398 {offsets = [0, 0], sizes = [8, 32], strides = [1, 1]} : vector<8x128xf32> to vector<8x32xf32>
    %400 = arith.negf %399 : vector<8x32xf32>
    %401 = math.exp %400 : vector<8x32xf32>
    %cst_93 = arith.constant 1.000000e+00 : f32
    %402 = vector.broadcast %cst_93 : f32 to vector<8x32xf32>
    %403 = arith.addf %402, %401 : vector<8x32xf32>
    %404 = arith.divf %402, %403 : vector<8x32xf32>
    %405 = vector.extract_strided_slice %398 {offsets = [0, 32], sizes = [8, 32], strides = [1, 1]} : vector<8x128xf32> to vector<8x32xf32>
    %406 = arith.negf %405 : vector<8x32xf32>
    %407 = math.exp %406 : vector<8x32xf32>
    %cst_94 = arith.constant 1.000000e+00 : f32
    %408 = vector.broadcast %cst_94 : f32 to vector<8x32xf32>
    %409 = arith.addf %408, %407 : vector<8x32xf32>
    %410 = arith.divf %408, %409 : vector<8x32xf32>
    %411 = vector.extract_strided_slice %398 {offsets = [0, 64], sizes = [8, 32], strides = [1, 1]} : vector<8x128xf32> to vector<8x32xf32>
    %412 = math.tanh %411 : vector<8x32xf32>
    %413 = vector.extract_strided_slice %398 {offsets = [0, 96], sizes = [8, 32], strides = [1, 1]} : vector<8x128xf32> to vector<8x32xf32>
    %414 = arith.negf %413 : vector<8x32xf32>
    %415 = math.exp %414 : vector<8x32xf32>
    %cst_95 = arith.constant 1.000000e+00 : f32
    %416 = vector.broadcast %cst_95 : f32 to vector<8x32xf32>
    %417 = arith.addf %416, %415 : vector<8x32xf32>
    %418 = arith.divf %416, %417 : vector<8x32xf32>
    %419 = arith.mulf %410, %387 : vector<8x32xf32>
    %420 = arith.mulf %404, %412 : vector<8x32xf32>
    %421 = arith.addf %419, %420 : vector<8x32xf32>
    %422 = math.tanh %421 : vector<8x32xf32>
    %423 = arith.mulf %418, %422 : vector<8x32xf32>
    %cst_96 = arith.constant dense<0.000000e+00> : vector<8x64xf32>
    %424 = tpu.matmul %423, %258, %cst_96 {dimension_numbers = #tpu.dot_dimension_numbers<[1], [0], [0], [1], [0, 0, 1, 1], [], []>} : vector<8x32xf32>, vector<32x64xf32>, vector<8x64xf32> -> vector<8x64xf32>
    %425 = vector.broadcast %259 : vector<1x64xf32> to vector<8x64xf32>
    %426 = arith.addf %424, %425 : vector<8x64xf32>
    %c5 = arith.constant 5 : index
    %c0_97 = arith.constant 0 : index
    %c0_98 = arith.constant 0 : index
    %427 = vector.load %arg12[%c5, %c0_97, %c0_98] : memref<8x8x64xf32, #tpu.memory_space<vmem>>, vector<1x8x64xf32>
    %428 = vector.shape_cast %427 : vector<1x8x64xf32> to vector<8x64xf32>
    %429 = vector.shape_cast %426 : vector<8x64xf32> to vector<1x8x64xf32>
    tpu.vector_store %arg12[%c5, %c0_97, %c0_98], %429 {strides = array<i32>} : memref<8x8x64xf32, #tpu.memory_space<vmem>>, vector<1x8x64xf32>,
    %430 = vector.extract_strided_slice %25 {offsets = [40, 0], sizes = [8, 128], strides = [1, 1]} : vector<56x128xf32> to vector<8x128xf32>
    %cst_99 = arith.constant dense<0.000000e+00> : vector<8x128xf32>
    %431 = tpu.matmul %423, %257, %cst_99 {dimension_numbers = #tpu.dot_dimension_numbers<[1], [0], [0], [1], [0, 0, 1, 1], [], []>} : vector<8x32xf32>, vector<32x128xf32>, vector<8x128xf32> -> vector<8x128xf32>
    %432 = arith.addf %430, %431 : vector<8x128xf32>
    %433 = vector.extract_strided_slice %432 {offsets = [0, 0], sizes = [8, 32], strides = [1, 1]} : vector<8x128xf32> to vector<8x32xf32>
    %434 = arith.negf %433 : vector<8x32xf32>
    %435 = math.exp %434 : vector<8x32xf32>
    %cst_100 = arith.constant 1.000000e+00 : f32
    %436 = vector.broadcast %cst_100 : f32 to vector<8x32xf32>
    %437 = arith.addf %436, %435 : vector<8x32xf32>
    %438 = arith.divf %436, %437 : vector<8x32xf32>
    %439 = vector.extract_strided_slice %432 {offsets = [0, 32], sizes = [8, 32], strides = [1, 1]} : vector<8x128xf32> to vector<8x32xf32>
    %440 = arith.negf %439 : vector<8x32xf32>
    %441 = math.exp %440 : vector<8x32xf32>
    %cst_101 = arith.constant 1.000000e+00 : f32
    %442 = vector.broadcast %cst_101 : f32 to vector<8x32xf32>
    %443 = arith.addf %442, %441 : vector<8x32xf32>
    %444 = arith.divf %442, %443 : vector<8x32xf32>
    %445 = vector.extract_strided_slice %432 {offsets = [0, 64], sizes = [8, 32], strides = [1, 1]} : vector<8x128xf32> to vector<8x32xf32>
    %446 = math.tanh %445 : vector<8x32xf32>
    %447 = vector.extract_strided_slice %432 {offsets = [0, 96], sizes = [8, 32], strides = [1, 1]} : vector<8x128xf32> to vector<8x32xf32>
    %448 = arith.negf %447 : vector<8x32xf32>
    %449 = math.exp %448 : vector<8x32xf32>
    %cst_102 = arith.constant 1.000000e+00 : f32
    %450 = vector.broadcast %cst_102 : f32 to vector<8x32xf32>
    %451 = arith.addf %450, %449 : vector<8x32xf32>
    %452 = arith.divf %450, %451 : vector<8x32xf32>
    %453 = arith.mulf %444, %421 : vector<8x32xf32>
    %454 = arith.mulf %438, %446 : vector<8x32xf32>
    %455 = arith.addf %453, %454 : vector<8x32xf32>
    %456 = math.tanh %455 : vector<8x32xf32>
    %457 = arith.mulf %452, %456 : vector<8x32xf32>
    %cst_103 = arith.constant dense<0.000000e+00> : vector<8x64xf32>
    %458 = tpu.matmul %457, %258, %cst_103 {dimension_numbers = #tpu.dot_dimension_numbers<[1], [0], [0], [1], [0, 0, 1, 1], [], []>} : vector<8x32xf32>, vector<32x64xf32>, vector<8x64xf32> -> vector<8x64xf32>
    %459 = vector.broadcast %259 : vector<1x64xf32> to vector<8x64xf32>
    %460 = arith.addf %458, %459 : vector<8x64xf32>
    %c6 = arith.constant 6 : index
    %c0_104 = arith.constant 0 : index
    %c0_105 = arith.constant 0 : index
    %461 = vector.load %arg12[%c6, %c0_104, %c0_105] : memref<8x8x64xf32, #tpu.memory_space<vmem>>, vector<1x8x64xf32>
    %462 = vector.shape_cast %461 : vector<1x8x64xf32> to vector<8x64xf32>
    %463 = vector.shape_cast %460 : vector<8x64xf32> to vector<1x8x64xf32>
    tpu.vector_store %arg12[%c6, %c0_104, %c0_105], %463 {strides = array<i32>} : memref<8x8x64xf32, #tpu.memory_space<vmem>>, vector<1x8x64xf32>,
    %464 = vector.extract_strided_slice %25 {offsets = [48, 0], sizes = [8, 128], strides = [1, 1]} : vector<56x128xf32> to vector<8x128xf32>
    %cst_106 = arith.constant dense<0.000000e+00> : vector<8x128xf32>
    %465 = tpu.matmul %457, %257, %cst_106 {dimension_numbers = #tpu.dot_dimension_numbers<[1], [0], [0], [1], [0, 0, 1, 1], [], []>} : vector<8x32xf32>, vector<32x128xf32>, vector<8x128xf32> -> vector<8x128xf32>
    %466 = arith.addf %464, %465 : vector<8x128xf32>
    %467 = vector.extract_strided_slice %466 {offsets = [0, 0], sizes = [8, 32], strides = [1, 1]} : vector<8x128xf32> to vector<8x32xf32>
    %468 = arith.negf %467 : vector<8x32xf32>
    %469 = math.exp %468 : vector<8x32xf32>
    %cst_107 = arith.constant 1.000000e+00 : f32
    %470 = vector.broadcast %cst_107 : f32 to vector<8x32xf32>
    %471 = arith.addf %470, %469 : vector<8x32xf32>
    %472 = arith.divf %470, %471 : vector<8x32xf32>
    %473 = vector.extract_strided_slice %466 {offsets = [0, 32], sizes = [8, 32], strides = [1, 1]} : vector<8x128xf32> to vector<8x32xf32>
    %474 = arith.negf %473 : vector<8x32xf32>
    %475 = math.exp %474 : vector<8x32xf32>
    %cst_108 = arith.constant 1.000000e+00 : f32
    %476 = vector.broadcast %cst_108 : f32 to vector<8x32xf32>
    %477 = arith.addf %476, %475 : vector<8x32xf32>
    %478 = arith.divf %476, %477 : vector<8x32xf32>
    %479 = vector.extract_strided_slice %466 {offsets = [0, 64], sizes = [8, 32], strides = [1, 1]} : vector<8x128xf32> to vector<8x32xf32>
    %480 = math.tanh %479 : vector<8x32xf32>
    %481 = vector.extract_strided_slice %466 {offsets = [0, 96], sizes = [8, 32], strides = [1, 1]} : vector<8x128xf32> to vector<8x32xf32>
    %482 = arith.negf %481 : vector<8x32xf32>
    %483 = math.exp %482 : vector<8x32xf32>
    %cst_109 = arith.constant 1.000000e+00 : f32
    %484 = vector.broadcast %cst_109 : f32 to vector<8x32xf32>
    %485 = arith.addf %484, %483 : vector<8x32xf32>
    %486 = arith.divf %484, %485 : vector<8x32xf32>
    %487 = arith.mulf %478, %455 : vector<8x32xf32>
    %488 = arith.mulf %472, %480 : vector<8x32xf32>
    %489 = arith.addf %487, %488 : vector<8x32xf32>
    %490 = math.tanh %489 : vector<8x32xf32>
    %491 = arith.mulf %486, %490 : vector<8x32xf32>
    %cst_110 = arith.constant dense<0.000000e+00> : vector<8x64xf32>
    %492 = tpu.matmul %491, %258, %cst_110 {dimension_numbers = #tpu.dot_dimension_numbers<[1], [0], [0], [1], [0, 0, 1, 1], [], []>} : vector<8x32xf32>, vector<32x64xf32>, vector<8x64xf32> -> vector<8x64xf32>
    %493 = vector.broadcast %259 : vector<1x64xf32> to vector<8x64xf32>
    %494 = arith.addf %492, %493 : vector<8x64xf32>
    %c7 = arith.constant 7 : index
    %c0_111 = arith.constant 0 : index
    %c0_112 = arith.constant 0 : index
    %495 = vector.load %arg12[%c7, %c0_111, %c0_112] : memref<8x8x64xf32, #tpu.memory_space<vmem>>, vector<1x8x64xf32>
    %496 = vector.shape_cast %495 : vector<1x8x64xf32> to vector<8x64xf32>
    %497 = vector.shape_cast %494 : vector<8x64xf32> to vector<1x8x64xf32>
    tpu.vector_store %arg12[%c7, %c0_111, %c0_112], %497 {strides = array<i32>} : memref<8x8x64xf32, #tpu.memory_space<vmem>>, vector<1x8x64xf32>,
    return
  }
}

</mosaic_0001>

<llo_original>
// kernel: seq2seq_forward.1
$region0: #{seq2seq_forward.1}
  #allocation0 [shape = 'u32[]', space=smem, size = 0x4, offset = 0x4, fixed_abs, tag = 'smem constant byte address 0x4 - core index']
  #allocation1 [shape = 'u32[144,128]{1,0:T(1,128)}', space=vmem, size = 0x12000, scoped, tag = 'internal scratch']
  %s0 = inlined_call_operand.vmem [shape: s32[64,1], index: 0, kind: input, shape index: {}]
  %s1 = inlined_call_operand.vmem [shape: s32[56,1], index: 1, kind: input, shape index: {}]
  %s2 = inlined_call_operand.vmem [shape: f32[50,16], index: 2, kind: input, shape index: {}]
  %s3 = inlined_call_operand.vmem [shape: f32[16,128], index: 3, kind: input, shape index: {}]
  %s4 = inlined_call_operand.vmem [shape: f32[32,128], index: 4, kind: input, shape index: {}]
  %s5 = inlined_call_operand.vmem [shape: f32[1,128], index: 5, kind: input, shape index: {}]
  %s6 = inlined_call_operand.vmem [shape: f32[64,16], index: 6, kind: input, shape index: {}]
  %s7 = inlined_call_operand.vmem [shape: f32[16,128], index: 7, kind: input, shape index: {}]
  %s8 = inlined_call_operand.vmem [shape: f32[32,128], index: 8, kind: input, shape index: {}]
  %s9 = inlined_call_operand.vmem [shape: f32[1,128], index: 9, kind: input, shape index: {}]
  %s10 = inlined_call_operand.vmem [shape: f32[32,64], index: 10, kind: input, shape index: {}]
  %s11 = inlined_call_operand.vmem [shape: f32[1,64], index: 11, kind: input, shape index: {}]
  %s12 = inlined_call_operand.hbm [shape: f32[8,8,64], index: 12, kind: output, shape index: {}]
  %s13 = sld [smem:[#allocation0]]
  $region58: #{seq2seq_forward.1} parent=0
    _
  %s15 = ssub.s32 1, %s13
  %s16 = scalar_select 0, %s15, %s13
  $region1: #{seq2seq_forward.1} parent=0
    #allocation2 [shape = 'u8[32768]{0}', space=vmem, size = 0x8000, scoped, tag = 'output window, operand 0, single buffered']
    #allocation3 [shape = 's32[1]{0}', space=sflag, size = 0x4, scoped, tag = 'scoped memory for seq2seq_forward.1']
    %17 = vsyncpa [#allocation3], 0
    // Predicated region
    $region2: #{seq2seq_forward.1} parent=1 // pred_check
      _
    $region3: #{seq2seq_forward.1} parent=1 // pred_check_branch
      %19 = sbr.rel (0) target = $region5
    $region4: #{seq2seq_forward.1} parent=1 // pred_region
      _
    $region5: #{seq2seq_forward.1} parent=1 // pred_fallthru
      _
    // Predicated region
    $region6: #{seq2seq_forward.1} parent=1 // pred_check
      _
    $region7: #{seq2seq_forward.1} parent=1 // pred_check_branch
      %21 = sbr.rel (0) target = $region9
    $region8: #{seq2seq_forward.1} parent=1 // pred_region
      _
    $region9: #{seq2seq_forward.1} parent=1 // pred_fallthru
      _
    // Predicated region
    $region10: #{seq2seq_forward.1} parent=1 // pred_check
      _
    $region11: #{seq2seq_forward.1} parent=1 // pred_check_branch
      %23 = sbr.rel (0) target = $region13
    $region12: #{seq2seq_forward.1} parent=1 // pred_region
      _
    $region13: #{seq2seq_forward.1} parent=1 // pred_fallthru
      _
    // Predicated region
    $region14: #{seq2seq_forward.1} parent=1 // pred_check
      _
    $region15: #{seq2seq_forward.1} parent=1 // pred_check_branch
      %25 = sbr.rel (0) target = $region17
    $region16: #{seq2seq_forward.1} parent=1 // pred_region
      _
    $region17: #{seq2seq_forward.1} parent=1 // pred_fallthru
      _
    // Predicated region
    $region18: #{seq2seq_forward.1} parent=1 // pred_check
      _
    $region19: #{seq2seq_forward.1} parent=1 // pred_check_branch
      %27 = sbr.rel (0) target = $region21
    $region20: #{seq2seq_forward.1} parent=1 // pred_region
      _
    $region21: #{seq2seq_forward.1} parent=1 // pred_fallthru
      _
    // Predicated region
    $region22: #{seq2seq_forward.1} parent=1 // pred_check
      _
    $region23: #{seq2seq_forward.1} parent=1 // pred_check_branch
      %29 = sbr.rel (0) target = $region25
    $region24: #{seq2seq_forward.1} parent=1 // pred_region
      _
    $region25: #{seq2seq_forward.1} parent=1 // pred_fallthru
      _
    // Predicated region
    $region26: #{seq2seq_forward.1} parent=1 // pred_check
      _
    $region27: #{seq2seq_forward.1} parent=1 // pred_check_branch
      %31 = sbr.rel (0) target = $region29
    $region28: #{seq2seq_forward.1} parent=1 // pred_region
      _
    $region29: #{seq2seq_forward.1} parent=1 // pred_fallthru
      _
    // Predicated region
    $region30: #{seq2seq_forward.1} parent=1 // pred_check
      _
    $region31: #{seq2seq_forward.1} parent=1 // pred_check_branch
      %33 = sbr.rel (0) target = $region33
    $region32: #{seq2seq_forward.1} parent=1 // pred_region
      _
    $region33: #{seq2seq_forward.1} parent=1 // pred_fallthru
      _
    // Predicated region
    $region34: #{seq2seq_forward.1} parent=1 // pred_check
      _
    $region35: #{seq2seq_forward.1} parent=1 // pred_check_branch
      %35 = sbr.rel (0) target = $region37
    $region36: #{seq2seq_forward.1} parent=1 // pred_region
      _
    $region37: #{seq2seq_forward.1} parent=1 // pred_fallthru
      _
    // Predicated region
    $region38: #{seq2seq_forward.1} parent=1 // pred_check
      _
    $region39: #{seq2seq_forward.1} parent=1 // pred_check_branch
      %37 = sbr.rel (0) target = $region41
    $region40: #{seq2seq_forward.1} parent=1 // pred_region
      _
    $region41: #{seq2seq_forward.1} parent=1 // pred_fallthru
      _
    // Predicated region
    $region42: #{seq2seq_forward.1} parent=1 // pred_check
      _
    $region43: #{seq2seq_forward.1} parent=1 // pred_check_branch
      %39 = sbr.rel (0) target = $region45
    $region44: #{seq2seq_forward.1} parent=1 // pred_region
      _
    $region45: #{seq2seq_forward.1} parent=1 // pred_fallthru
      _
    // Predicated region
    $region46: #{seq2seq_forward.1} parent=1 // pred_check
      _
    $region47: #{seq2seq_forward.1} parent=1 // pred_check_branch
      %41 = sbr.rel (0) target = $region49
    $region48: #{seq2seq_forward.1} parent=1 // pred_region
      _
    $region49: #{seq2seq_forward.1} parent=1 // pred_fallthru
      _
    %v42 = vld [vmem:[%s0] sm:$0xff]
    %v43 = vld [vmem:[%s0 + $0x8] sm:$0xff]
    %v44 = vld [vmem:[%s0 + $0x10] sm:$0xff]
    %v45 = vld [vmem:[%s0 + $0x18] sm:$0xff]
    %v46 = vld [vmem:[%s0 + $0x20] sm:$0xff]
    %v47 = vld [vmem:[%s0 + $0x28] sm:$0xff]
    %v48 = vld [vmem:[%s0 + $0x30] sm:$0xff]
    %v49 = vld [vmem:[%s0 + $0x38] sm:$0xff]
    %v50 = vlaneseq
    %v51 = vand.u32 %v50, 127
    %52 = vset.pattern.permute.xlu0 0
    %53 = vperm.xlu0 %52, %v42
    %v54 = vpop.permute.xlu0 %53
    %55 = vset.pattern.permute.xlu0 0
    %56 = vperm.xlu0 %55, %v43
    %v57 = vpop.permute.xlu0 %56
    %58 = vset.pattern.permute.xlu0 0
    %59 = vperm.xlu0 %58, %v44
    %v60 = vpop.permute.xlu0 %59
    %61 = vset.pattern.permute.xlu0 0
    %62 = vperm.xlu0 %61, %v45
    %v63 = vpop.permute.xlu0 %62
    %64 = vset.pattern.permute.xlu0 0
    %65 = vperm.xlu0 %64, %v46
    %v66 = vpop.permute.xlu0 %65
    %67 = vset.pattern.permute.xlu0 0
    %68 = vperm.xlu0 %67, %v47
    %v69 = vpop.permute.xlu0 %68
    %70 = vset.pattern.permute.xlu0 0
    %71 = vperm.xlu0 %70, %v48
    %v72 = vpop.permute.xlu0 %71
    %73 = vset.pattern.permute.xlu0 0
    %74 = vperm.xlu0 %73, %v49
    %v75 = vpop.permute.xlu0 %74
    %vm76 = vcmp.eq.s32.totalorder %v54, %v51
    %vm77 = vcmp.eq.s32.totalorder %v57, %v51
    %vm78 = vcmp.eq.s32.totalorder %v60, %v51
    %vm79 = vcmp.eq.s32.totalorder %v63, %v51
    %vm80 = vcmp.eq.s32.totalorder %v66, %v51
    %vm81 = vcmp.eq.s32.totalorder %v69, %v51
    %vm82 = vcmp.eq.s32.totalorder %v72, %v51
    %vm83 = vcmp.eq.s32.totalorder %v75, %v51
    %v84 = vsel %vm76, 1, 0
    %v85 = vsel %vm77, 1, 0
    %v86 = vsel %vm78, 1, 0
    %v87 = vsel %vm79, 1, 0
    %v88 = vsel %vm80, 1, 0
    %v89 = vsel %vm81, 1, 0
    %v90 = vsel %vm82, 1, 0
    %v91 = vsel %vm83, 1, 0
    %v92 = vcvt.s32.f32 %v84
    %v93 = vcvt.s32.f32 %v85
    %v94 = vcvt.s32.f32 %v86
    %v95 = vcvt.s32.f32 %v87
    %v96 = vcvt.s32.f32 %v88
    %v97 = vcvt.s32.f32 %v89
    %v98 = vcvt.s32.f32 %v90
    %v99 = vcvt.s32.f32 %v91
    %v100 = vld [vmem:[%s2] sm:$0xff]
    %v101 = vld [vmem:[%s2 + $0x8] sm:$0xff]
    %v102 = vld [vmem:[%s2 + $0x10] sm:$0xff]
    %v103 = vld [vmem:[%s2 + $0x18] sm:$0xff]
    %v104 = vld [vmem:[%s2 + $0x20] sm:$0xff]
    %v105 = vld [vmem:[%s2 + $0x28] sm:$0xff]
    %v106 = vld [vmem:[%s2 + $0x30] sm:$0x3]
    %vm107 = vcmask 408576
    %v109 = vsel %vm107, %v92, 0
    %v112 = vsel %vm107, %v93, 0
    %v115 = vsel %vm107, %v94, 0
    %v118 = vsel %vm107, %v95, 0
    %v121 = vsel %vm107, %v96, 0
    %v124 = vsel %vm107, %v97, 0
    %v127 = vsel %vm107, %v98, 0
    %v130 = vsel %vm107, %v99, 0
    %vm132 = vcmask 1041408
    %v134 = vsel %vm132, %v106, 0
    %136 = vmatprep.subr.mxu0 0.0
    %137 = vmatpush1.msra.mxu0 %v100
    %138 = vmatprep.subr.mxu0 0.0
    %139 = vmatpush1.msra.mxu0 %v101
    %140 = vmatprep.subr.mxu0 0.0
    %141 = vmatpush1.msra.mxu0 %v102
    %142 = vmatprep.subr.mxu0 0.0
    %143 = vmatpush1.msra.mxu0 %v103
    %144 = vmatprep.subr.mxu0 0.0
    %145 = vmatpush1.msra.mxu0 %v104
    %146 = vmatprep.subr.mxu0 0.0
    %147 = vmatpush1.msra.mxu0 %v105
    %148 = vmatprep.subr.mxu0 0.0
    %149 = vmatpush1.msra.mxu0 %v134
    %150 = vmatprep.subr.mxu0 0.0
    %151 = vmatpush1.msra.mxu0 0.0
    %152 = vmatprep.subr.mxu0 0.0
    %153 = vmatpush1.msra.mxu0 0.0
    %154 = vmatprep.subr.mxu0 0.0
    %155 = vmatpush1.msra.mxu0 0.0
    %156 = vmatprep.subr.mxu0 0.0
    %157 = vmatpush1.msra.mxu0 0.0
    %158 = vmatprep.subr.mxu0 0.0
    %159 = vmatpush1.msra.mxu0 0.0
    %160 = vmatprep.subr.mxu0 0.0
    %161 = vmatpush1.msra.mxu0 0.0
    %162 = vmatprep.subr.mxu0 0.0
    %163 = vmatpush1.msra.mxu0 0.0
    %164 = vmatprep.subr.mxu0 0.0
    %165 = vmatpush1.msra.mxu0 0.0
    %166 = vmatprep.subr.mxu0 0.0
    %167 = vmatpush1.msra.mxu0 0.0
    %168 = vmatprep.subr.mxu0 0.0
    %169 = vmatpush1.msra.mxu0 0.0
    %170 = vmatprep.subr.mxu0 0.0
    %171 = vmatpush1.msra.mxu0 0.0
    %172 = vmatprep.subr.mxu0 0.0
    %173 = vmatpush1.msra.mxu0 0.0
    %174 = vmatprep.subr.mxu0 0.0
    %175 = vmatpush1.msra.mxu0 0.0
    %176 = vmatprep.subr.mxu0 0.0
    %177 = vmatpush1.msra.mxu0 0.0
    %178 = vmatprep.subr.mxu0 0.0
    %179 = vmatpush1.msra.mxu0 0.0
    %180 = vmatprep.subr.mxu0 0.0
    %181 = vmatpush1.msra.mxu0 0.0
    %182 = vmatprep.subr.mxu0 0.0
    %183 = vmatpush1.msra.mxu0 0.0
    %184 = vmatprep.subr.mxu0 0.0
    %185 = vmatpush1.msra.mxu0 0.0
    %186 = vmatprep.subr.mxu0 0.0
    %187 = vmatpush1.msra.mxu0 0.0
    %188 = vmatprep.subr.mxu0 0.0
    %189 = vmatpush1.msra.mxu0 0.0
    %190 = vmatprep.subr.mxu0 0.0
    %191 = vmatpush1.msra.mxu0 0.0
    %192 = vmatprep.subr.mxu0 0.0
    %193 = vmatpush1.msra.mxu0 0.0
    %194 = vmatprep.subr.mxu0 0.0
    %195 = vmatpush1.msra.mxu0 0.0
    %196 = vmatprep.subr.mxu0 0.0
    %197 = vmatpush1.msra.mxu0 0.0
    %198 = vmatprep.subr.mxu0 0.0
    %199 = vmatpush1.msra.mxu0 0.0
    %200 = vmatprep.mubr.f32.mxu0 0.0
    %201 = vmatmul.mubr.f32.gmra.mrb[0].mxu0 %v109
    %v202 = vpop.f32.mrb[0].mxu0
    %v203 = vadd.f32 0.0, %v202
    %v204 = vpop.f32.mrb[0].mxu0
    %205 = vmatprep.mubr.f32.mxu0 0.0
    %206 = vmatmul.mubr.f32.gmra.mrb[0].mxu0 %v112
    %v207 = vpop.f32.mrb[0].mxu0
    %v208 = vadd.f32 0.0, %v207
    %v209 = vpop.f32.mrb[0].mxu0
    %210 = vmatprep.mubr.f32.mxu0 0.0
    %211 = vmatmul.mubr.f32.gmra.mrb[0].mxu0 %v115
    %v212 = vpop.f32.mrb[0].mxu0
    %v213 = vadd.f32 0.0, %v212
    %v214 = vpop.f32.mrb[0].mxu0
    %215 = vmatprep.mubr.f32.mxu0 0.0
    %216 = vmatmul.mubr.f32.gmra.mrb[0].mxu0 %v118
    %v217 = vpop.f32.mrb[0].mxu0
    %v218 = vadd.f32 0.0, %v217
    %v219 = vpop.f32.mrb[0].mxu0
    %220 = vmatprep.mubr.f32.mxu0 0.0
    %221 = vmatmul.mubr.f32.gmra.mrb[0].mxu0 %v121
    %v222 = vpop.f32.mrb[0].mxu0
    %v223 = vadd.f32 0.0, %v222
    %v224 = vpop.f32.mrb[0].mxu0
    %225 = vmatprep.mubr.f32.mxu0 0.0
    %226 = vmatmul.mubr.f32.gmra.mrb[0].mxu0 %v124
    %v227 = vpop.f32.mrb[0].mxu0
    %v228 = vadd.f32 0.0, %v227
    %v229 = vpop.f32.mrb[0].mxu0
    %230 = vmatprep.mubr.f32.mxu0 0.0
    %231 = vmatmul.mubr.f32.gmra.mrb[0].mxu0 %v127
    %v232 = vpop.f32.mrb[0].mxu0
    %v233 = vadd.f32 0.0, %v232
    %v234 = vpop.f32.mrb[0].mxu0
    %235 = vmatprep.mubr.f32.mxu0 0.0
    %236 = vmatmul.mubr.f32.gmra.mrb[0].mxu0 %v130
    %v237 = vpop.f32.mrb[0].mxu0
    %v238 = vadd.f32 0.0, %v237
    %v239 = vpop.f32.mrb[0].mxu0
    %240 = vdwg.mxu0
    %v241 = vld [vmem:[%s3] sm:$0xff]
    %v242 = vld [vmem:[%s3 + $0x8] sm:$0xff]
    %v243 = vld [vmem:[%s5] sm:$0x1]
    %v245 = vlaneseq
    %v246 = vshrl.u32 %v245, 7
    %v247 = vsub.s32 0, %v246
    %v248 = vrot.slane %v243, %v247
    %vm250 = vcmask 130048
    %v252 = vsel %vm250, %v203, 0
    %v255 = vsel %vm250, %v208, 0
    %v258 = vsel %vm250, %v213, 0
    %v261 = vsel %vm250, %v218, 0
    %v264 = vsel %vm250, %v223, 0
    %v267 = vsel %vm250, %v228, 0
    %v270 = vsel %vm250, %v233, 0
    %v273 = vsel %vm250, %v238, 0
    %275 = vmatprep.subr.mxu0 0.0
    %276 = vmatpush1.msra.mxu0 %v241
    %277 = vmatprep.subr.mxu0 0.0
    %278 = vmatpush1.msra.mxu0 %v242
    %279 = vmatprep.subr.mxu0 0.0
    %280 = vmatpush1.msra.mxu0 0.0
    %281 = vmatprep.subr.mxu0 0.0
    %282 = vmatpush1.msra.mxu0 0.0
    %283 = vmatprep.subr.mxu0 0.0
    %284 = vmatpush1.msra.mxu0 0.0
    %285 = vmatprep.subr.mxu0 0.0
    %286 = vmatpush1.msra.mxu0 0.0
    %287 = vmatprep.subr.mxu0 0.0
    %288 = vmatpush1.msra.mxu0 0.0
    %289 = vmatprep.subr.mxu0 0.0
    %290 = vmatpush1.msra.mxu0 0.0
    %291 = vmatprep.subr.mxu0 0.0
    %292 = vmatpush1.msra.mxu0 0.0
    %293 = vmatprep.subr.mxu0 0.0
    %294 = vmatpush1.msra.mxu0 0.0
    %295 = vmatprep.subr.mxu0 0.0
    %296 = vmatpush1.msra.mxu0 0.0
    %297 = vmatprep.subr.mxu0 0.0
    %298 = vmatpush1.msra.mxu0 0.0
    %299 = vmatprep.subr.mxu0 0.0
    %300 = vmatpush1.msra.mxu0 0.0
    %301 = vmatprep.subr.mxu0 0.0
    %302 = vmatpush1.msra.mxu0 0.0
    %303 = vmatprep.subr.mxu0 0.0
    %304 = vmatpush1.msra.mxu0 0.0
    %305 = vmatprep.subr.mxu0 0.0
    %306 = vmatpush1.msra.mxu0 0.0
    %307 = vmatprep.subr.mxu0 0.0
    %308 = vmatpush1.msra.mxu0 0.0
    %309 = vmatprep.subr.mxu0 0.0
    %310 = vmatpush1.msra.mxu0 0.0
    %311 = vmatprep.subr.mxu0 0.0
    %312 = vmatpush1.msra.mxu0 0.0
    %313 = vmatprep.subr.mxu0 0.0
    %314 = vmatpush1.msra.mxu0 0.0
    %315 = vmatprep.subr.mxu0 0.0
    %316 = vmatpush1.msra.mxu0 0.0
    %317 = vmatprep.subr.mxu0 0.0
    %318 = vmatpush1.msra.mxu0 0.0
    %319 = vmatprep.subr.mxu0 0.0
    %320 = vmatpush1.msra.mxu0 0.0
    %321 = vmatprep.subr.mxu0 0.0
    %322 = vmatpush1.msra.mxu0 0.0
    %323 = vmatprep.subr.mxu0 0.0
    %324 = vmatpush1.msra.mxu0 0.0
    %325 = vmatprep.subr.mxu0 0.0
    %326 = vmatpush1.msra.mxu0 0.0
    %327 = vmatprep.subr.mxu0 0.0
    %328 = vmatpush1.msra.mxu0 0.0
    %329 = vmatprep.subr.mxu0 0.0
    %330 = vmatpush1.msra.mxu0 0.0
    %331 = vmatprep.subr.mxu0 0.0
    %332 = vmatpush1.msra.mxu0 0.0
    %333 = vmatprep.subr.mxu0 0.0
    %334 = vmatpush1.msra.mxu0 0.0
    %335 = vmatprep.subr.mxu0 0.0
    %336 = vmatpush1.msra.mxu0 0.0
    %337 = vmatprep.subr.mxu0 0.0
    %338 = vmatpush1.msra.mxu0 0.0
    %339 = vmatprep.mubr.f32.mxu0 0.0
    %340 = vmatmul.mubr.f32.gmra.mrb[0].mxu0 %v252
    %v341 = vpop.f32.mrb[0].mxu0
    %v342 = vadd.f32 %v248, %v341
    %v343 = vpop.f32.mrb[0].mxu0
    %344 = vmatprep.mubr.f32.mxu0 0.0
    %345 = vmatmul.mubr.f32.gmra.mrb[0].mxu0 %v255
    %v346 = vpop.f32.mrb[0].mxu0
    %v347 = vadd.f32 %v248, %v346
    %v348 = vpop.f32.mrb[0].mxu0
    %349 = vmatprep.mubr.f32.mxu0 0.0
    %350 = vmatmul.mubr.f32.gmra.mrb[0].mxu0 %v258
    %v351 = vpop.f32.mrb[0].mxu0
    %v352 = vadd.f32 %v248, %v351
    %v353 = vpop.f32.mrb[0].mxu0
    %354 = vmatprep.mubr.f32.mxu0 0.0
    %355 = vmatmul.mubr.f32.gmra.mrb[0].mxu0 %v261
    %v356 = vpop.f32.mrb[0].mxu0
    %v357 = vadd.f32 %v248, %v356
    %v358 = vpop.f32.mrb[0].mxu0
    %359 = vmatprep.mubr.f32.mxu0 0.0
    %360 = vmatmul.mubr.f32.gmra.mrb[0].mxu0 %v264
    %v361 = vpop.f32.mrb[0].mxu0
    %v362 = vadd.f32 %v248, %v361
    %v363 = vpop.f32.mrb[0].mxu0
    %364 = vmatprep.mubr.f32.mxu0 0.0
    %365 = vmatmul.mubr.f32.gmra.mrb[0].mxu0 %v267
    %v366 = vpop.f32.mrb[0].mxu0
    %v367 = vadd.f32 %v248, %v366
    %v368 = vpop.f32.mrb[0].mxu0
    %369 = vmatprep.mubr.f32.mxu0 0.0
    %370 = vmatmul.mubr.f32.gmra.mrb[0].mxu0 %v270
    %v371 = vpop.f32.mrb[0].mxu0
    %v372 = vadd.f32 %v248, %v371
    %v373 = vpop.f32.mrb[0].mxu0
    %374 = vmatprep.mubr.f32.mxu0 0.0
    %375 = vmatmul.mubr.f32.gmra.mrb[0].mxu0 %v273
    %v376 = vpop.f32.mrb[0].mxu0
    %v377 = vadd.f32 %v248, %v376
    %v378 = vpop.f32.mrb[0].mxu0
    %379 = vdwg.mxu0
    %v380 = vld [vmem:[%s1] sm:$0xff]
    %v381 = vld [vmem:[%s1 + $0x8] sm:$0xff]
    %v382 = vld [vmem:[%s1 + $0x10] sm:$0xff]
    %v383 = vld [vmem:[%s1 + $0x18] sm:$0xff]
    %v384 = vld [vmem:[%s1 + $0x20] sm:$0xff]
    %v385 = vld [vmem:[%s1 + $0x28] sm:$0xff]
    %v386 = vld [vmem:[%s1 + $0x30] sm:$0xff]
    %387 = vset.pattern.permute.xlu0 0
    %388 = vperm.xlu0 %387, %v380
    %v389 = vpop.permute.xlu0 %388
    %390 = vset.pattern.permute.xlu0 0
    %391 = vperm.xlu0 %390, %v381
    %v392 = vpop.permute.xlu0 %391
    %393 = vset.pattern.permute.xlu0 0
    %394 = vperm.xlu0 %393, %v382
    %v395 = vpop.permute.xlu0 %394
    %396 = vset.pattern.permute.xlu0 0
    %397 = vperm.xlu0 %396, %v383
    %v398 = vpop.permute.xlu0 %397
    %399 = vset.pattern.permute.xlu0 0
    %400 = vperm.xlu0 %399, %v384
    %v401 = vpop.permute.xlu0 %400
    %402 = vset.pattern.permute.xlu0 0
    %403 = vperm.xlu0 %402, %v385
    %v404 = vpop.permute.xlu0 %403
    %405 = vset.pattern.permute.xlu0 0
    %406 = vperm.xlu0 %405, %v386
    %v407 = vpop.permute.xlu0 %406
    %vm408 = vcmp.eq.s32.totalorder %v389, %v51
    %vm409 = vcmp.eq.s32.totalorder %v392, %v51
    %vm410 = vcmp.eq.s32.totalorder %v395, %v51
    %vm411 = vcmp.eq.s32.totalorder %v398, %v51
    %vm412 = vcmp.eq.s32.totalorder %v401, %v51
    %vm413 = vcmp.eq.s32.totalorder %v404, %v51
    %vm414 = vcmp.eq.s32.totalorder %v407, %v51
    %v415 = vsel %vm408, 1, 0
    %v416 = vsel %vm409, 1, 0
    %v417 = vsel %vm410, 1, 0
    %v418 = vsel %vm411, 1, 0
    %v419 = vsel %vm412, 1, 0
    %v420 = vsel %vm413, 1, 0
    %v421 = vsel %vm414, 1, 0
    %v422 = vcvt.s32.f32 %v415
    %v423 = vcvt.s32.f32 %v416
    %v424 = vcvt.s32.f32 %v417
    %v425 = vcvt.s32.f32 %v418
    %v426 = vcvt.s32.f32 %v419
    %v427 = vcvt.s32.f32 %v420
    %v428 = vcvt.s32.f32 %v421
    %v429 = vld [vmem:[%s6] sm:$0xff]
    %v430 = vld [vmem:[%s6 + $0x8] sm:$0xff]
    %v431 = vld [vmem:[%s6 + $0x10] sm:$0xff]
    %v432 = vld [vmem:[%s6 + $0x18] sm:$0xff]
    %v433 = vld [vmem:[%s6 + $0x20] sm:$0xff]
    %v434 = vld [vmem:[%s6 + $0x28] sm:$0xff]
    %v435 = vld [vmem:[%s6 + $0x30] sm:$0xff]
    %v436 = vld [vmem:[%s6 + $0x38] sm:$0xff]
    %vm437 = vcmask 523264
    %v439 = vsel %vm437, %v422, 0
    %v442 = vsel %vm437, %v423, 0
    %v445 = vsel %vm437, %v424, 0
    %v448 = vsel %vm437, %v425, 0
    %v451 = vsel %vm437, %v426, 0
    %v454 = vsel %vm437, %v427, 0
    %v457 = vsel %vm437, %v428, 0
    %459 = vmatprep.subr.mxu0 0.0
    %460 = vmatpush1.msra.mxu0 %v429
    %461 = vmatprep.subr.mxu0 0.0
    %462 = vmatpush1.msra.mxu0 %v430
    %463 = vmatprep.subr.mxu0 0.0
    %464 = vmatpush1.msra.mxu0 %v431
    %465 = vmatprep.subr.mxu0 0.0
    %466 = vmatpush1.msra.mxu0 %v432
    %467 = vmatprep.subr.mxu0 0.0
    %468 = vmatpush1.msra.mxu0 %v433
    %469 = vmatprep.subr.mxu0 0.0
    %470 = vmatpush1.msra.mxu0 %v434
    %471 = vmatprep.subr.mxu0 0.0
    %472 = vmatpush1.msra.mxu0 %v435
    %473 = vmatprep.subr.mxu0 0.0
    %474 = vmatpush1.msra.mxu0 %v436
    %475 = vmatprep.subr.mxu0 0.0
    %476 = vmatpush1.msra.mxu0 0.0
    %477 = vmatprep.subr.mxu0 0.0
    %478 = vmatpush1.msra.mxu0 0.0
    %479 = vmatprep.subr.mxu0 0.0
    %480 = vmatpush1.msra.mxu0 0.0
    %481 = vmatprep.subr.mxu0 0.0
    %482 = vmatpush1.msra.mxu0 0.0
    %483 = vmatprep.subr.mxu0 0.0
    %484 = vmatpush1.msra.mxu0 0.0
    %485 = vmatprep.subr.mxu0 0.0
    %486 = vmatpush1.msra.mxu0 0.0
    %487 = vmatprep.subr.mxu0 0.0
    %488 = vmatpush1.msra.mxu0 0.0
    %489 = vmatprep.subr.mxu0 0.0
    %490 = vmatpush1.msra.mxu0 0.0
    %491 = vmatprep.subr.mxu0 0.0
    %492 = vmatpush1.msra.mxu0 0.0
    %493 = vmatprep.subr.mxu0 0.0
    %494 = vmatpush1.msra.mxu0 0.0
    %495 = vmatprep.subr.mxu0 0.0
    %496 = vmatpush1.msra.mxu0 0.0
    %497 = vmatprep.subr.mxu0 0.0
    %498 = vmatpush1.msra.mxu0 0.0
    %499 = vmatprep.subr.mxu0 0.0
    %500 = vmatpush1.msra.mxu0 0.0
    %501 = vmatprep.subr.mxu0 0.0
    %502 = vmatpush1.msra.mxu0 0.0
    %503 = vmatprep.subr.mxu0 0.0
    %504 = vmatpush1.msra.mxu0 0.0
    %505 = vmatprep.subr.mxu0 0.0
    %506 = vmatpush1.msra.mxu0 0.0
    %507 = vmatprep.subr.mxu0 0.0
    %508 = vmatpush1.msra.mxu0 0.0
    %509 = vmatprep.subr.mxu0 0.0
    %510 = vmatpush1.msra.mxu0 0.0
    %511 = vmatprep.subr.mxu0 0.0
    %512 = vmatpush1.msra.mxu0 0.0
    %513 = vmatprep.subr.mxu0 0.0
    %514 = vmatpush1.msra.mxu0 0.0
    %515 = vmatprep.subr.mxu0 0.0
    %516 = vmatpush1.msra.mxu0 0.0
    %517 = vmatprep.subr.mxu0 0.0
    %518 = vmatpush1.msra.mxu0 0.0
    %519 = vmatprep.subr.mxu0 0.0
    %520 = vmatpush1.msra.mxu0 0.0
    %521 = vmatprep.subr.mxu0 0.0
    %522 = vmatpush1.msra.mxu0 0.0
    %523 = vmatprep.mubr.f32.mxu0 0.0
    %524 = vmatmul.mubr.f32.gmra.mrb[0].mxu0 %v439
    %v525 = vpop.f32.mrb[0].mxu0
    %v526 = vadd.f32 0.0, %v525
    %v527 = vpop.f32.mrb[0].mxu0
    %528 = vmatprep.mubr.f32.mxu0 0.0
    %529 = vmatmul.mubr.f32.gmra.mrb[0].mxu0 %v442
    %v530 = vpop.f32.mrb[0].mxu0
    %v531 = vadd.f32 0.0, %v530
    %v532 = vpop.f32.mrb[0].mxu0
    %533 = vmatprep.mubr.f32.mxu0 0.0
    %534 = vmatmul.mubr.f32.gmra.mrb[0].mxu0 %v445
    %v535 = vpop.f32.mrb[0].mxu0
    %v536 = vadd.f32 0.0, %v535
    %v537 = vpop.f32.mrb[0].mxu0
    %538 = vmatprep.mubr.f32.mxu0 0.0
    %539 = vmatmul.mubr.f32.gmra.mrb[0].mxu0 %v448
    %v540 = vpop.f32.mrb[0].mxu0
    %v541 = vadd.f32 0.0, %v540
    %v542 = vpop.f32.mrb[0].mxu0
    %543 = vmatprep.mubr.f32.mxu0 0.0
    %544 = vmatmul.mubr.f32.gmra.mrb[0].mxu0 %v451
    %v545 = vpop.f32.mrb[0].mxu0
    %v546 = vadd.f32 0.0, %v545
    %v547 = vpop.f32.mrb[0].mxu0
    %548 = vmatprep.mubr.f32.mxu0 0.0
    %549 = vmatmul.mubr.f32.gmra.mrb[0].mxu0 %v454
    %v550 = vpop.f32.mrb[0].mxu0
    %v551 = vadd.f32 0.0, %v550
    %v552 = vpop.f32.mrb[0].mxu0
    %553 = vmatprep.mubr.f32.mxu0 0.0
    %554 = vmatmul.mubr.f32.gmra.mrb[0].mxu0 %v457
    %v555 = vpop.f32.mrb[0].mxu0
    %v556 = vadd.f32 0.0, %v555
    %v557 = vpop.f32.mrb[0].mxu0
    %558 = vdwg.mxu0
    %v559 = vld [vmem:[%s7] sm:$0xff]
    %v560 = vld [vmem:[%s7 + $0x8] sm:$0xff]
    %v561 = vld [vmem:[%s9] sm:$0x1]
    %v563 = vlaneseq
    %v564 = vshrl.u32 %v563, 7
    %v565 = vsub.s32 0, %v564
    %v566 = vrot.slane %v561, %v565
    %v569 = vsel %vm250, %v526, 0
    %v572 = vsel %vm250, %v531, 0
    %v575 = vsel %vm250, %v536, 0
    %v578 = vsel %vm250, %v541, 0
    %v581 = vsel %vm250, %v546, 0
    %v584 = vsel %vm250, %v551, 0
    %v587 = vsel %vm250, %v556, 0
    %589 = vmatprep.subr.mxu0 0.0
    %590 = vmatpush1.msra.mxu0 %v559
    %591 = vmatprep.subr.mxu0 0.0
    %592 = vmatpush1.msra.mxu0 %v560
    %593 = vmatprep.subr.mxu0 0.0
    %594 = vmatpush1.msra.mxu0 0.0
    %595 = vmatprep.subr.mxu0 0.0
    %596 = vmatpush1.msra.mxu0 0.0
    %597 = vmatprep.subr.mxu0 0.0
    %598 = vmatpush1.msra.mxu0 0.0
    %599 = vmatprep.subr.mxu0 0.0
    %600 = vmatpush1.msra.mxu0 0.0
    %601 = vmatprep.subr.mxu0 0.0
    %602 = vmatpush1.msra.mxu0 0.0
    %603 = vmatprep.subr.mxu0 0.0
    %604 = vmatpush1.msra.mxu0 0.0
    %605 = vmatprep.subr.mxu0 0.0
    %606 = vmatpush1.msra.mxu0 0.0
    %607 = vmatprep.subr.mxu0 0.0
    %608 = vmatpush1.msra.mxu0 0.0
    %609 = vmatprep.subr.mxu0 0.0
    %610 = vmatpush1.msra.mxu0 0.0
    %611 = vmatprep.subr.mxu0 0.0
    %612 = vmatpush1.msra.mxu0 0.0
    %613 = vmatprep.subr.mxu0 0.0
    %614 = vmatpush1.msra.mxu0 0.0
    %615 = vmatprep.subr.mxu0 0.0
    %616 = vmatpush1.msra.mxu0 0.0
    %617 = vmatprep.subr.mxu0 0.0
    %618 = vmatpush1.msra.mxu0 0.0
    %619 = vmatprep.subr.mxu0 0.0
    %620 = vmatpush1.msra.mxu0 0.0
    %621 = vmatprep.subr.mxu0 0.0
    %622 = vmatpush1.msra.mxu0 0.0
    %623 = vmatprep.subr.mxu0 0.0
    %624 = vmatpush1.msra.mxu0 0.0
    %625 = vmatprep.subr.mxu0 0.0
    %626 = vmatpush1.msra.mxu0 0.0
    %627 = vmatprep.subr.mxu0 0.0
    %628 = vmatpush1.msra.mxu0 0.0
    %629 = vmatprep.subr.mxu0 0.0
    %630 = vmatpush1.msra.mxu0 0.0
    %631 = vmatprep.subr.mxu0 0.0
    %632 = vmatpush1.msra.mxu0 0.0
    %633 = vmatprep.subr.mxu0 0.0
    %634 = vmatpush1.msra.mxu0 0.0
    %635 = vmatprep.subr.mxu0 0.0
    %636 = vmatpush1.msra.mxu0 0.0
    %637 = vmatprep.subr.mxu0 0.0
    %638 = vmatpush1.msra.mxu0 0.0
    %639 = vmatprep.subr.mxu0 0.0
    %640 = vmatpush1.msra.mxu0 0.0
    %641 = vmatprep.subr.mxu0 0.0
    %642 = vmatpush1.msra.mxu0 0.0
    %643 = vmatprep.subr.mxu0 0.0
    %644 = vmatpush1.msra.mxu0 0.0
    %645 = vmatprep.subr.mxu0 0.0
    %646 = vmatpush1.msra.mxu0 0.0
    %647 = vmatprep.subr.mxu0 0.0
    %648 = vmatpush1.msra.mxu0 0.0
    %649 = vmatprep.subr.mxu0 0.0
    %650 = vmatpush1.msra.mxu0 0.0
    %651 = vmatprep.subr.mxu0 0.0
    %652 = vmatpush1.msra.mxu0 0.0
    %653 = vmatprep.mubr.f32.mxu0 0.0
    %654 = vmatmul.mubr.f32.gmra.mrb[0].mxu0 %v569
    %v655 = vpop.f32.mrb[0].mxu0
    %v656 = vadd.f32 %v566, %v655
    %v657 = vpop.f32.mrb[0].mxu0
    %658 = vmatprep.mubr.f32.mxu0 0.0
    %659 = vmatmul.mubr.f32.gmra.mrb[0].mxu0 %v572
    %v660 = vpop.f32.mrb[0].mxu0
    %v661 = vadd.f32 %v566, %v660
    %v662 = vpop.f32.mrb[0].mxu0
    %663 = vmatprep.mubr.f32.mxu0 0.0
    %664 = vmatmul.mubr.f32.gmra.mrb[0].mxu0 %v575
    %v665 = vpop.f32.mrb[0].mxu0
    %v666 = vadd.f32 %v566, %v665
    %v667 = vpop.f32.mrb[0].mxu0
    %668 = vmatprep.mubr.f32.mxu0 0.0
    %669 = vmatmul.mubr.f32.gmra.mrb[0].mxu0 %v578
    %v670 = vpop.f32.mrb[0].mxu0
    %v671 = vadd.f32 %v566, %v670
    %v672 = vpop.f32.mrb[0].mxu0
    %673 = vmatprep.mubr.f32.mxu0 0.0
    %674 = vmatmul.mubr.f32.gmra.mrb[0].mxu0 %v581
    %v675 = vpop.f32.mrb[0].mxu0
    %v676 = vadd.f32 %v566, %v675
    %v677 = vpop.f32.mrb[0].mxu0
    %678 = vmatprep.mubr.f32.mxu0 0.0
    %679 = vmatmul.mubr.f32.gmra.mrb[0].mxu0 %v584
    %v680 = vpop.f32.mrb[0].mxu0
    %v681 = vadd.f32 %v566, %v680
    %v682 = vpop.f32.mrb[0].mxu0
    %683 = vmatprep.mubr.f32.mxu0 0.0
    %684 = vmatmul.mubr.f32.gmra.mrb[0].mxu0 %v587
    %v685 = vpop.f32.mrb[0].mxu0
    %v686 = vadd.f32 %v566, %v685
    %v687 = vpop.f32.mrb[0].mxu0
    %688 = vdwg.mxu0
    %v689 = vld [vmem:[%s4] sm:$0xff]
    %v690 = vld [vmem:[%s4 + $0x8] sm:$0xff]
    %v691 = vld [vmem:[%s4 + $0x10] sm:$0xff]
    %v692 = vld [vmem:[%s4 + $0x18] sm:$0xff]
    %vm693 = vcmask 261120
    %v695 = vsel %vm693, 0.0, 0
    %697 = vmatprep.subr.mxu0 0.0
    %698 = vmatpush1.msra.mxu0 %v689
    %699 = vmatprep.subr.mxu0 0.0
    %700 = vmatpush1.msra.mxu0 %v690
    %701 = vmatprep.subr.mxu0 0.0
    %702 = vmatpush1.msra.mxu0 %v691
    %703 = vmatprep.subr.mxu0 0.0
    %704 = vmatpush1.msra.mxu0 %v692
    %705 = vmatprep.subr.mxu0 0.0
    %706 = vmatpush1.msra.mxu0 0.0
    %707 = vmatprep.subr.mxu0 0.0
    %708 = vmatpush1.msra.mxu0 0.0
    %709 = vmatprep.subr.mxu0 0.0
    %710 = vmatpush1.msra.mxu0 0.0
    %711 = vmatprep.subr.mxu0 0.0
    %712 = vmatpush1.msra.mxu0 0.0
    %713 = vmatprep.subr.mxu0 0.0
    %714 = vmatpush1.msra.mxu0 0.0
    %715 = vmatprep.subr.mxu0 0.0
    %716 = vmatpush1.msra.mxu0 0.0
    %717 = vmatprep.subr.mxu0 0.0
    %718 = vmatpush1.msra.mxu0 0.0
    %719 = vmatprep.subr.mxu0 0.0
    %720 = vmatpush1.msra.mxu0 0.0
    %721 = vmatprep.subr.mxu0 0.0
    %722 = vmatpush1.msra.mxu0 0.0
    %723 = vmatprep.subr.mxu0 0.0
    %724 = vmatpush1.msra.mxu0 0.0
    %725 = vmatprep.subr.mxu0 0.0
    %726 = vmatpush1.msra.mxu0 0.0
    %727 = vmatprep.subr.mxu0 0.0
    %728 = vmatpush1.msra.mxu0 0.0
    %729 = vmatprep.subr.mxu0 0.0
    %730 = vmatpush1.msra.mxu0 0.0
    %731 = vmatprep.subr.mxu0 0.0
    %732 = vmatpush1.msra.mxu0 0.0
    %733 = vmatprep.subr.mxu0 0.0
    %734 = vmatpush1.msra.mxu0 0.0
    %735 = vmatprep.subr.mxu0 0.0
    %736 = vmatpush1.msra.mxu0 0.0
    %737 = vmatprep.subr.mxu0 0.0
    %738 = vmatpush1.msra.mxu0 0.0
    %739 = vmatprep.subr.mxu0 0.0
    %740 = vmatpush1.msra.mxu0 0.0
    %741 = vmatprep.subr.mxu0 0.0
    %742 = vmatpush1.msra.mxu0 0.0
    %743 = vmatprep.subr.mxu0 0.0
    %744 = vmatpush1.msra.mxu0 0.0
    %745 = vmatprep.subr.mxu0 0.0
    %746 = vmatpush1.msra.mxu0 0.0
    %747 = vmatprep.subr.mxu0 0.0
    %748 = vmatpush1.msra.mxu0 0.0
    %749 = vmatprep.subr.mxu0 0.0
    %750 = vmatpush1.msra.mxu0 0.0
    %751 = vmatprep.subr.mxu0 0.0
    %752 = vmatpush1.msra.mxu0 0.0
    %753 = vmatprep.subr.mxu0 0.0
    %754 = vmatpush1.msra.mxu0 0.0
    %755 = vmatprep.subr.mxu0 0.0
    %756 = vmatpush1.msra.mxu0 0.0
    %757 = vmatprep.subr.mxu0 0.0
    %758 = vmatpush1.msra.mxu0 0.0
    %759 = vmatprep.subr.mxu0 0.0
    %760 = vmatpush1.msra.mxu0 0.0
    %761 = vmatprep.mubr.f32.mxu0 0.0
    %762 = vmatmul.mubr.f32.gmra.mrb[0].mxu0 %v695
    %v763 = vpop.f32.mrb[0].mxu0
    %v764 = vadd.f32 0.0, %v763
    %v765 = vpop.f32.mrb[0].mxu0
    %766 = vdwg.mxu0
    %v767 = vadd.f32 %v342, %v764
    %v768 = vxor.u32 %v767, 2147483648
    %v769 = vmul.f32 %v768, 1.442695
    %v770 = vpow.pop %v769
    %v771 = vadd.f32 %v770, 1.0
    %v772 = vrcp.pop %v771
    %v773 = vmul.f32 1.0, %v772
    %v774 = vtanh.pop %v767
    %v775 = vmul.f32 %v773, 0.0
    %777 = vrot.lane.b32.xlu0 %v774, 64
    %v778 = vpop.permute.xlu0 %777
    %v780 = vmul.f32 %v773, %v778
    %782 = vrot.lane.b32.xlu0 %v780, 32
    %v783 = vpop.permute.xlu0 %782
    %v785 = vadd.f32 %v775, %v783
    %v786 = vtanh.pop %v785
    %788 = vrot.lane.b32.xlu0 %v786, 64
    %v789 = vpop.permute.xlu0 %788
    %v791 = vmul.f32 %v773, %v789
    %793 = vrot.lane.b32.xlu0 %v791, 32
    %v794 = vpop.permute.xlu0 %793
    %v795 = vsel %vm693, %v794, 0
    %797 = vmatprep.subr.mxu0 0.0
    %798 = vmatpush1.msra.mxu0 %v689
    %799 = vmatprep.subr.mxu0 0.0
    %800 = vmatpush1.msra.mxu0 %v690
    %801 = vmatprep.subr.mxu0 0.0
    %802 = vmatpush1.msra.mxu0 %v691
    %803 = vmatprep.subr.mxu0 0.0
    %804 = vmatpush1.msra.mxu0 %v692
    %805 = vmatprep.subr.mxu0 0.0
    %806 = vmatpush1.msra.mxu0 0.0
    %807 = vmatprep.subr.mxu0 0.0
    %808 = vmatpush1.msra.mxu0 0.0
    %809 = vmatprep.subr.mxu0 0.0
    %810 = vmatpush1.msra.mxu0 0.0
    %811 = vmatprep.subr.mxu0 0.0
    %812 = vmatpush1.msra.mxu0 0.0
    %813 = vmatprep.subr.mxu0 0.0
    %814 = vmatpush1.msra.mxu0 0.0
    %815 = vmatprep.subr.mxu0 0.0
    %816 = vmatpush1.msra.mxu0 0.0
    %817 = vmatprep.subr.mxu0 0.0
    %818 = vmatpush1.msra.mxu0 0.0
    %819 = vmatprep.subr.mxu0 0.0
    %820 = vmatpush1.msra.mxu0 0.0
    %821 = vmatprep.subr.mxu0 0.0
    %822 = vmatpush1.msra.mxu0 0.0
    %823 = vmatprep.subr.mxu0 0.0
    %824 = vmatpush1.msra.mxu0 0.0
    %825 = vmatprep.subr.mxu0 0.0
    %826 = vmatpush1.msra.mxu0 0.0
    %827 = vmatprep.subr.mxu0 0.0
    %828 = vmatpush1.msra.mxu0 0.0
    %829 = vmatprep.subr.mxu0 0.0
    %830 = vmatpush1.msra.mxu0 0.0
    %831 = vmatprep.subr.mxu0 0.0
    %832 = vmatpush1.msra.mxu0 0.0
    %833 = vmatprep.subr.mxu0 0.0
    %834 = vmatpush1.msra.mxu0 0.0
    %835 = vmatprep.subr.mxu0 0.0
    %836 = vmatpush1.msra.mxu0 0.0
    %837 = vmatprep.subr.mxu0 0.0
    %838 = vmatpush1.msra.mxu0 0.0
    %839 = vmatprep.subr.mxu0 0.0
    %840 = vmatpush1.msra.mxu0 0.0
    %841 = vmatprep.subr.mxu0 0.0
    %842 = vmatpush1.msra.mxu0 0.0
    %843 = vmatprep.subr.mxu0 0.0
    %844 = vmatpush1.msra.mxu0 0.0
    %845 = vmatprep.subr.mxu0 0.0
    %846 = vmatpush1.msra.mxu0 0.0
    %847 = vmatprep.subr.mxu0 0.0
    %848 = vmatpush1.msra.mxu0 0.0
    %849 = vmatprep.subr.mxu0 0.0
    %850 = vmatpush1.msra.mxu0 0.0
    %851 = vmatprep.subr.mxu0 0.0
    %852 = vmatpush1.msra.mxu0 0.0
    %853 = vmatprep.subr.mxu0 0.0
    %854 = vmatpush1.msra.mxu0 0.0
    %855 = vmatprep.subr.mxu0 0.0
    %856 = vmatpush1.msra.mxu0 0.0
    %857 = vmatprep.subr.mxu0 0.0
    %858 = vmatpush1.msra.mxu0 0.0
    %859 = vmatprep.subr.mxu0 0.0
    %860 = vmatpush1.msra.mxu0 0.0
    %861 = vmatprep.mubr.f32.mxu0 0.0
    %862 = vmatmul.mubr.f32.gmra.mrb[0].mxu0 %v795
    %v863 = vpop.f32.mrb[0].mxu0
    %v864 = vadd.f32 0.0, %v863
    %v865 = vpop.f32.mrb[0].mxu0
    %866 = vdwg.mxu0
    %v867 = vadd.f32 %v347, %v864
    %v868 = vxor.u32 %v867, 2147483648
    %v869 = vmul.f32 %v868, 1.442695
    %v870 = vpow.pop %v869
    %v871 = vadd.f32 %v870, 1.0
    %v872 = vrcp.pop %v871
    %v873 = vmul.f32 1.0, %v872
    %v874 = vtanh.pop %v867
    %v875 = vmul.f32 %v873, %v785
    %877 = vrot.lane.b32.xlu0 %v874, 64
    %v878 = vpop.permute.xlu0 %877
    %v880 = vmul.f32 %v873, %v878
    %882 = vrot.lane.b32.xlu0 %v880, 32
    %v883 = vpop.permute.xlu0 %882
    %v885 = vadd.f32 %v875, %v883
    %v886 = vtanh.pop %v885
    %888 = vrot.lane.b32.xlu0 %v886, 64
    %v889 = vpop.permute.xlu0 %888
    %v891 = vmul.f32 %v873, %v889
    %893 = vrot.lane.b32.xlu0 %v891, 32
    %v894 = vpop.permute.xlu0 %893
    %v895 = vsel %vm693, %v894, 0
    %897 = vmatprep.subr.mxu0 0.0
    %898 = vmatpush1.msra.mxu0 %v689
    %899 = vmatprep.subr.mxu0 0.0
    %900 = vmatpush1.msra.mxu0 %v690
    %901 = vmatprep.subr.mxu0 0.0
    %902 = vmatpush1.msra.mxu0 %v691
    %903 = vmatprep.subr.mxu0 0.0
    %904 = vmatpush1.msra.mxu0 %v692
    %905 = vmatprep.subr.mxu0 0.0
    %906 = vmatpush1.msra.mxu0 0.0
    %907 = vmatprep.subr.mxu0 0.0
    %908 = vmatpush1.msra.mxu0 0.0
    %909 = vmatprep.subr.mxu0 0.0
    %910 = vmatpush1.msra.mxu0 0.0
    %911 = vmatprep.subr.mxu0 0.0
    %912 = vmatpush1.msra.mxu0 0.0
    %913 = vmatprep.subr.mxu0 0.0
    %914 = vmatpush1.msra.mxu0 0.0
    %915 = vmatprep.subr.mxu0 0.0
    %916 = vmatpush1.msra.mxu0 0.0
    %917 = vmatprep.subr.mxu0 0.0
    %918 = vmatpush1.msra.mxu0 0.0
    %919 = vmatprep.subr.mxu0 0.0
    %920 = vmatpush1.msra.mxu0 0.0
    %921 = vmatprep.subr.mxu0 0.0
    %922 = vmatpush1.msra.mxu0 0.0
    %923 = vmatprep.subr.mxu0 0.0
    %924 = vmatpush1.msra.mxu0 0.0
    %925 = vmatprep.subr.mxu0 0.0
    %926 = vmatpush1.msra.mxu0 0.0
    %927 = vmatprep.subr.mxu0 0.0
    %928 = vmatpush1.msra.mxu0 0.0
    %929 = vmatprep.subr.mxu0 0.0
    %930 = vmatpush1.msra.mxu0 0.0
    %931 = vmatprep.subr.mxu0 0.0
    %932 = vmatpush1.msra.mxu0 0.0
    %933 = vmatprep.subr.mxu0 0.0
    %934 = vmatpush1.msra.mxu0 0.0
    %935 = vmatprep.subr.mxu0 0.0
    %936 = vmatpush1.msra.mxu0 0.0
    %937 = vmatprep.subr.mxu0 0.0
    %938 = vmatpush1.msra.mxu0 0.0
    %939 = vmatprep.subr.mxu0 0.0
    %940 = vmatpush1.msra.mxu0 0.0
    %941 = vmatprep.subr.mxu0 0.0
    %942 = vmatpush1.msra.mxu0 0.0
    %943 = vmatprep.subr.mxu0 0.0
    %944 = vmatpush1.msra.mxu0 0.0
    %945 = vmatprep.subr.mxu0 0.0
    %946 = vmatpush1.msra.mxu0 0.0
    %947 = vmatprep.subr.mxu0 0.0
    %948 = vmatpush1.msra.mxu0 0.0
    %949 = vmatprep.subr.mxu0 0.0
    %950 = vmatpush1.msra.mxu0 0.0
    %951 = vmatprep.subr.mxu0 0.0
    %952 = vmatpush1.msra.mxu0 0.0
    %953 = vmatprep.subr.mxu0 0.0
    %954 = vmatpush1.msra.mxu0 0.0
    %955 = vmatprep.subr.mxu0 0.0
    %956 = vmatpush1.msra.mxu0 0.0
    %957 = vmatprep.subr.mxu0 0.0
    %958 = vmatpush1.msra.mxu0 0.0
    %959 = vmatprep.subr.mxu0 0.0
    %960 = vmatpush1.msra.mxu0 0.0
    %961 = vmatprep.mubr.f32.mxu0 0.0
    %962 = vmatmul.mubr.f32.gmra.mrb[0].mxu0 %v895
    %v963 = vpop.f32.mrb[0].mxu0
    %v964 = vadd.f32 0.0, %v963
    %v965 = vpop.f32.mrb[0].mxu0
    %966 = vdwg.mxu0
    %v967 = vadd.f32 %v352, %v964
    %v968 = vxor.u32 %v967, 2147483648
    %v969 = vmul.f32 %v968, 1.442695
    %v970 = vpow.pop %v969
    %v971 = vadd.f32 %v970, 1.0
    %v972 = vrcp.pop %v971
    %v973 = vmul.f32 1.0, %v972
    %v974 = vtanh.pop %v967
    %v975 = vmul.f32 %v973, %v885
    %977 = vrot.lane.b32.xlu0 %v974, 64
    %v978 = vpop.permute.xlu0 %977
    %v980 = vmul.f32 %v973, %v978
    %982 = vrot.lane.b32.xlu0 %v980, 32
    %v983 = vpop.permute.xlu0 %982
    %v985 = vadd.f32 %v975, %v983
    %v986 = vtanh.pop %v985
    %988 = vrot.lane.b32.xlu0 %v986, 64
    %v989 = vpop.permute.xlu0 %988
    %v991 = vmul.f32 %v973, %v989
    %993 = vrot.lane.b32.xlu0 %v991, 32
    %v994 = vpop.permute.xlu0 %993
    %v995 = vsel %vm693, %v994, 0
    %997 = vmatprep.subr.mxu0 0.0
    %998 = vmatpush1.msra.mxu0 %v689
    %999 = vmatprep.subr.mxu0 0.0
    %1000 = vmatpush1.msra.mxu0 %v690
    %1001 = vmatprep.subr.mxu0 0.0
    %1002 = vmatpush1.msra.mxu0 %v691
    %1003 = vmatprep.subr.mxu0 0.0
    %1004 = vmatpush1.msra.mxu0 %v692
    %1005 = vmatprep.subr.mxu0 0.0
    %1006 = vmatpush1.msra.mxu0 0.0
    %1007 = vmatprep.subr.mxu0 0.0
    %1008 = vmatpush1.msra.mxu0 0.0
    %1009 = vmatprep.subr.mxu0 0.0
    %1010 = vmatpush1.msra.mxu0 0.0
    %1011 = vmatprep.subr.mxu0 0.0
    %1012 = vmatpush1.msra.mxu0 0.0
    %1013 = vmatprep.subr.mxu0 0.0
    %1014 = vmatpush1.msra.mxu0 0.0
    %1015 = vmatprep.subr.mxu0 0.0
    %1016 = vmatpush1.msra.mxu0 0.0
    %1017 = vmatprep.subr.mxu0 0.0
    %1018 = vmatpush1.msra.mxu0 0.0
    %1019 = vmatprep.subr.mxu0 0.0
    %1020 = vmatpush1.msra.mxu0 0.0
    %1021 = vmatprep.subr.mxu0 0.0
    %1022 = vmatpush1.msra.mxu0 0.0
    %1023 = vmatprep.subr.mxu0 0.0
    %1024 = vmatpush1.msra.mxu0 0.0
    %1025 = vmatprep.subr.mxu0 0.0
    %1026 = vmatpush1.msra.mxu0 0.0
    %1027 = vmatprep.subr.mxu0 0.0
    %1028 = vmatpush1.msra.mxu0 0.0
    %1029 = vmatprep.subr.mxu0 0.0
    %1030 = vmatpush1.msra.mxu0 0.0
    %1031 = vmatprep.subr.mxu0 0.0
    %1032 = vmatpush1.msra.mxu0 0.0
    %1033 = vmatprep.subr.mxu0 0.0
    %1034 = vmatpush1.msra.mxu0 0.0
    %1035 = vmatprep.subr.mxu0 0.0
    %1036 = vmatpush1.msra.mxu0 0.0
    %1037 = vmatprep.subr.mxu0 0.0
    %1038 = vmatpush1.msra.mxu0 0.0
    %1039 = vmatprep.subr.mxu0 0.0
    %1040 = vmatpush1.msra.mxu0 0.0
    %1041 = vmatprep.subr.mxu0 0.0
    %1042 = vmatpush1.msra.mxu0 0.0
    %1043 = vmatprep.subr.mxu0 0.0
    %1044 = vmatpush1.msra.mxu0 0.0
    %1045 = vmatprep.subr.mxu0 0.0
    %1046 = vmatpush1.msra.mxu0 0.0
    %1047 = vmatprep.subr.mxu0 0.0
    %1048 = vmatpush1.msra.mxu0 0.0
    %1049 = vmatprep.subr.mxu0 0.0
    %1050 = vmatpush1.msra.mxu0 0.0
    %1051 = vmatprep.subr.mxu0 0.0
    %1052 = vmatpush1.msra.mxu0 0.0
    %1053 = vmatprep.subr.mxu0 0.0
    %1054 = vmatpush1.msra.mxu0 0.0
    %1055 = vmatprep.subr.mxu0 0.0
    %1056 = vmatpush1.msra.mxu0 0.0
    %1057 = vmatprep.subr.mxu0 0.0
    %1058 = vmatpush1.msra.mxu0 0.0
    %1059 = vmatprep.subr.mxu0 0.0
    %1060 = vmatpush1.msra.mxu0 0.0
    %1061 = vmatprep.mubr.f32.mxu0 0.0
    %1062 = vmatmul.mubr.f32.gmra.mrb[0].mxu0 %v995
    %v1063 = vpop.f32.mrb[0].mxu0
    %v1064 = vadd.f32 0.0, %v1063
    %v1065 = vpop.f32.mrb[0].mxu0
    %1066 = vdwg.mxu0
    %v1067 = vadd.f32 %v357, %v1064
    %v1068 = vxor.u32 %v1067, 2147483648
    %v1069 = vmul.f32 %v1068, 1.442695
    %v1070 = vpow.pop %v1069
    %v1071 = vadd.f32 %v1070, 1.0
    %v1072 = vrcp.pop %v1071
    %v1073 = vmul.f32 1.0, %v1072
    %v1074 = vtanh.pop %v1067
    %v1075 = vmul.f32 %v1073, %v985
    %1077 = vrot.lane.b32.xlu0 %v1074, 64
    %v1078 = vpop.permute.xlu0 %1077
    %v1080 = vmul.f32 %v1073, %v1078
    %1082 = vrot.lane.b32.xlu0 %v1080, 32
    %v1083 = vpop.permute.xlu0 %1082
    %v1085 = vadd.f32 %v1075, %v1083
    %v1086 = vtanh.pop %v1085
    %1088 = vrot.lane.b32.xlu0 %v1086, 64
    %v1089 = vpop.permute.xlu0 %1088
    %v1091 = vmul.f32 %v1073, %v1089
    %1093 = vrot.lane.b32.xlu0 %v1091, 32
    %v1094 = vpop.permute.xlu0 %1093
    %v1095 = vsel %vm693, %v1094, 0
    %1097 = vmatprep.subr.mxu0 0.0
    %1098 = vmatpush1.msra.mxu0 %v689
    %1099 = vmatprep.subr.mxu0 0.0
    %1100 = vmatpush1.msra.mxu0 %v690
    %1101 = vmatprep.subr.mxu0 0.0
    %1102 = vmatpush1.msra.mxu0 %v691
    %1103 = vmatprep.subr.mxu0 0.0
    %1104 = vmatpush1.msra.mxu0 %v692
    %1105 = vmatprep.subr.mxu0 0.0
    %1106 = vmatpush1.msra.mxu0 0.0
    %1107 = vmatprep.subr.mxu0 0.0
    %1108 = vmatpush1.msra.mxu0 0.0
    %1109 = vmatprep.subr.mxu0 0.0
    %1110 = vmatpush1.msra.mxu0 0.0
    %1111 = vmatprep.subr.mxu0 0.0
    %1112 = vmatpush1.msra.mxu0 0.0
    %1113 = vmatprep.subr.mxu0 0.0
    %1114 = vmatpush1.msra.mxu0 0.0
    %1115 = vmatprep.subr.mxu0 0.0
    %1116 = vmatpush1.msra.mxu0 0.0
    %1117 = vmatprep.subr.mxu0 0.0
    %1118 = vmatpush1.msra.mxu0 0.0
    %1119 = vmatprep.subr.mxu0 0.0
    %1120 = vmatpush1.msra.mxu0 0.0
    %1121 = vmatprep.subr.mxu0 0.0
    %1122 = vmatpush1.msra.mxu0 0.0
    %1123 = vmatprep.subr.mxu0 0.0
    %1124 = vmatpush1.msra.mxu0 0.0
    %1125 = vmatprep.subr.mxu0 0.0
    %1126 = vmatpush1.msra.mxu0 0.0
    %1127 = vmatprep.subr.mxu0 0.0
    %1128 = vmatpush1.msra.mxu0 0.0
    %1129 = vmatprep.subr.mxu0 0.0
    %1130 = vmatpush1.msra.mxu0 0.0
    %1131 = vmatprep.subr.mxu0 0.0
    %1132 = vmatpush1.msra.mxu0 0.0
    %1133 = vmatprep.subr.mxu0 0.0
    %1134 = vmatpush1.msra.mxu0 0.0
    %1135 = vmatprep.subr.mxu0 0.0
    %1136 = vmatpush1.msra.mxu0 0.0
    %1137 = vmatprep.subr.mxu0 0.0
    %1138 = vmatpush1.msra.mxu0 0.0
    %1139 = vmatprep.subr.mxu0 0.0
    %1140 = vmatpush1.msra.mxu0 0.0
    %1141 = vmatprep.subr.mxu0 0.0
    %1142 = vmatpush1.msra.mxu0 0.0
    %1143 = vmatprep.subr.mxu0 0.0
    %1144 = vmatpush1.msra.mxu0 0.0
    %1145 = vmatprep.subr.mxu0 0.0
    %1146 = vmatpush1.msra.mxu0 0.0
    %1147 = vmatprep.subr.mxu0 0.0
    %1148 = vmatpush1.msra.mxu0 0.0
    %1149 = vmatprep.subr.mxu0 0.0
    %1150 = vmatpush1.msra.mxu0 0.0
    %1151 = vmatprep.subr.mxu0 0.0
    %1152 = vmatpush1.msra.mxu0 0.0
    %1153 = vmatprep.subr.mxu0 0.0
    %1154 = vmatpush1.msra.mxu0 0.0
    %1155 = vmatprep.subr.mxu0 0.0
    %1156 = vmatpush1.msra.mxu0 0.0
    %1157 = vmatprep.subr.mxu0 0.0
    %1158 = vmatpush1.msra.mxu0 0.0
    %1159 = vmatprep.subr.mxu0 0.0
    %1160 = vmatpush1.msra.mxu0 0.0
    %1161 = vmatprep.mubr.f32.mxu0 0.0
    %1162 = vmatmul.mubr.f32.gmra.mrb[0].mxu0 %v1095
    %v1163 = vpop.f32.mrb[0].mxu0
    %v1164 = vadd.f32 0.0, %v1163
    %v1165 = vpop.f32.mrb[0].mxu0
    %1166 = vdwg.mxu0
    %v1167 = vadd.f32 %v362, %v1164
    %v1168 = vxor.u32 %v1167, 2147483648
    %v1169 = vmul.f32 %v1168, 1.442695
    %v1170 = vpow.pop %v1169
    %v1171 = vadd.f32 %v1170, 1.0
    %v1172 = vrcp.pop %v1171
    %v1173 = vmul.f32 1.0, %v1172
    %v1174 = vtanh.pop %v1167
    %v1175 = vmul.f32 %v1173, %v1085
    %1177 = vrot.lane.b32.xlu0 %v1174, 64
    %v1178 = vpop.permute.xlu0 %1177
    %v1180 = vmul.f32 %v1173, %v1178
    %1182 = vrot.lane.b32.xlu0 %v1180, 32
    %v1183 = vpop.permute.xlu0 %1182
    %v1185 = vadd.f32 %v1175, %v1183
    %v1186 = vtanh.pop %v1185
    %1188 = vrot.lane.b32.xlu0 %v1186, 64
    %v1189 = vpop.permute.xlu0 %1188
    %v1191 = vmul.f32 %v1173, %v1189
    %1193 = vrot.lane.b32.xlu0 %v1191, 32
    %v1194 = vpop.permute.xlu0 %1193
    %v1195 = vsel %vm693, %v1194, 0
    %1197 = vmatprep.subr.mxu0 0.0
    %1198 = vmatpush1.msra.mxu0 %v689
    %1199 = vmatprep.subr.mxu0 0.0
    %1200 = vmatpush1.msra.mxu0 %v690
    %1201 = vmatprep.subr.mxu0 0.0
    %1202 = vmatpush1.msra.mxu0 %v691
    %1203 = vmatprep.subr.mxu0 0.0
    %1204 = vmatpush1.msra.mxu0 %v692
    %1205 = vmatprep.subr.mxu0 0.0
    %1206 = vmatpush1.msra.mxu0 0.0
    %1207 = vmatprep.subr.mxu0 0.0
    %1208 = vmatpush1.msra.mxu0 0.0
    %1209 = vmatprep.subr.mxu0 0.0
    %1210 = vmatpush1.msra.mxu0 0.0
    %1211 = vmatprep.subr.mxu0 0.0
    %1212 = vmatpush1.msra.mxu0 0.0
    %1213 = vmatprep.subr.mxu0 0.0
    %1214 = vmatpush1.msra.mxu0 0.0
    %1215 = vmatprep.subr.mxu0 0.0
    %1216 = vmatpush1.msra.mxu0 0.0
    %1217 = vmatprep.subr.mxu0 0.0
    %1218 = vmatpush1.msra.mxu0 0.0
    %1219 = vmatprep.subr.mxu0 0.0
    %1220 = vmatpush1.msra.mxu0 0.0
    %1221 = vmatprep.subr.mxu0 0.0
    %1222 = vmatpush1.msra.mxu0 0.0
    %1223 = vmatprep.subr.mxu0 0.0
    %1224 = vmatpush1.msra.mxu0 0.0
    %1225 = vmatprep.subr.mxu0 0.0
    %1226 = vmatpush1.msra.mxu0 0.0
    %1227 = vmatprep.subr.mxu0 0.0
    %1228 = vmatpush1.msra.mxu0 0.0
    %1229 = vmatprep.subr.mxu0 0.0
    %1230 = vmatpush1.msra.mxu0 0.0
    %1231 = vmatprep.subr.mxu0 0.0
    %1232 = vmatpush1.msra.mxu0 0.0
    %1233 = vmatprep.subr.mxu0 0.0
    %1234 = vmatpush1.msra.mxu0 0.0
    %1235 = vmatprep.subr.mxu0 0.0
    %1236 = vmatpush1.msra.mxu0 0.0
    %1237 = vmatprep.subr.mxu0 0.0
    %1238 = vmatpush1.msra.mxu0 0.0
    %1239 = vmatprep.subr.mxu0 0.0
    %1240 = vmatpush1.msra.mxu0 0.0
    %1241 = vmatprep.subr.mxu0 0.0
    %1242 = vmatpush1.msra.mxu0 0.0
    %1243 = vmatprep.subr.mxu0 0.0
    %1244 = vmatpush1.msra.mxu0 0.0
    %1245 = vmatprep.subr.mxu0 0.0
    %1246 = vmatpush1.msra.mxu0 0.0
    %1247 = vmatprep.subr.mxu0 0.0
    %1248 = vmatpush1.msra.mxu0 0.0
    %1249 = vmatprep.subr.mxu0 0.0
    %1250 = vmatpush1.msra.mxu0 0.0
    %1251 = vmatprep.subr.mxu0 0.0
    %1252 = vmatpush1.msra.mxu0 0.0
    %1253 = vmatprep.subr.mxu0 0.0
    %1254 = vmatpush1.msra.mxu0 0.0
    %1255 = vmatprep.subr.mxu0 0.0
    %1256 = vmatpush1.msra.mxu0 0.0
    %1257 = vmatprep.subr.mxu0 0.0
    %1258 = vmatpush1.msra.mxu0 0.0
    %1259 = vmatprep.subr.mxu0 0.0
    %1260 = vmatpush1.msra.mxu0 0.0
    %1261 = vmatprep.mubr.f32.mxu0 0.0
    %1262 = vmatmul.mubr.f32.gmra.mrb[0].mxu0 %v1195
    %v1263 = vpop.f32.mrb[0].mxu0
    %v1264 = vadd.f32 0.0, %v1263
    %v1265 = vpop.f32.mrb[0].mxu0
    %1266 = vdwg.mxu0
    %v1267 = vadd.f32 %v367, %v1264
    %v1268 = vxor.u32 %v1267, 2147483648
    %v1269 = vmul.f32 %v1268, 1.442695
    %v1270 = vpow.pop %v1269
    %v1271 = vadd.f32 %v1270, 1.0
    %v1272 = vrcp.pop %v1271
    %v1273 = vmul.f32 1.0, %v1272
    %v1274 = vtanh.pop %v1267
    %v1275 = vmul.f32 %v1273, %v1185
    %1277 = vrot.lane.b32.xlu0 %v1274, 64
    %v1278 = vpop.permute.xlu0 %1277
    %v1280 = vmul.f32 %v1273, %v1278
    %1282 = vrot.lane.b32.xlu0 %v1280, 32
    %v1283 = vpop.permute.xlu0 %1282
    %v1285 = vadd.f32 %v1275, %v1283
    %v1286 = vtanh.pop %v1285
    %1288 = vrot.lane.b32.xlu0 %v1286, 64
    %v1289 = vpop.permute.xlu0 %1288
    %v1291 = vmul.f32 %v1273, %v1289
    %1293 = vrot.lane.b32.xlu0 %v1291, 32
    %v1294 = vpop.permute.xlu0 %1293
    %v1295 = vsel %vm693, %v1294, 0
    %1297 = vmatprep.subr.mxu0 0.0
    %1298 = vmatpush1.msra.mxu0 %v689
    %1299 = vmatprep.subr.mxu0 0.0
    %1300 = vmatpush1.msra.mxu0 %v690
    %1301 = vmatprep.subr.mxu0 0.0
    %1302 = vmatpush1.msra.mxu0 %v691
    %1303 = vmatprep.subr.mxu0 0.0
    %1304 = vmatpush1.msra.mxu0 %v692
    %1305 = vmatprep.subr.mxu0 0.0
    %1306 = vmatpush1.msra.mxu0 0.0
    %1307 = vmatprep.subr.mxu0 0.0
    %1308 = vmatpush1.msra.mxu0 0.0
    %1309 = vmatprep.subr.mxu0 0.0
    %1310 = vmatpush1.msra.mxu0 0.0
    %1311 = vmatprep.subr.mxu0 0.0
    %1312 = vmatpush1.msra.mxu0 0.0
    %1313 = vmatprep.subr.mxu0 0.0
    %1314 = vmatpush1.msra.mxu0 0.0
    %1315 = vmatprep.subr.mxu0 0.0
    %1316 = vmatpush1.msra.mxu0 0.0
    %1317 = vmatprep.subr.mxu0 0.0
    %1318 = vmatpush1.msra.mxu0 0.0
    %1319 = vmatprep.subr.mxu0 0.0
    %1320 = vmatpush1.msra.mxu0 0.0
    %1321 = vmatprep.subr.mxu0 0.0
    %1322 = vmatpush1.msra.mxu0 0.0
    %1323 = vmatprep.subr.mxu0 0.0
    %1324 = vmatpush1.msra.mxu0 0.0
    %1325 = vmatprep.subr.mxu0 0.0
    %1326 = vmatpush1.msra.mxu0 0.0
    %1327 = vmatprep.subr.mxu0 0.0
    %1328 = vmatpush1.msra.mxu0 0.0
    %1329 = vmatprep.subr.mxu0 0.0
    %1330 = vmatpush1.msra.mxu0 0.0
    %1331 = vmatprep.subr.mxu0 0.0
    %1332 = vmatpush1.msra.mxu0 0.0
    %1333 = vmatprep.subr.mxu0 0.0
    %1334 = vmatpush1.msra.mxu0 0.0
    %1335 = vmatprep.subr.mxu0 0.0
    %1336 = vmatpush1.msra.mxu0 0.0
    %1337 = vmatprep.subr.mxu0 0.0
    %1338 = vmatpush1.msra.mxu0 0.0
    %1339 = vmatprep.subr.mxu0 0.0
    %1340 = vmatpush1.msra.mxu0 0.0
    %1341 = vmatprep.subr.mxu0 0.0
    %1342 = vmatpush1.msra.mxu0 0.0
    %1343 = vmatprep.subr.mxu0 0.0
    %1344 = vmatpush1.msra.mxu0 0.0
    %1345 = vmatprep.subr.mxu0 0.0
    %1346 = vmatpush1.msra.mxu0 0.0
    %1347 = vmatprep.subr.mxu0 0.0
    %1348 = vmatpush1.msra.mxu0 0.0
    %1349 = vmatprep.subr.mxu0 0.0
    %1350 = vmatpush1.msra.mxu0 0.0
    %1351 = vmatprep.subr.mxu0 0.0
    %1352 = vmatpush1.msra.mxu0 0.0
    %1353 = vmatprep.subr.mxu0 0.0
    %1354 = vmatpush1.msra.mxu0 0.0
    %1355 = vmatprep.subr.mxu0 0.0
    %1356 = vmatpush1.msra.mxu0 0.0
    %1357 = vmatprep.subr.mxu0 0.0
    %1358 = vmatpush1.msra.mxu0 0.0
    %1359 = vmatprep.subr.mxu0 0.0
    %1360 = vmatpush1.msra.mxu0 0.0
    %1361 = vmatprep.mubr.f32.mxu0 0.0
    %1362 = vmatmul.mubr.f32.gmra.mrb[0].mxu0 %v1295
    %v1363 = vpop.f32.mrb[0].mxu0
    %v1364 = vadd.f32 0.0, %v1363
    %v1365 = vpop.f32.mrb[0].mxu0
    %1366 = vdwg.mxu0
    %v1367 = vadd.f32 %v372, %v1364
    %v1368 = vxor.u32 %v1367, 2147483648
    %v1369 = vmul.f32 %v1368, 1.442695
    %v1370 = vpow.pop %v1369
    %v1371 = vadd.f32 %v1370, 1.0
    %v1372 = vrcp.pop %v1371
    %v1373 = vmul.f32 1.0, %v1372
    %v1374 = vtanh.pop %v1367
    %v1375 = vmul.f32 %v1373, %v1285
    %1377 = vrot.lane.b32.xlu0 %v1374, 64
    %v1378 = vpop.permute.xlu0 %1377
    %v1380 = vmul.f32 %v1373, %v1378
    %1382 = vrot.lane.b32.xlu0 %v1380, 32
    %v1383 = vpop.permute.xlu0 %1382
    %v1385 = vadd.f32 %v1375, %v1383
    %v1386 = vtanh.pop %v1385
    %1388 = vrot.lane.b32.xlu0 %v1386, 64
    %v1389 = vpop.permute.xlu0 %1388
    %v1391 = vmul.f32 %v1373, %v1389
    %1393 = vrot.lane.b32.xlu0 %v1391, 32
    %v1394 = vpop.permute.xlu0 %1393
    %v1395 = vsel %vm693, %v1394, 0
    %1397 = vmatprep.subr.mxu0 0.0
    %1398 = vmatpush1.msra.mxu0 %v689
    %1399 = vmatprep.subr.mxu0 0.0
    %1400 = vmatpush1.msra.mxu0 %v690
    %1401 = vmatprep.subr.mxu0 0.0
    %1402 = vmatpush1.msra.mxu0 %v691
    %1403 = vmatprep.subr.mxu0 0.0
    %1404 = vmatpush1.msra.mxu0 %v692
    %1405 = vmatprep.subr.mxu0 0.0
    %1406 = vmatpush1.msra.mxu0 0.0
    %1407 = vmatprep.subr.mxu0 0.0
    %1408 = vmatpush1.msra.mxu0 0.0
    %1409 = vmatprep.subr.mxu0 0.0
    %1410 = vmatpush1.msra.mxu0 0.0
    %1411 = vmatprep.subr.mxu0 0.0
    %1412 = vmatpush1.msra.mxu0 0.0
    %1413 = vmatprep.subr.mxu0 0.0
    %1414 = vmatpush1.msra.mxu0 0.0
    %1415 = vmatprep.subr.mxu0 0.0
    %1416 = vmatpush1.msra.mxu0 0.0
    %1417 = vmatprep.subr.mxu0 0.0
    %1418 = vmatpush1.msra.mxu0 0.0
    %1419 = vmatprep.subr.mxu0 0.0
    %1420 = vmatpush1.msra.mxu0 0.0
    %1421 = vmatprep.subr.mxu0 0.0
    %1422 = vmatpush1.msra.mxu0 0.0
    %1423 = vmatprep.subr.mxu0 0.0
    %1424 = vmatpush1.msra.mxu0 0.0
    %1425 = vmatprep.subr.mxu0 0.0
    %1426 = vmatpush1.msra.mxu0 0.0
    %1427 = vmatprep.subr.mxu0 0.0
    %1428 = vmatpush1.msra.mxu0 0.0
    %1429 = vmatprep.subr.mxu0 0.0
    %1430 = vmatpush1.msra.mxu0 0.0
    %1431 = vmatprep.subr.mxu0 0.0
    %1432 = vmatpush1.msra.mxu0 0.0
    %1433 = vmatprep.subr.mxu0 0.0
    %1434 = vmatpush1.msra.mxu0 0.0
    %1435 = vmatprep.subr.mxu0 0.0
    %1436 = vmatpush1.msra.mxu0 0.0
    %1437 = vmatprep.subr.mxu0 0.0
    %1438 = vmatpush1.msra.mxu0 0.0
    %1439 = vmatprep.subr.mxu0 0.0
    %1440 = vmatpush1.msra.mxu0 0.0
    %1441 = vmatprep.subr.mxu0 0.0
    %1442 = vmatpush1.msra.mxu0 0.0
    %1443 = vmatprep.subr.mxu0 0.0
    %1444 = vmatpush1.msra.mxu0 0.0
    %1445 = vmatprep.subr.mxu0 0.0
    %1446 = vmatpush1.msra.mxu0 0.0
    %1447 = vmatprep.subr.mxu0 0.0
    %1448 = vmatpush1.msra.mxu0 0.0
    %1449 = vmatprep.subr.mxu0 0.0
    %1450 = vmatpush1.msra.mxu0 0.0
    %1451 = vmatprep.subr.mxu0 0.0
    %1452 = vmatpush1.msra.mxu0 0.0
    %1453 = vmatprep.subr.mxu0 0.0
    %1454 = vmatpush1.msra.mxu0 0.0
    %1455 = vmatprep.subr.mxu0 0.0
    %1456 = vmatpush1.msra.mxu0 0.0
    %1457 = vmatprep.subr.mxu0 0.0
    %1458 = vmatpush1.msra.mxu0 0.0
    %1459 = vmatprep.subr.mxu0 0.0
    %1460 = vmatpush1.msra.mxu0 0.0
    %1461 = vmatprep.mubr.f32.mxu0 0.0
    %1462 = vmatmul.mubr.f32.gmra.mrb[0].mxu0 %v1395
    %v1463 = vpop.f32.mrb[0].mxu0
    %v1464 = vadd.f32 0.0, %v1463
    %v1465 = vpop.f32.mrb[0].mxu0
    %1466 = vdwg.mxu0
    %v1467 = vadd.f32 %v377, %v1464
    %v1468 = vxor.u32 %v1467, 2147483648
    %v1469 = vmul.f32 %v1468, 1.442695
    %v1470 = vpow.pop %v1469
    %v1471 = vadd.f32 %v1470, 1.0
    %v1472 = vrcp.pop %v1471
    %v1473 = vmul.f32 1.0, %v1472
    %v1474 = vtanh.pop %v1467
    %v1475 = vmul.f32 %v1473, %v1385
    %1477 = vrot.lane.b32.xlu0 %v1474, 64
    %v1478 = vpop.permute.xlu0 %1477
    %v1480 = vmul.f32 %v1473, %v1478
    %1482 = vrot.lane.b32.xlu0 %v1480, 32
    %v1483 = vpop.permute.xlu0 %1482
    %v1485 = vadd.f32 %v1475, %v1483
    %v1486 = vtanh.pop %v1485
    %1488 = vrot.lane.b32.xlu0 %v1486, 64
    %v1489 = vpop.permute.xlu0 %1488
    %v1491 = vmul.f32 %v1473, %v1489
    %1492 = vst.msk [vmem:[#allocation2] sm:$0xff] %vm437, 0.0
    %v1493 = vld [vmem:[%s8] sm:$0xff]
    %v1494 = vld [vmem:[%s8 + $0x8] sm:$0xff]
    %v1495 = vld [vmem:[%s8 + $0x10] sm:$0xff]
    %v1496 = vld [vmem:[%s8 + $0x18] sm:$0xff]
    %v1497 = vld [vmem:[%s10] sm:$0xff]
    %v1498 = vld [vmem:[%s10 + $0x8] sm:$0xff]
    %v1499 = vld [vmem:[%s10 + $0x10] sm:$0xff]
    %v1500 = vld [vmem:[%s10 + $0x18] sm:$0xff]
    %v1501 = vld [vmem:[%s11] sm:$0x1]
    %1503 = vrot.lane.b32.xlu0 %v1491, 32
    %v1504 = vpop.permute.xlu0 %1503
    %v1505 = vsel %vm693, %v1504, 0
    %1507 = vmatprep.subr.mxu0 0.0
    %1508 = vmatpush1.msra.mxu0 %v1493
    %1509 = vmatprep.subr.mxu0 0.0
    %1510 = vmatpush1.msra.mxu0 %v1494
    %1511 = vmatprep.subr.mxu0 0.0
    %1512 = vmatpush1.msra.mxu0 %v1495
    %1513 = vmatprep.subr.mxu0 0.0
    %1514 = vmatpush1.msra.mxu0 %v1496
    %1515 = vmatprep.subr.mxu0 0.0
    %1516 = vmatpush1.msra.mxu0 0.0
    %1517 = vmatprep.subr.mxu0 0.0
    %1518 = vmatpush1.msra.mxu0 0.0
    %1519 = vmatprep.subr.mxu0 0.0
    %1520 = vmatpush1.msra.mxu0 0.0
    %1521 = vmatprep.subr.mxu0 0.0
    %1522 = vmatpush1.msra.mxu0 0.0
    %1523 = vmatprep.subr.mxu0 0.0
    %1524 = vmatpush1.msra.mxu0 0.0
    %1525 = vmatprep.subr.mxu0 0.0
    %1526 = vmatpush1.msra.mxu0 0.0
    %1527 = vmatprep.subr.mxu0 0.0
    %1528 = vmatpush1.msra.mxu0 0.0
    %1529 = vmatprep.subr.mxu0 0.0
    %1530 = vmatpush1.msra.mxu0 0.0
    %1531 = vmatprep.subr.mxu0 0.0
    %1532 = vmatpush1.msra.mxu0 0.0
    %1533 = vmatprep.subr.mxu0 0.0
    %1534 = vmatpush1.msra.mxu0 0.0
    %1535 = vmatprep.subr.mxu0 0.0
    %1536 = vmatpush1.msra.mxu0 0.0
    %1537 = vmatprep.subr.mxu0 0.0
    %1538 = vmatpush1.msra.mxu0 0.0
    %1539 = vmatprep.subr.mxu0 0.0
    %1540 = vmatpush1.msra.mxu0 0.0
    %1541 = vmatprep.subr.mxu0 0.0
    %1542 = vmatpush1.msra.mxu0 0.0
    %1543 = vmatprep.subr.mxu0 0.0
    %1544 = vmatpush1.msra.mxu0 0.0
    %1545 = vmatprep.subr.mxu0 0.0
    %1546 = vmatpush1.msra.mxu0 0.0
    %1547 = vmatprep.subr.mxu0 0.0
    %1548 = vmatpush1.msra.mxu0 0.0
    %1549 = vmatprep.subr.mxu0 0.0
    %1550 = vmatpush1.msra.mxu0 0.0
    %1551 = vmatprep.subr.mxu0 0.0
    %1552 = vmatpush1.msra.mxu0 0.0
    %1553 = vmatprep.subr.mxu0 0.0
    %1554 = vmatpush1.msra.mxu0 0.0
    %1555 = vmatprep.subr.mxu0 0.0
    %1556 = vmatpush1.msra.mxu0 0.0
    %1557 = vmatprep.subr.mxu0 0.0
    %1558 = vmatpush1.msra.mxu0 0.0
    %1559 = vmatprep.subr.mxu0 0.0
    %1560 = vmatpush1.msra.mxu0 0.0
    %1561 = vmatprep.subr.mxu0 0.0
    %1562 = vmatpush1.msra.mxu0 0.0
    %1563 = vmatprep.subr.mxu0 0.0
    %1564 = vmatpush1.msra.mxu0 0.0
    %1565 = vmatprep.subr.mxu0 0.0
    %1566 = vmatpush1.msra.mxu0 0.0
    %1567 = vmatprep.subr.mxu0 0.0
    %1568 = vmatpush1.msra.mxu0 0.0
    %1569 = vmatprep.subr.mxu0 0.0
    %1570 = vmatpush1.msra.mxu0 0.0
    %1571 = vmatprep.mubr.f32.mxu0 0.0
    %1572 = vmatmul.mubr.f32.gmra.mrb[0].mxu0 %v1505
    %v1573 = vpop.f32.mrb[0].mxu0
    %v1574 = vadd.f32 0.0, %v1573
    %v1575 = vpop.f32.mrb[0].mxu0
    %1576 = vdwg.mxu0
    %v1577 = vadd.f32 %v656, %v1574
    %v1578 = vxor.u32 %v1577, 2147483648
    %v1579 = vmul.f32 %v1578, 1.442695
    %v1580 = vpow.pop %v1579
    %v1581 = vadd.f32 %v1580, 1.0
    %v1582 = vrcp.pop %v1581
    %v1583 = vmul.f32 1.0, %v1582
    %v1584 = vtanh.pop %v1577
    %v1585 = vmul.f32 %v1583, %v1485
    %1587 = vrot.lane.b32.xlu0 %v1584, 64
    %v1588 = vpop.permute.xlu0 %1587
    %v1590 = vmul.f32 %v1583, %v1588
    %1592 = vrot.lane.b32.xlu0 %v1590, 32
    %v1593 = vpop.permute.xlu0 %1592
    %v1595 = vadd.f32 %v1585, %v1593
    %v1596 = vtanh.pop %v1595
    %1598 = vrot.lane.b32.xlu0 %v1596, 64
    %v1599 = vpop.permute.xlu0 %1598
    %v1601 = vmul.f32 %v1583, %v1599
    %v1603 = vlaneseq
    %v1604 = vshrl.u32 %v1603, 7
    %v1605 = vsub.s32 0, %v1604
    %v1606 = vrot.slane %v1501, %v1605
    %1609 = vrot.lane.b32.xlu0 %v1601, 32
    %v1610 = vpop.permute.xlu0 %1609
    %v1611 = vsel %vm693, %v1610, 0
    %1613 = vmatprep.subr.mxu0 0.0
    %1614 = vmatpush1.msra.mxu0 %v1497
    %1615 = vmatprep.subr.mxu0 0.0
    %1616 = vmatpush1.msra.mxu0 %v1498
    %1617 = vmatprep.subr.mxu0 0.0
    %1618 = vmatpush1.msra.mxu0 %v1499
    %1619 = vmatprep.subr.mxu0 0.0
    %1620 = vmatpush1.msra.mxu0 %v1500
    %1621 = vmatprep.subr.mxu0 0.0
    %1622 = vmatpush1.msra.mxu0 0.0
    %1623 = vmatprep.subr.mxu0 0.0
    %1624 = vmatpush1.msra.mxu0 0.0
    %1625 = vmatprep.subr.mxu0 0.0
    %1626 = vmatpush1.msra.mxu0 0.0
    %1627 = vmatprep.subr.mxu0 0.0
    %1628 = vmatpush1.msra.mxu0 0.0
    %1629 = vmatprep.subr.mxu0 0.0
    %1630 = vmatpush1.msra.mxu0 0.0
    %1631 = vmatprep.subr.mxu0 0.0
    %1632 = vmatpush1.msra.mxu0 0.0
    %1633 = vmatprep.subr.mxu0 0.0
    %1634 = vmatpush1.msra.mxu0 0.0
    %1635 = vmatprep.subr.mxu0 0.0
    %1636 = vmatpush1.msra.mxu0 0.0
    %1637 = vmatprep.subr.mxu0 0.0
    %1638 = vmatpush1.msra.mxu0 0.0
    %1639 = vmatprep.subr.mxu0 0.0
    %1640 = vmatpush1.msra.mxu0 0.0
    %1641 = vmatprep.subr.mxu0 0.0
    %1642 = vmatpush1.msra.mxu0 0.0
    %1643 = vmatprep.subr.mxu0 0.0
    %1644 = vmatpush1.msra.mxu0 0.0
    %1645 = vmatprep.subr.mxu0 0.0
    %1646 = vmatpush1.msra.mxu0 0.0
    %1647 = vmatprep.subr.mxu0 0.0
    %1648 = vmatpush1.msra.mxu0 0.0
    %1649 = vmatprep.subr.mxu0 0.0
    %1650 = vmatpush1.msra.mxu0 0.0
    %1651 = vmatprep.subr.mxu0 0.0
    %1652 = vmatpush1.msra.mxu0 0.0
    %1653 = vmatprep.subr.mxu0 0.0
    %1654 = vmatpush1.msra.mxu0 0.0
    %1655 = vmatprep.subr.mxu0 0.0
    %1656 = vmatpush1.msra.mxu0 0.0
    %1657 = vmatprep.subr.mxu0 0.0
    %1658 = vmatpush1.msra.mxu0 0.0
    %1659 = vmatprep.subr.mxu0 0.0
    %1660 = vmatpush1.msra.mxu0 0.0
    %1661 = vmatprep.subr.mxu0 0.0
    %1662 = vmatpush1.msra.mxu0 0.0
    %1663 = vmatprep.subr.mxu0 0.0
    %1664 = vmatpush1.msra.mxu0 0.0
    %1665 = vmatprep.subr.mxu0 0.0
    %1666 = vmatpush1.msra.mxu0 0.0
    %1667 = vmatprep.subr.mxu0 0.0
    %1668 = vmatpush1.msra.mxu0 0.0
    %1669 = vmatprep.subr.mxu0 0.0
    %1670 = vmatpush1.msra.mxu0 0.0
    %1671 = vmatprep.subr.mxu0 0.0
    %1672 = vmatpush1.msra.mxu0 0.0
    %1673 = vmatprep.subr.mxu0 0.0
    %1674 = vmatpush1.msra.mxu0 0.0
    %1675 = vmatprep.subr.mxu0 0.0
    %1676 = vmatpush1.msra.mxu0 0.0
    %1677 = vmatprep.mubr.f32.mxu0 0.0
    %1678 = vmatmul.mubr.f32.gmra.mrb[0].mxu0 %v1611
    %v1679 = vpop.f32.mrb[0].mxu0
    %v1680 = vadd.f32 %v1606, %v1679
    %v1681 = vpop.f32.mrb[0].mxu0
    %1682 = vdwg.mxu0
    %s1683 = scalar_lea.vmem [#allocation2], 8
    %1684 = vst.msk [vmem:[%s1683] sm:$0xff] %vm437, %v1680
    %1685 = vmatprep.subr.mxu0 0.0
    %1686 = vmatpush1.msra.mxu0 %v1493
    %1687 = vmatprep.subr.mxu0 0.0
    %1688 = vmatpush1.msra.mxu0 %v1494
    %1689 = vmatprep.subr.mxu0 0.0
    %1690 = vmatpush1.msra.mxu0 %v1495
    %1691 = vmatprep.subr.mxu0 0.0
    %1692 = vmatpush1.msra.mxu0 %v1496
    %1693 = vmatprep.subr.mxu0 0.0
    %1694 = vmatpush1.msra.mxu0 0.0
    %1695 = vmatprep.subr.mxu0 0.0
    %1696 = vmatpush1.msra.mxu0 0.0
    %1697 = vmatprep.subr.mxu0 0.0
    %1698 = vmatpush1.msra.mxu0 0.0
    %1699 = vmatprep.subr.mxu0 0.0
    %1700 = vmatpush1.msra.mxu0 0.0
    %1701 = vmatprep.subr.mxu0 0.0
    %1702 = vmatpush1.msra.mxu0 0.0
    %1703 = vmatprep.subr.mxu0 0.0
    %1704 = vmatpush1.msra.mxu0 0.0
    %1705 = vmatprep.subr.mxu0 0.0
    %1706 = vmatpush1.msra.mxu0 0.0
    %1707 = vmatprep.subr.mxu0 0.0
    %1708 = vmatpush1.msra.mxu0 0.0
    %1709 = vmatprep.subr.mxu0 0.0
    %1710 = vmatpush1.msra.mxu0 0.0
    %1711 = vmatprep.subr.mxu0 0.0
    %1712 = vmatpush1.msra.mxu0 0.0
    %1713 = vmatprep.subr.mxu0 0.0
    %1714 = vmatpush1.msra.mxu0 0.0
    %1715 = vmatprep.subr.mxu0 0.0
    %1716 = vmatpush1.msra.mxu0 0.0
    %1717 = vmatprep.subr.mxu0 0.0
    %1718 = vmatpush1.msra.mxu0 0.0
    %1719 = vmatprep.subr.mxu0 0.0
    %1720 = vmatpush1.msra.mxu0 0.0
    %1721 = vmatprep.subr.mxu0 0.0
    %1722 = vmatpush1.msra.mxu0 0.0
    %1723 = vmatprep.subr.mxu0 0.0
    %1724 = vmatpush1.msra.mxu0 0.0
    %1725 = vmatprep.subr.mxu0 0.0
    %1726 = vmatpush1.msra.mxu0 0.0
    %1727 = vmatprep.subr.mxu0 0.0
    %1728 = vmatpush1.msra.mxu0 0.0
    %1729 = vmatprep.subr.mxu0 0.0
    %1730 = vmatpush1.msra.mxu0 0.0
    %1731 = vmatprep.subr.mxu0 0.0
    %1732 = vmatpush1.msra.mxu0 0.0
    %1733 = vmatprep.subr.mxu0 0.0
    %1734 = vmatpush1.msra.mxu0 0.0
    %1735 = vmatprep.subr.mxu0 0.0
    %1736 = vmatpush1.msra.mxu0 0.0
    %1737 = vmatprep.subr.mxu0 0.0
    %1738 = vmatpush1.msra.mxu0 0.0
    %1739 = vmatprep.subr.mxu0 0.0
    %1740 = vmatpush1.msra.mxu0 0.0
    %1741 = vmatprep.subr.mxu0 0.0
    %1742 = vmatpush1.msra.mxu0 0.0
    %1743 = vmatprep.subr.mxu0 0.0
    %1744 = vmatpush1.msra.mxu0 0.0
    %1745 = vmatprep.subr.mxu0 0.0
    %1746 = vmatpush1.msra.mxu0 0.0
    %1747 = vmatprep.subr.mxu0 0.0
    %1748 = vmatpush1.msra.mxu0 0.0
    %1749 = vmatprep.mubr.f32.mxu0 0.0
    %1750 = vmatmul.mubr.f32.gmra.mrb[0].mxu0 %v1611
    %v1751 = vpop.f32.mrb[0].mxu0
    %v1752 = vadd.f32 0.0, %v1751
    %v1753 = vpop.f32.mrb[0].mxu0
    %1754 = vdwg.mxu0
    %v1755 = vadd.f32 %v661, %v1752
    %v1756 = vxor.u32 %v1755, 2147483648
    %v1757 = vmul.f32 %v1756, 1.442695
    %v1758 = vpow.pop %v1757
    %v1759 = vadd.f32 %v1758, 1.0
    %v1760 = vrcp.pop %v1759
    %v1761 = vmul.f32 1.0, %v1760
    %v1762 = vtanh.pop %v1755
    %v1763 = vmul.f32 %v1761, %v1595
    %1765 = vrot.lane.b32.xlu0 %v1762, 64
    %v1766 = vpop.permute.xlu0 %1765
    %v1768 = vmul.f32 %v1761, %v1766
    %1770 = vrot.lane.b32.xlu0 %v1768, 32
    %v1771 = vpop.permute.xlu0 %1770
    %v1773 = vadd.f32 %v1763, %v1771
    %v1774 = vtanh.pop %v1773
    %1776 = vrot.lane.b32.xlu0 %v1774, 64
    %v1777 = vpop.permute.xlu0 %1776
    %v1779 = vmul.f32 %v1761, %v1777
    %1781 = vrot.lane.b32.xlu0 %v1779, 32
    %v1782 = vpop.permute.xlu0 %1781
    %v1783 = vsel %vm693, %v1782, 0
    %1785 = vmatprep.subr.mxu0 0.0
    %1786 = vmatpush1.msra.mxu0 %v1497
    %1787 = vmatprep.subr.mxu0 0.0
    %1788 = vmatpush1.msra.mxu0 %v1498
    %1789 = vmatprep.subr.mxu0 0.0
    %1790 = vmatpush1.msra.mxu0 %v1499
    %1791 = vmatprep.subr.mxu0 0.0
    %1792 = vmatpush1.msra.mxu0 %v1500
    %1793 = vmatprep.subr.mxu0 0.0
    %1794 = vmatpush1.msra.mxu0 0.0
    %1795 = vmatprep.subr.mxu0 0.0
    %1796 = vmatpush1.msra.mxu0 0.0
    %1797 = vmatprep.subr.mxu0 0.0
    %1798 = vmatpush1.msra.mxu0 0.0
    %1799 = vmatprep.subr.mxu0 0.0
    %1800 = vmatpush1.msra.mxu0 0.0
    %1801 = vmatprep.subr.mxu0 0.0
    %1802 = vmatpush1.msra.mxu0 0.0
    %1803 = vmatprep.subr.mxu0 0.0
    %1804 = vmatpush1.msra.mxu0 0.0
    %1805 = vmatprep.subr.mxu0 0.0
    %1806 = vmatpush1.msra.mxu0 0.0
    %1807 = vmatprep.subr.mxu0 0.0
    %1808 = vmatpush1.msra.mxu0 0.0
    %1809 = vmatprep.subr.mxu0 0.0
    %1810 = vmatpush1.msra.mxu0 0.0
    %1811 = vmatprep.subr.mxu0 0.0
    %1812 = vmatpush1.msra.mxu0 0.0
    %1813 = vmatprep.subr.mxu0 0.0
    %1814 = vmatpush1.msra.mxu0 0.0
    %1815 = vmatprep.subr.mxu0 0.0
    %1816 = vmatpush1.msra.mxu0 0.0
    %1817 = vmatprep.subr.mxu0 0.0
    %1818 = vmatpush1.msra.mxu0 0.0
    %1819 = vmatprep.subr.mxu0 0.0
    %1820 = vmatpush1.msra.mxu0 0.0
    %1821 = vmatprep.subr.mxu0 0.0
    %1822 = vmatpush1.msra.mxu0 0.0
    %1823 = vmatprep.subr.mxu0 0.0
    %1824 = vmatpush1.msra.mxu0 0.0
    %1825 = vmatprep.subr.mxu0 0.0
    %1826 = vmatpush1.msra.mxu0 0.0
    %1827 = vmatprep.subr.mxu0 0.0
    %1828 = vmatpush1.msra.mxu0 0.0
    %1829 = vmatprep.subr.mxu0 0.0
    %1830 = vmatpush1.msra.mxu0 0.0
    %1831 = vmatprep.subr.mxu0 0.0
    %1832 = vmatpush1.msra.mxu0 0.0
    %1833 = vmatprep.subr.mxu0 0.0
    %1834 = vmatpush1.msra.mxu0 0.0
    %1835 = vmatprep.subr.mxu0 0.0
    %1836 = vmatpush1.msra.mxu0 0.0
    %1837 = vmatprep.subr.mxu0 0.0
    %1838 = vmatpush1.msra.mxu0 0.0
    %1839 = vmatprep.subr.mxu0 0.0
    %1840 = vmatpush1.msra.mxu0 0.0
    %1841 = vmatprep.subr.mxu0 0.0
    %1842 = vmatpush1.msra.mxu0 0.0
    %1843 = vmatprep.subr.mxu0 0.0
    %1844 = vmatpush1.msra.mxu0 0.0
    %1845 = vmatprep.subr.mxu0 0.0
    %1846 = vmatpush1.msra.mxu0 0.0
    %1847 = vmatprep.subr.mxu0 0.0
    %1848 = vmatpush1.msra.mxu0 0.0
    %1849 = vmatprep.mubr.f32.mxu0 0.0
    %1850 = vmatmul.mubr.f32.gmra.mrb[0].mxu0 %v1783
    %v1851 = vpop.f32.mrb[0].mxu0
    %v1852 = vadd.f32 %v1606, %v1851
    %v1853 = vpop.f32.mrb[0].mxu0
    %1854 = vdwg.mxu0
    %s1855 = scalar_lea.vmem [#allocation2], 16
    %1856 = vst.msk [vmem:[%s1855] sm:$0xff] %vm437, %v1852
    %1857 = vmatprep.subr.mxu0 0.0
    %1858 = vmatpush1.msra.mxu0 %v1493
    %1859 = vmatprep.subr.mxu0 0.0
    %1860 = vmatpush1.msra.mxu0 %v1494
    %1861 = vmatprep.subr.mxu0 0.0
    %1862 = vmatpush1.msra.mxu0 %v1495
    %1863 = vmatprep.subr.mxu0 0.0
    %1864 = vmatpush1.msra.mxu0 %v1496
    %1865 = vmatprep.subr.mxu0 0.0
    %1866 = vmatpush1.msra.mxu0 0.0
    %1867 = vmatprep.subr.mxu0 0.0
    %1868 = vmatpush1.msra.mxu0 0.0
    %1869 = vmatprep.subr.mxu0 0.0
    %1870 = vmatpush1.msra.mxu0 0.0
    %1871 = vmatprep.subr.mxu0 0.0
    %1872 = vmatpush1.msra.mxu0 0.0
    %1873 = vmatprep.subr.mxu0 0.0
    %1874 = vmatpush1.msra.mxu0 0.0
    %1875 = vmatprep.subr.mxu0 0.0
    %1876 = vmatpush1.msra.mxu0 0.0
    %1877 = vmatprep.subr.mxu0 0.0
    %1878 = vmatpush1.msra.mxu0 0.0
    %1879 = vmatprep.subr.mxu0 0.0
    %1880 = vmatpush1.msra.mxu0 0.0
    %1881 = vmatprep.subr.mxu0 0.0
    %1882 = vmatpush1.msra.mxu0 0.0
    %1883 = vmatprep.subr.mxu0 0.0
    %1884 = vmatpush1.msra.mxu0 0.0
    %1885 = vmatprep.subr.mxu0 0.0
    %1886 = vmatpush1.msra.mxu0 0.0
    %1887 = vmatprep.subr.mxu0 0.0
    %1888 = vmatpush1.msra.mxu0 0.0
    %1889 = vmatprep.subr.mxu0 0.0
    %1890 = vmatpush1.msra.mxu0 0.0
    %1891 = vmatprep.subr.mxu0 0.0
    %1892 = vmatpush1.msra.mxu0 0.0
    %1893 = vmatprep.subr.mxu0 0.0
    %1894 = vmatpush1.msra.mxu0 0.0
    %1895 = vmatprep.subr.mxu0 0.0
    %1896 = vmatpush1.msra.mxu0 0.0
    %1897 = vmatprep.subr.mxu0 0.0
    %1898 = vmatpush1.msra.mxu0 0.0
    %1899 = vmatprep.subr.mxu0 0.0
    %1900 = vmatpush1.msra.mxu0 0.0
    %1901 = vmatprep.subr.mxu0 0.0
    %1902 = vmatpush1.msra.mxu0 0.0
    %1903 = vmatprep.subr.mxu0 0.0
    %1904 = vmatpush1.msra.mxu0 0.0
    %1905 = vmatprep.subr.mxu0 0.0
    %1906 = vmatpush1.msra.mxu0 0.0
    %1907 = vmatprep.subr.mxu0 0.0
    %1908 = vmatpush1.msra.mxu0 0.0
    %1909 = vmatprep.subr.mxu0 0.0
    %1910 = vmatpush1.msra.mxu0 0.0
    %1911 = vmatprep.subr.mxu0 0.0
    %1912 = vmatpush1.msra.mxu0 0.0
    %1913 = vmatprep.subr.mxu0 0.0
    %1914 = vmatpush1.msra.mxu0 0.0
    %1915 = vmatprep.subr.mxu0 0.0
    %1916 = vmatpush1.msra.mxu0 0.0
    %1917 = vmatprep.subr.mxu0 0.0
    %1918 = vmatpush1.msra.mxu0 0.0
    %1919 = vmatprep.subr.mxu0 0.0
    %1920 = vmatpush1.msra.mxu0 0.0
    %1921 = vmatprep.mubr.f32.mxu0 0.0
    %1922 = vmatmul.mubr.f32.gmra.mrb[0].mxu0 %v1783
    %v1923 = vpop.f32.mrb[0].mxu0
    %v1924 = vadd.f32 0.0, %v1923
    %v1925 = vpop.f32.mrb[0].mxu0
    %1926 = vdwg.mxu0
    %v1927 = vadd.f32 %v666, %v1924
    %v1928 = vxor.u32 %v1927, 2147483648
    %v1929 = vmul.f32 %v1928, 1.442695
    %v1930 = vpow.pop %v1929
    %v1931 = vadd.f32 %v1930, 1.0
    %v1932 = vrcp.pop %v1931
    %v1933 = vmul.f32 1.0, %v1932
    %v1934 = vtanh.pop %v1927
    %v1935 = vmul.f32 %v1933, %v1773
    %1937 = vrot.lane.b32.xlu0 %v1934, 64
    %v1938 = vpop.permute.xlu0 %1937
    %v1940 = vmul.f32 %v1933, %v1938
    %1942 = vrot.lane.b32.xlu0 %v1940, 32
    %v1943 = vpop.permute.xlu0 %1942
    %v1945 = vadd.f32 %v1935, %v1943
    %v1946 = vtanh.pop %v1945
    %1948 = vrot.lane.b32.xlu0 %v1946, 64
    %v1949 = vpop.permute.xlu0 %1948
    %v1951 = vmul.f32 %v1933, %v1949
    %1953 = vrot.lane.b32.xlu0 %v1951, 32
    %v1954 = vpop.permute.xlu0 %1953
    %v1955 = vsel %vm693, %v1954, 0
    %1957 = vmatprep.subr.mxu0 0.0
    %1958 = vmatpush1.msra.mxu0 %v1497
    %1959 = vmatprep.subr.mxu0 0.0
    %1960 = vmatpush1.msra.mxu0 %v1498
    %1961 = vmatprep.subr.mxu0 0.0
    %1962 = vmatpush1.msra.mxu0 %v1499
    %1963 = vmatprep.subr.mxu0 0.0
    %1964 = vmatpush1.msra.mxu0 %v1500
    %1965 = vmatprep.subr.mxu0 0.0
    %1966 = vmatpush1.msra.mxu0 0.0
    %1967 = vmatprep.subr.mxu0 0.0
    %1968 = vmatpush1.msra.mxu0 0.0
    %1969 = vmatprep.subr.mxu0 0.0
    %1970 = vmatpush1.msra.mxu0 0.0
    %1971 = vmatprep.subr.mxu0 0.0
    %1972 = vmatpush1.msra.mxu0 0.0
    %1973 = vmatprep.subr.mxu0 0.0
    %1974 = vmatpush1.msra.mxu0 0.0
    %1975 = vmatprep.subr.mxu0 0.0
    %1976 = vmatpush1.msra.mxu0 0.0
    %1977 = vmatprep.subr.mxu0 0.0
    %1978 = vmatpush1.msra.mxu0 0.0
    %1979 = vmatprep.subr.mxu0 0.0
    %1980 = vmatpush1.msra.mxu0 0.0
    %1981 = vmatprep.subr.mxu0 0.0
    %1982 = vmatpush1.msra.mxu0 0.0
    %1983 = vmatprep.subr.mxu0 0.0
    %1984 = vmatpush1.msra.mxu0 0.0
    %1985 = vmatprep.subr.mxu0 0.0
    %1986 = vmatpush1.msra.mxu0 0.0
    %1987 = vmatprep.subr.mxu0 0.0
    %1988 = vmatpush1.msra.mxu0 0.0
    %1989 = vmatprep.subr.mxu0 0.0
    %1990 = vmatpush1.msra.mxu0 0.0
    %1991 = vmatprep.subr.mxu0 0.0
    %1992 = vmatpush1.msra.mxu0 0.0
    %1993 = vmatprep.subr.mxu0 0.0
    %1994 = vmatpush1.msra.mxu0 0.0
    %1995 = vmatprep.subr.mxu0 0.0
    %1996 = vmatpush1.msra.mxu0 0.0
    %1997 = vmatprep.subr.mxu0 0.0
    %1998 = vmatpush1.msra.mxu0 0.0
    %1999 = vmatprep.subr.mxu0 0.0
    %2000 = vmatpush1.msra.mxu0 0.0
    %2001 = vmatprep.subr.mxu0 0.0
    %2002 = vmatpush1.msra.mxu0 0.0
    %2003 = vmatprep.subr.mxu0 0.0
    %2004 = vmatpush1.msra.mxu0 0.0
    %2005 = vmatprep.subr.mxu0 0.0
    %2006 = vmatpush1.msra.mxu0 0.0
    %2007 = vmatprep.subr.mxu0 0.0
    %2008 = vmatpush1.msra.mxu0 0.0
    %2009 = vmatprep.subr.mxu0 0.0
    %2010 = vmatpush1.msra.mxu0 0.0
    %2011 = vmatprep.subr.mxu0 0.0
    %2012 = vmatpush1.msra.mxu0 0.0
    %2013 = vmatprep.subr.mxu0 0.0
    %2014 = vmatpush1.msra.mxu0 0.0
    %2015 = vmatprep.subr.mxu0 0.0
    %2016 = vmatpush1.msra.mxu0 0.0
    %2017 = vmatprep.subr.mxu0 0.0
    %2018 = vmatpush1.msra.mxu0 0.0
    %2019 = vmatprep.subr.mxu0 0.0
    %2020 = vmatpush1.msra.mxu0 0.0
    %2021 = vmatprep.mubr.f32.mxu0 0.0
    %2022 = vmatmul.mubr.f32.gmra.mrb[0].mxu0 %v1955
    %v2023 = vpop.f32.mrb[0].mxu0
    %v2024 = vadd.f32 %v1606, %v2023
    %v2025 = vpop.f32.mrb[0].mxu0
    %2026 = vdwg.mxu0
    %s2027 = scalar_lea.vmem [#allocation2], 24
    %2028 = vst.msk [vmem:[%s2027] sm:$0xff] %vm437, %v2024
    %2029 = vmatprep.subr.mxu0 0.0
    %2030 = vmatpush1.msra.mxu0 %v1493
    %2031 = vmatprep.subr.mxu0 0.0
    %2032 = vmatpush1.msra.mxu0 %v1494
    %2033 = vmatprep.subr.mxu0 0.0
    %2034 = vmatpush1.msra.mxu0 %v1495
    %2035 = vmatprep.subr.mxu0 0.0
    %2036 = vmatpush1.msra.mxu0 %v1496
    %2037 = vmatprep.subr.mxu0 0.0
    %2038 = vmatpush1.msra.mxu0 0.0
    %2039 = vmatprep.subr.mxu0 0.0
    %2040 = vmatpush1.msra.mxu0 0.0
    %2041 = vmatprep.subr.mxu0 0.0
    %2042 = vmatpush1.msra.mxu0 0.0
    %2043 = vmatprep.subr.mxu0 0.0
    %2044 = vmatpush1.msra.mxu0 0.0
    %2045 = vmatprep.subr.mxu0 0.0
    %2046 = vmatpush1.msra.mxu0 0.0
    %2047 = vmatprep.subr.mxu0 0.0
    %2048 = vmatpush1.msra.mxu0 0.0
    %2049 = vmatprep.subr.mxu0 0.0
    %2050 = vmatpush1.msra.mxu0 0.0
    %2051 = vmatprep.subr.mxu0 0.0
    %2052 = vmatpush1.msra.mxu0 0.0
    %2053 = vmatprep.subr.mxu0 0.0
    %2054 = vmatpush1.msra.mxu0 0.0
    %2055 = vmatprep.subr.mxu0 0.0
    %2056 = vmatpush1.msra.mxu0 0.0
    %2057 = vmatprep.subr.mxu0 0.0
    %2058 = vmatpush1.msra.mxu0 0.0
    %2059 = vmatprep.subr.mxu0 0.0
    %2060 = vmatpush1.msra.mxu0 0.0
    %2061 = vmatprep.subr.mxu0 0.0
    %2062 = vmatpush1.msra.mxu0 0.0
    %2063 = vmatprep.subr.mxu0 0.0
    %2064 = vmatpush1.msra.mxu0 0.0
    %2065 = vmatprep.subr.mxu0 0.0
    %2066 = vmatpush1.msra.mxu0 0.0
    %2067 = vmatprep.subr.mxu0 0.0
    %2068 = vmatpush1.msra.mxu0 0.0
    %2069 = vmatprep.subr.mxu0 0.0
    %2070 = vmatpush1.msra.mxu0 0.0
    %2071 = vmatprep.subr.mxu0 0.0
    %2072 = vmatpush1.msra.mxu0 0.0
    %2073 = vmatprep.subr.mxu0 0.0
    %2074 = vmatpush1.msra.mxu0 0.0
    %2075 = vmatprep.subr.mxu0 0.0
    %2076 = vmatpush1.msra.mxu0 0.0
    %2077 = vmatprep.subr.mxu0 0.0
    %2078 = vmatpush1.msra.mxu0 0.0
    %2079 = vmatprep.subr.mxu0 0.0
    %2080 = vmatpush1.msra.mxu0 0.0
    %2081 = vmatprep.subr.mxu0 0.0
    %2082 = vmatpush1.msra.mxu0 0.0
    %2083 = vmatprep.subr.mxu0 0.0
    %2084 = vmatpush1.msra.mxu0 0.0
    %2085 = vmatprep.subr.mxu0 0.0
    %2086 = vmatpush1.msra.mxu0 0.0
    %2087 = vmatprep.subr.mxu0 0.0
    %2088 = vmatpush1.msra.mxu0 0.0
    %2089 = vmatprep.subr.mxu0 0.0
    %2090 = vmatpush1.msra.mxu0 0.0
    %2091 = vmatprep.subr.mxu0 0.0
    %2092 = vmatpush1.msra.mxu0 0.0
    %2093 = vmatprep.mubr.f32.mxu0 0.0
    %2094 = vmatmul.mubr.f32.gmra.mrb[0].mxu0 %v1955
    %v2095 = vpop.f32.mrb[0].mxu0
    %v2096 = vadd.f32 0.0, %v2095
    %v2097 = vpop.f32.mrb[0].mxu0
    %2098 = vdwg.mxu0
    %v2099 = vadd.f32 %v671, %v2096
    %v2100 = vxor.u32 %v2099, 2147483648
    %v2101 = vmul.f32 %v2100, 1.442695
    %v2102 = vpow.pop %v2101
    %v2103 = vadd.f32 %v2102, 1.0
    %v2104 = vrcp.pop %v2103
    %v2105 = vmul.f32 1.0, %v2104
    %v2106 = vtanh.pop %v2099
    %v2107 = vmul.f32 %v2105, %v1945
    %2109 = vrot.lane.b32.xlu0 %v2106, 64
    %v2110 = vpop.permute.xlu0 %2109
    %v2112 = vmul.f32 %v2105, %v2110
    %2114 = vrot.lane.b32.xlu0 %v2112, 32
    %v2115 = vpop.permute.xlu0 %2114
    %v2117 = vadd.f32 %v2107, %v2115
    %v2118 = vtanh.pop %v2117
    %2120 = vrot.lane.b32.xlu0 %v2118, 64
    %v2121 = vpop.permute.xlu0 %2120
    %v2123 = vmul.f32 %v2105, %v2121
    %2125 = vrot.lane.b32.xlu0 %v2123, 32
    %v2126 = vpop.permute.xlu0 %2125
    %v2127 = vsel %vm693, %v2126, 0
    %2129 = vmatprep.subr.mxu0 0.0
    %2130 = vmatpush1.msra.mxu0 %v1497
    %2131 = vmatprep.subr.mxu0 0.0
    %2132 = vmatpush1.msra.mxu0 %v1498
    %2133 = vmatprep.subr.mxu0 0.0
    %2134 = vmatpush1.msra.mxu0 %v1499
    %2135 = vmatprep.subr.mxu0 0.0
    %2136 = vmatpush1.msra.mxu0 %v1500
    %2137 = vmatprep.subr.mxu0 0.0
    %2138 = vmatpush1.msra.mxu0 0.0
    %2139 = vmatprep.subr.mxu0 0.0
    %2140 = vmatpush1.msra.mxu0 0.0
    %2141 = vmatprep.subr.mxu0 0.0
    %2142 = vmatpush1.msra.mxu0 0.0
    %2143 = vmatprep.subr.mxu0 0.0
    %2144 = vmatpush1.msra.mxu0 0.0
    %2145 = vmatprep.subr.mxu0 0.0
    %2146 = vmatpush1.msra.mxu0 0.0
    %2147 = vmatprep.subr.mxu0 0.0
    %2148 = vmatpush1.msra.mxu0 0.0
    %2149 = vmatprep.subr.mxu0 0.0
    %2150 = vmatpush1.msra.mxu0 0.0
    %2151 = vmatprep.subr.mxu0 0.0
    %2152 = vmatpush1.msra.mxu0 0.0
    %2153 = vmatprep.subr.mxu0 0.0
    %2154 = vmatpush1.msra.mxu0 0.0
    %2155 = vmatprep.subr.mxu0 0.0
    %2156 = vmatpush1.msra.mxu0 0.0
    %2157 = vmatprep.subr.mxu0 0.0
    %2158 = vmatpush1.msra.mxu0 0.0
    %2159 = vmatprep.subr.mxu0 0.0
    %2160 = vmatpush1.msra.mxu0 0.0
    %2161 = vmatprep.subr.mxu0 0.0
    %2162 = vmatpush1.msra.mxu0 0.0
    %2163 = vmatprep.subr.mxu0 0.0
    %2164 = vmatpush1.msra.mxu0 0.0
    %2165 = vmatprep.subr.mxu0 0.0
    %2166 = vmatpush1.msra.mxu0 0.0
    %2167 = vmatprep.subr.mxu0 0.0
    %2168 = vmatpush1.msra.mxu0 0.0
    %2169 = vmatprep.subr.mxu0 0.0
    %2170 = vmatpush1.msra.mxu0 0.0
    %2171 = vmatprep.subr.mxu0 0.0
    %2172 = vmatpush1.msra.mxu0 0.0
    %2173 = vmatprep.subr.mxu0 0.0
    %2174 = vmatpush1.msra.mxu0 0.0
    %2175 = vmatprep.subr.mxu0 0.0
    %2176 = vmatpush1.msra.mxu0 0.0
    %2177 = vmatprep.subr.mxu0 0.0
    %2178 = vmatpush1.msra.mxu0 0.0
    %2179 = vmatprep.subr.mxu0 0.0
    %2180 = vmatpush1.msra.mxu0 0.0
    %2181 = vmatprep.subr.mxu0 0.0
    %2182 = vmatpush1.msra.mxu0 0.0
    %2183 = vmatprep.subr.mxu0 0.0
    %2184 = vmatpush1.msra.mxu0 0.0
    %2185 = vmatprep.subr.mxu0 0.0
    %2186 = vmatpush1.msra.mxu0 0.0
    %2187 = vmatprep.subr.mxu0 0.0
    %2188 = vmatpush1.msra.mxu0 0.0
    %2189 = vmatprep.subr.mxu0 0.0
    %2190 = vmatpush1.msra.mxu0 0.0
    %2191 = vmatprep.subr.mxu0 0.0
    %2192 = vmatpush1.msra.mxu0 0.0
    %2193 = vmatprep.mubr.f32.mxu0 0.0
    %2194 = vmatmul.mubr.f32.gmra.mrb[0].mxu0 %v2127
    %v2195 = vpop.f32.mrb[0].mxu0
    %v2196 = vadd.f32 %v1606, %v2195
    %v2197 = vpop.f32.mrb[0].mxu0
    %2198 = vdwg.mxu0
    %s2199 = scalar_lea.vmem [#allocation2], 32
    %2200 = vst.msk [vmem:[%s2199] sm:$0xff] %vm437, %v2196
    %2201 = vmatprep.subr.mxu0 0.0
    %2202 = vmatpush1.msra.mxu0 %v1493
    %2203 = vmatprep.subr.mxu0 0.0
    %2204 = vmatpush1.msra.mxu0 %v1494
    %2205 = vmatprep.subr.mxu0 0.0
    %2206 = vmatpush1.msra.mxu0 %v1495
    %2207 = vmatprep.subr.mxu0 0.0
    %2208 = vmatpush1.msra.mxu0 %v1496
    %2209 = vmatprep.subr.mxu0 0.0
    %2210 = vmatpush1.msra.mxu0 0.0
    %2211 = vmatprep.subr.mxu0 0.0
    %2212 = vmatpush1.msra.mxu0 0.0
    %2213 = vmatprep.subr.mxu0 0.0
    %2214 = vmatpush1.msra.mxu0 0.0
    %2215 = vmatprep.subr.mxu0 0.0
    %2216 = vmatpush1.msra.mxu0 0.0
    %2217 = vmatprep.subr.mxu0 0.0
    %2218 = vmatpush1.msra.mxu0 0.0
    %2219 = vmatprep.subr.mxu0 0.0
    %2220 = vmatpush1.msra.mxu0 0.0
    %2221 = vmatprep.subr.mxu0 0.0
    %2222 = vmatpush1.msra.mxu0 0.0
    %2223 = vmatprep.subr.mxu0 0.0
    %2224 = vmatpush1.msra.mxu0 0.0
    %2225 = vmatprep.subr.mxu0 0.0
    %2226 = vmatpush1.msra.mxu0 0.0
    %2227 = vmatprep.subr.mxu0 0.0
    %2228 = vmatpush1.msra.mxu0 0.0
    %2229 = vmatprep.subr.mxu0 0.0
    %2230 = vmatpush1.msra.mxu0 0.0
    %2231 = vmatprep.subr.mxu0 0.0
    %2232 = vmatpush1.msra.mxu0 0.0
    %2233 = vmatprep.subr.mxu0 0.0
    %2234 = vmatpush1.msra.mxu0 0.0
    %2235 = vmatprep.subr.mxu0 0.0
    %2236 = vmatpush1.msra.mxu0 0.0
    %2237 = vmatprep.subr.mxu0 0.0
    %2238 = vmatpush1.msra.mxu0 0.0
    %2239 = vmatprep.subr.mxu0 0.0
    %2240 = vmatpush1.msra.mxu0 0.0
    %2241 = vmatprep.subr.mxu0 0.0
    %2242 = vmatpush1.msra.mxu0 0.0
    %2243 = vmatprep.subr.mxu0 0.0
    %2244 = vmatpush1.msra.mxu0 0.0
    %2245 = vmatprep.subr.mxu0 0.0
    %2246 = vmatpush1.msra.mxu0 0.0
    %2247 = vmatprep.subr.mxu0 0.0
    %2248 = vmatpush1.msra.mxu0 0.0
    %2249 = vmatprep.subr.mxu0 0.0
    %2250 = vmatpush1.msra.mxu0 0.0
    %2251 = vmatprep.subr.mxu0 0.0
    %2252 = vmatpush1.msra.mxu0 0.0
    %2253 = vmatprep.subr.mxu0 0.0
    %2254 = vmatpush1.msra.mxu0 0.0
    %2255 = vmatprep.subr.mxu0 0.0
    %2256 = vmatpush1.msra.mxu0 0.0
    %2257 = vmatprep.subr.mxu0 0.0
    %2258 = vmatpush1.msra.mxu0 0.0
    %2259 = vmatprep.subr.mxu0 0.0
    %2260 = vmatpush1.msra.mxu0 0.0
    %2261 = vmatprep.subr.mxu0 0.0
    %2262 = vmatpush1.msra.mxu0 0.0
    %2263 = vmatprep.subr.mxu0 0.0
    %2264 = vmatpush1.msra.mxu0 0.0
    %2265 = vmatprep.mubr.f32.mxu0 0.0
    %2266 = vmatmul.mubr.f32.gmra.mrb[0].mxu0 %v2127
    %v2267 = vpop.f32.mrb[0].mxu0
    %v2268 = vadd.f32 0.0, %v2267
    %v2269 = vpop.f32.mrb[0].mxu0
    %2270 = vdwg.mxu0
    %v2271 = vadd.f32 %v676, %v2268
    %v2272 = vxor.u32 %v2271, 2147483648
    %v2273 = vmul.f32 %v2272, 1.442695
    %v2274 = vpow.pop %v2273
    %v2275 = vadd.f32 %v2274, 1.0
    %v2276 = vrcp.pop %v2275
    %v2277 = vmul.f32 1.0, %v2276
    %v2278 = vtanh.pop %v2271
    %v2279 = vmul.f32 %v2277, %v2117
    %2281 = vrot.lane.b32.xlu0 %v2278, 64
    %v2282 = vpop.permute.xlu0 %2281
    %v2284 = vmul.f32 %v2277, %v2282
    %2286 = vrot.lane.b32.xlu0 %v2284, 32
    %v2287 = vpop.permute.xlu0 %2286
    %v2289 = vadd.f32 %v2279, %v2287
    %v2290 = vtanh.pop %v2289
    %2292 = vrot.lane.b32.xlu0 %v2290, 64
    %v2293 = vpop.permute.xlu0 %2292
    %v2295 = vmul.f32 %v2277, %v2293
    %2297 = vrot.lane.b32.xlu0 %v2295, 32
    %v2298 = vpop.permute.xlu0 %2297
    %v2299 = vsel %vm693, %v2298, 0
    %2301 = vmatprep.subr.mxu0 0.0
    %2302 = vmatpush1.msra.mxu0 %v1497
    %2303 = vmatprep.subr.mxu0 0.0
    %2304 = vmatpush1.msra.mxu0 %v1498
    %2305 = vmatprep.subr.mxu0 0.0
    %2306 = vmatpush1.msra.mxu0 %v1499
    %2307 = vmatprep.subr.mxu0 0.0
    %2308 = vmatpush1.msra.mxu0 %v1500
    %2309 = vmatprep.subr.mxu0 0.0
    %2310 = vmatpush1.msra.mxu0 0.0
    %2311 = vmatprep.subr.mxu0 0.0
    %2312 = vmatpush1.msra.mxu0 0.0
    %2313 = vmatprep.subr.mxu0 0.0
    %2314 = vmatpush1.msra.mxu0 0.0
    %2315 = vmatprep.subr.mxu0 0.0
    %2316 = vmatpush1.msra.mxu0 0.0
    %2317 = vmatprep.subr.mxu0 0.0
    %2318 = vmatpush1.msra.mxu0 0.0
    %2319 = vmatprep.subr.mxu0 0.0
    %2320 = vmatpush1.msra.mxu0 0.0
    %2321 = vmatprep.subr.mxu0 0.0
    %2322 = vmatpush1.msra.mxu0 0.0
    %2323 = vmatprep.subr.mxu0 0.0
    %2324 = vmatpush1.msra.mxu0 0.0
    %2325 = vmatprep.subr.mxu0 0.0
    %2326 = vmatpush1.msra.mxu0 0.0
    %2327 = vmatprep.subr.mxu0 0.0
    %2328 = vmatpush1.msra.mxu0 0.0
    %2329 = vmatprep.subr.mxu0 0.0
    %2330 = vmatpush1.msra.mxu0 0.0
    %2331 = vmatprep.subr.mxu0 0.0
    %2332 = vmatpush1.msra.mxu0 0.0
    %2333 = vmatprep.subr.mxu0 0.0
    %2334 = vmatpush1.msra.mxu0 0.0
    %2335 = vmatprep.subr.mxu0 0.0
    %2336 = vmatpush1.msra.mxu0 0.0
    %2337 = vmatprep.subr.mxu0 0.0
    %2338 = vmatpush1.msra.mxu0 0.0
    %2339 = vmatprep.subr.mxu0 0.0
    %2340 = vmatpush1.msra.mxu0 0.0
    %2341 = vmatprep.subr.mxu0 0.0
    %2342 = vmatpush1.msra.mxu0 0.0
    %2343 = vmatprep.subr.mxu0 0.0
    %2344 = vmatpush1.msra.mxu0 0.0
    %2345 = vmatprep.subr.mxu0 0.0
    %2346 = vmatpush1.msra.mxu0 0.0
    %2347 = vmatprep.subr.mxu0 0.0
    %2348 = vmatpush1.msra.mxu0 0.0
    %2349 = vmatprep.subr.mxu0 0.0
    %2350 = vmatpush1.msra.mxu0 0.0
    %2351 = vmatprep.subr.mxu0 0.0
    %2352 = vmatpush1.msra.mxu0 0.0
    %2353 = vmatprep.subr.mxu0 0.0
    %2354 = vmatpush1.msra.mxu0 0.0
    %2355 = vmatprep.subr.mxu0 0.0
    %2356 = vmatpush1.msra.mxu0 0.0
    %2357 = vmatprep.subr.mxu0 0.0
    %2358 = vmatpush1.msra.mxu0 0.0
    %2359 = vmatprep.subr.mxu0 0.0
    %2360 = vmatpush1.msra.mxu0 0.0
    %2361 = vmatprep.subr.mxu0 0.0
    %2362 = vmatpush1.msra.mxu0 0.0
    %2363 = vmatprep.subr.mxu0 0.0
    %2364 = vmatpush1.msra.mxu0 0.0
    %2365 = vmatprep.mubr.f32.mxu0 0.0
    %2366 = vmatmul.mubr.f32.gmra.mrb[0].mxu0 %v2299
    %v2367 = vpop.f32.mrb[0].mxu0
    %v2368 = vadd.f32 %v1606, %v2367
    %v2369 = vpop.f32.mrb[0].mxu0
    %2370 = vdwg.mxu0
    %s2371 = scalar_lea.vmem [#allocation2], 40
    %2372 = vst.msk [vmem:[%s2371] sm:$0xff] %vm437, %v2368
    %2373 = vmatprep.subr.mxu0 0.0
    %2374 = vmatpush1.msra.mxu0 %v1493
    %2375 = vmatprep.subr.mxu0 0.0
    %2376 = vmatpush1.msra.mxu0 %v1494
    %2377 = vmatprep.subr.mxu0 0.0
    %2378 = vmatpush1.msra.mxu0 %v1495
    %2379 = vmatprep.subr.mxu0 0.0
    %2380 = vmatpush1.msra.mxu0 %v1496
    %2381 = vmatprep.subr.mxu0 0.0
    %2382 = vmatpush1.msra.mxu0 0.0
    %2383 = vmatprep.subr.mxu0 0.0
    %2384 = vmatpush1.msra.mxu0 0.0
    %2385 = vmatprep.subr.mxu0 0.0
    %2386 = vmatpush1.msra.mxu0 0.0
    %2387 = vmatprep.subr.mxu0 0.0
    %2388 = vmatpush1.msra.mxu0 0.0
    %2389 = vmatprep.subr.mxu0 0.0
    %2390 = vmatpush1.msra.mxu0 0.0
    %2391 = vmatprep.subr.mxu0 0.0
    %2392 = vmatpush1.msra.mxu0 0.0
    %2393 = vmatprep.subr.mxu0 0.0
    %2394 = vmatpush1.msra.mxu0 0.0
    %2395 = vmatprep.subr.mxu0 0.0
    %2396 = vmatpush1.msra.mxu0 0.0
    %2397 = vmatprep.subr.mxu0 0.0
    %2398 = vmatpush1.msra.mxu0 0.0
    %2399 = vmatprep.subr.mxu0 0.0
    %2400 = vmatpush1.msra.mxu0 0.0
    %2401 = vmatprep.subr.mxu0 0.0
    %2402 = vmatpush1.msra.mxu0 0.0
    %2403 = vmatprep.subr.mxu0 0.0
    %2404 = vmatpush1.msra.mxu0 0.0
    %2405 = vmatprep.subr.mxu0 0.0
    %2406 = vmatpush1.msra.mxu0 0.0
    %2407 = vmatprep.subr.mxu0 0.0
    %2408 = vmatpush1.msra.mxu0 0.0
    %2409 = vmatprep.subr.mxu0 0.0
    %2410 = vmatpush1.msra.mxu0 0.0
    %2411 = vmatprep.subr.mxu0 0.0
    %2412 = vmatpush1.msra.mxu0 0.0
    %2413 = vmatprep.subr.mxu0 0.0
    %2414 = vmatpush1.msra.mxu0 0.0
    %2415 = vmatprep.subr.mxu0 0.0
    %2416 = vmatpush1.msra.mxu0 0.0
    %2417 = vmatprep.subr.mxu0 0.0
    %2418 = vmatpush1.msra.mxu0 0.0
    %2419 = vmatprep.subr.mxu0 0.0
    %2420 = vmatpush1.msra.mxu0 0.0
    %2421 = vmatprep.subr.mxu0 0.0
    %2422 = vmatpush1.msra.mxu0 0.0
    %2423 = vmatprep.subr.mxu0 0.0
    %2424 = vmatpush1.msra.mxu0 0.0
    %2425 = vmatprep.subr.mxu0 0.0
    %2426 = vmatpush1.msra.mxu0 0.0
    %2427 = vmatprep.subr.mxu0 0.0
    %2428 = vmatpush1.msra.mxu0 0.0
    %2429 = vmatprep.subr.mxu0 0.0
    %2430 = vmatpush1.msra.mxu0 0.0
    %2431 = vmatprep.subr.mxu0 0.0
    %2432 = vmatpush1.msra.mxu0 0.0
    %2433 = vmatprep.subr.mxu0 0.0
    %2434 = vmatpush1.msra.mxu0 0.0
    %2435 = vmatprep.subr.mxu0 0.0
    %2436 = vmatpush1.msra.mxu0 0.0
    %2437 = vmatprep.mubr.f32.mxu0 0.0
    %2438 = vmatmul.mubr.f32.gmra.mrb[0].mxu0 %v2299
    %v2439 = vpop.f32.mrb[0].mxu0
    %v2440 = vadd.f32 0.0, %v2439
    %v2441 = vpop.f32.mrb[0].mxu0
    %2442 = vdwg.mxu0
    %v2443 = vadd.f32 %v681, %v2440
    %v2444 = vxor.u32 %v2443, 2147483648
    %v2445 = vmul.f32 %v2444, 1.442695
    %v2446 = vpow.pop %v2445
    %v2447 = vadd.f32 %v2446, 1.0
    %v2448 = vrcp.pop %v2447
    %v2449 = vmul.f32 1.0, %v2448
    %v2450 = vtanh.pop %v2443
    %v2451 = vmul.f32 %v2449, %v2289
    %2453 = vrot.lane.b32.xlu0 %v2450, 64
    %v2454 = vpop.permute.xlu0 %2453
    %v2456 = vmul.f32 %v2449, %v2454
    %2458 = vrot.lane.b32.xlu0 %v2456, 32
    %v2459 = vpop.permute.xlu0 %2458
    %v2461 = vadd.f32 %v2451, %v2459
    %v2462 = vtanh.pop %v2461
    %2464 = vrot.lane.b32.xlu0 %v2462, 64
    %v2465 = vpop.permute.xlu0 %2464
    %v2467 = vmul.f32 %v2449, %v2465
    %2469 = vrot.lane.b32.xlu0 %v2467, 32
    %v2470 = vpop.permute.xlu0 %2469
    %v2471 = vsel %vm693, %v2470, 0
    %2473 = vmatprep.subr.mxu0 0.0
    %2474 = vmatpush1.msra.mxu0 %v1497
    %2475 = vmatprep.subr.mxu0 0.0
    %2476 = vmatpush1.msra.mxu0 %v1498
    %2477 = vmatprep.subr.mxu0 0.0
    %2478 = vmatpush1.msra.mxu0 %v1499
    %2479 = vmatprep.subr.mxu0 0.0
    %2480 = vmatpush1.msra.mxu0 %v1500
    %2481 = vmatprep.subr.mxu0 0.0
    %2482 = vmatpush1.msra.mxu0 0.0
    %2483 = vmatprep.subr.mxu0 0.0
    %2484 = vmatpush1.msra.mxu0 0.0
    %2485 = vmatprep.subr.mxu0 0.0
    %2486 = vmatpush1.msra.mxu0 0.0
    %2487 = vmatprep.subr.mxu0 0.0
    %2488 = vmatpush1.msra.mxu0 0.0
    %2489 = vmatprep.subr.mxu0 0.0
    %2490 = vmatpush1.msra.mxu0 0.0
    %2491 = vmatprep.subr.mxu0 0.0
    %2492 = vmatpush1.msra.mxu0 0.0
    %2493 = vmatprep.subr.mxu0 0.0
    %2494 = vmatpush1.msra.mxu0 0.0
    %2495 = vmatprep.subr.mxu0 0.0
    %2496 = vmatpush1.msra.mxu0 0.0
    %2497 = vmatprep.subr.mxu0 0.0
    %2498 = vmatpush1.msra.mxu0 0.0
    %2499 = vmatprep.subr.mxu0 0.0
    %2500 = vmatpush1.msra.mxu0 0.0
    %2501 = vmatprep.subr.mxu0 0.0
    %2502 = vmatpush1.msra.mxu0 0.0
    %2503 = vmatprep.subr.mxu0 0.0
    %2504 = vmatpush1.msra.mxu0 0.0
    %2505 = vmatprep.subr.mxu0 0.0
    %2506 = vmatpush1.msra.mxu0 0.0
    %2507 = vmatprep.subr.mxu0 0.0
    %2508 = vmatpush1.msra.mxu0 0.0
    %2509 = vmatprep.subr.mxu0 0.0
    %2510 = vmatpush1.msra.mxu0 0.0
    %2511 = vmatprep.subr.mxu0 0.0
    %2512 = vmatpush1.msra.mxu0 0.0
    %2513 = vmatprep.subr.mxu0 0.0
    %2514 = vmatpush1.msra.mxu0 0.0
    %2515 = vmatprep.subr.mxu0 0.0
    %2516 = vmatpush1.msra.mxu0 0.0
    %2517 = vmatprep.subr.mxu0 0.0
    %2518 = vmatpush1.msra.mxu0 0.0
    %2519 = vmatprep.subr.mxu0 0.0
    %2520 = vmatpush1.msra.mxu0 0.0
    %2521 = vmatprep.subr.mxu0 0.0
    %2522 = vmatpush1.msra.mxu0 0.0
    %2523 = vmatprep.subr.mxu0 0.0
    %2524 = vmatpush1.msra.mxu0 0.0
    %2525 = vmatprep.subr.mxu0 0.0
    %2526 = vmatpush1.msra.mxu0 0.0
    %2527 = vmatprep.subr.mxu0 0.0
    %2528 = vmatpush1.msra.mxu0 0.0
    %2529 = vmatprep.subr.mxu0 0.0
    %2530 = vmatpush1.msra.mxu0 0.0
    %2531 = vmatprep.subr.mxu0 0.0
    %2532 = vmatpush1.msra.mxu0 0.0
    %2533 = vmatprep.subr.mxu0 0.0
    %2534 = vmatpush1.msra.mxu0 0.0
    %2535 = vmatprep.subr.mxu0 0.0
    %2536 = vmatpush1.msra.mxu0 0.0
    %2537 = vmatprep.mubr.f32.mxu0 0.0
    %2538 = vmatmul.mubr.f32.gmra.mrb[0].mxu0 %v2471
    %v2539 = vpop.f32.mrb[0].mxu0
    %v2540 = vadd.f32 %v1606, %v2539
    %v2541 = vpop.f32.mrb[0].mxu0
    %2542 = vdwg.mxu0
    %s2543 = scalar_lea.vmem [#allocation2], 48
    %2544 = vst.msk [vmem:[%s2543] sm:$0xff] %vm437, %v2540
    %2545 = vmatprep.subr.mxu0 0.0
    %2546 = vmatpush1.msra.mxu0 %v1493
    %2547 = vmatprep.subr.mxu0 0.0
    %2548 = vmatpush1.msra.mxu0 %v1494
    %2549 = vmatprep.subr.mxu0 0.0
    %2550 = vmatpush1.msra.mxu0 %v1495
    %2551 = vmatprep.subr.mxu0 0.0
    %2552 = vmatpush1.msra.mxu0 %v1496
    %2553 = vmatprep.subr.mxu0 0.0
    %2554 = vmatpush1.msra.mxu0 0.0
    %2555 = vmatprep.subr.mxu0 0.0
    %2556 = vmatpush1.msra.mxu0 0.0
    %2557 = vmatprep.subr.mxu0 0.0
    %2558 = vmatpush1.msra.mxu0 0.0
    %2559 = vmatprep.subr.mxu0 0.0
    %2560 = vmatpush1.msra.mxu0 0.0
    %2561 = vmatprep.subr.mxu0 0.0
    %2562 = vmatpush1.msra.mxu0 0.0
    %2563 = vmatprep.subr.mxu0 0.0
    %2564 = vmatpush1.msra.mxu0 0.0
    %2565 = vmatprep.subr.mxu0 0.0
    %2566 = vmatpush1.msra.mxu0 0.0
    %2567 = vmatprep.subr.mxu0 0.0
    %2568 = vmatpush1.msra.mxu0 0.0
    %2569 = vmatprep.subr.mxu0 0.0
    %2570 = vmatpush1.msra.mxu0 0.0
    %2571 = vmatprep.subr.mxu0 0.0
    %2572 = vmatpush1.msra.mxu0 0.0
    %2573 = vmatprep.subr.mxu0 0.0
    %2574 = vmatpush1.msra.mxu0 0.0
    %2575 = vmatprep.subr.mxu0 0.0
    %2576 = vmatpush1.msra.mxu0 0.0
    %2577 = vmatprep.subr.mxu0 0.0
    %2578 = vmatpush1.msra.mxu0 0.0
    %2579 = vmatprep.subr.mxu0 0.0
    %2580 = vmatpush1.msra.mxu0 0.0
    %2581 = vmatprep.subr.mxu0 0.0
    %2582 = vmatpush1.msra.mxu0 0.0
    %2583 = vmatprep.subr.mxu0 0.0
    %2584 = vmatpush1.msra.mxu0 0.0
    %2585 = vmatprep.subr.mxu0 0.0
    %2586 = vmatpush1.msra.mxu0 0.0
    %2587 = vmatprep.subr.mxu0 0.0
    %2588 = vmatpush1.msra.mxu0 0.0
    %2589 = vmatprep.subr.mxu0 0.0
    %2590 = vmatpush1.msra.mxu0 0.0
    %2591 = vmatprep.subr.mxu0 0.0
    %2592 = vmatpush1.msra.mxu0 0.0
    %2593 = vmatprep.subr.mxu0 0.0
    %2594 = vmatpush1.msra.mxu0 0.0
    %2595 = vmatprep.subr.mxu0 0.0
    %2596 = vmatpush1.msra.mxu0 0.0
    %2597 = vmatprep.subr.mxu0 0.0
    %2598 = vmatpush1.msra.mxu0 0.0
    %2599 = vmatprep.subr.mxu0 0.0
    %2600 = vmatpush1.msra.mxu0 0.0
    %2601 = vmatprep.subr.mxu0 0.0
    %2602 = vmatpush1.msra.mxu0 0.0
    %2603 = vmatprep.subr.mxu0 0.0
    %2604 = vmatpush1.msra.mxu0 0.0
    %2605 = vmatprep.subr.mxu0 0.0
    %2606 = vmatpush1.msra.mxu0 0.0
    %2607 = vmatprep.subr.mxu0 0.0
    %2608 = vmatpush1.msra.mxu0 0.0
    %2609 = vmatprep.mubr.f32.mxu0 0.0
    %2610 = vmatmul.mubr.f32.gmra.mrb[0].mxu0 %v2471
    %v2611 = vpop.f32.mrb[0].mxu0
    %v2612 = vadd.f32 0.0, %v2611
    %v2613 = vpop.f32.mrb[0].mxu0
    %2614 = vdwg.mxu0
    %v2615 = vadd.f32 %v686, %v2612
    %v2616 = vxor.u32 %v2615, 2147483648
    %v2617 = vmul.f32 %v2616, 1.442695
    %v2618 = vpow.pop %v2617
    %v2619 = vadd.f32 %v2618, 1.0
    %v2620 = vrcp.pop %v2619
    %v2621 = vmul.f32 1.0, %v2620
    %v2622 = vtanh.pop %v2615
    %v2623 = vmul.f32 %v2621, %v2461
    %2625 = vrot.lane.b32.xlu0 %v2622, 64
    %v2626 = vpop.permute.xlu0 %2625
    %v2628 = vmul.f32 %v2621, %v2626
    %2630 = vrot.lane.b32.xlu0 %v2628, 32
    %v2631 = vpop.permute.xlu0 %2630
    %v2633 = vadd.f32 %v2623, %v2631
    %v2634 = vtanh.pop %v2633
    %2636 = vrot.lane.b32.xlu0 %v2634, 64
    %v2637 = vpop.permute.xlu0 %2636
    %v2639 = vmul.f32 %v2621, %v2637
    %2641 = vrot.lane.b32.xlu0 %v2639, 32
    %v2642 = vpop.permute.xlu0 %2641
    %v2643 = vsel %vm693, %v2642, 0
    %2645 = vmatprep.subr.mxu0 0.0
    %2646 = vmatpush1.msra.mxu0 %v1497
    %2647 = vmatprep.subr.mxu0 0.0
    %2648 = vmatpush1.msra.mxu0 %v1498
    %2649 = vmatprep.subr.mxu0 0.0
    %2650 = vmatpush1.msra.mxu0 %v1499
    %2651 = vmatprep.subr.mxu0 0.0
    %2652 = vmatpush1.msra.mxu0 %v1500
    %2653 = vmatprep.subr.mxu0 0.0
    %2654 = vmatpush1.msra.mxu0 0.0
    %2655 = vmatprep.subr.mxu0 0.0
    %2656 = vmatpush1.msra.mxu0 0.0
    %2657 = vmatprep.subr.mxu0 0.0
    %2658 = vmatpush1.msra.mxu0 0.0
    %2659 = vmatprep.subr.mxu0 0.0
    %2660 = vmatpush1.msra.mxu0 0.0
    %2661 = vmatprep.subr.mxu0 0.0
    %2662 = vmatpush1.msra.mxu0 0.0
    %2663 = vmatprep.subr.mxu0 0.0
    %2664 = vmatpush1.msra.mxu0 0.0
    %2665 = vmatprep.subr.mxu0 0.0
    %2666 = vmatpush1.msra.mxu0 0.0
    %2667 = vmatprep.subr.mxu0 0.0
    %2668 = vmatpush1.msra.mxu0 0.0
    %2669 = vmatprep.subr.mxu0 0.0
    %2670 = vmatpush1.msra.mxu0 0.0
    %2671 = vmatprep.subr.mxu0 0.0
    %2672 = vmatpush1.msra.mxu0 0.0
    %2673 = vmatprep.subr.mxu0 0.0
    %2674 = vmatpush1.msra.mxu0 0.0
    %2675 = vmatprep.subr.mxu0 0.0
    %2676 = vmatpush1.msra.mxu0 0.0
    %2677 = vmatprep.subr.mxu0 0.0
    %2678 = vmatpush1.msra.mxu0 0.0
    %2679 = vmatprep.subr.mxu0 0.0
    %2680 = vmatpush1.msra.mxu0 0.0
    %2681 = vmatprep.subr.mxu0 0.0
    %2682 = vmatpush1.msra.mxu0 0.0
    %2683 = vmatprep.subr.mxu0 0.0
    %2684 = vmatpush1.msra.mxu0 0.0
    %2685 = vmatprep.subr.mxu0 0.0
    %2686 = vmatpush1.msra.mxu0 0.0
    %2687 = vmatprep.subr.mxu0 0.0
    %2688 = vmatpush1.msra.mxu0 0.0
    %2689 = vmatprep.subr.mxu0 0.0
    %2690 = vmatpush1.msra.mxu0 0.0
    %2691 = vmatprep.subr.mxu0 0.0
    %2692 = vmatpush1.msra.mxu0 0.0
    %2693 = vmatprep.subr.mxu0 0.0
    %2694 = vmatpush1.msra.mxu0 0.0
    %2695 = vmatprep.subr.mxu0 0.0
    %2696 = vmatpush1.msra.mxu0 0.0
    %2697 = vmatprep.subr.mxu0 0.0
    %2698 = vmatpush1.msra.mxu0 0.0
    %2699 = vmatprep.subr.mxu0 0.0
    %2700 = vmatpush1.msra.mxu0 0.0
    %2701 = vmatprep.subr.mxu0 0.0
    %2702 = vmatpush1.msra.mxu0 0.0
    %2703 = vmatprep.subr.mxu0 0.0
    %2704 = vmatpush1.msra.mxu0 0.0
    %2705 = vmatprep.subr.mxu0 0.0
    %2706 = vmatpush1.msra.mxu0 0.0
    %2707 = vmatprep.subr.mxu0 0.0
    %2708 = vmatpush1.msra.mxu0 0.0
    %2709 = vmatprep.mubr.f32.mxu0 0.0
    %2710 = vmatmul.mubr.f32.gmra.mrb[0].mxu0 %v2643
    %v2711 = vpop.f32.mrb[0].mxu0
    %v2712 = vadd.f32 %v1606, %v2711
    %v2713 = vpop.f32.mrb[0].mxu0
    %2714 = vdwg.mxu0
    %s2715 = scalar_lea.vmem [#allocation2], 56
    %2716 = vst.msk [vmem:[%s2715] sm:$0xff] %vm437, %v2712
    // Predicated region
    $region50: #{seq2seq_forward.1} parent=1 // pred_check
      _
    $region51: #{seq2seq_forward.1} parent=1 // pred_check_branch
      %2718 = sbr.rel (0) target = $region53
    $region52: #{seq2seq_forward.1} parent=1 // pred_region
      %s2720 = ssub.s32 1024, 1024
      %2721 = vsyncadd [#allocation3], %s2720
      %s2722 = sshll.u32 [#allocation2], 4
      %s2723 = int_to_ptr.vmem [resolvable:$true] %s2722
      %2728 = dma.vmem_to_hbm [thread:$0]  %s2723, 1024, %s12, [#allocation3], 128, 128, 8
    $region53: #{seq2seq_forward.1} parent=1 // pred_fallthru
      _
    // Predicated region
    $region54: #{seq2seq_forward.1} parent=1 // pred_check
      _
    $region55: #{seq2seq_forward.1} parent=1 // pred_check_branch
      %2730 = sbr.rel (0) target = $region57
    $region56: #{seq2seq_forward.1} parent=1 // pred_region
      %2731 = dma.done [#allocation3], 1024
    $region57: #{seq2seq_forward.1} parent=1 // pred_fallthru
      _
    %2732 = vsyncpa [#allocation3], 1

</llo_original>
